<compile_context>
chip_gen: v7x
topology: tpu7x:2x2x1
jax: 0.10.0
libtpu: 0.0.40
codegen_flags: <defaults>
</compile_context>

<pallas_src>
import functools

import jax
import jax.numpy as jnp
from jax.experimental import pallas as pl
from jax.experimental.pallas import tpu as pltpu

EPS = 1e-5          # BatchNorm eps
NEG_SLOPE = 0.2     # LeakyReLU negative slope
LANE = 128          # lane width  (channel padding target)
SUB = 8             # sublane width (row-tile multiple)


def _round_up(x, m):
    return ((x + m - 1) // m) * m


def _padded(c):
    return _round_up(c, LANE)


def _lrelu(y):
    return jnp.where(y > 0, y, NEG_SLOPE * y)


# ----------------------------------------------------------------------------
# Pallas kernels
# ----------------------------------------------------------------------------
def _linear_kernel(x_ref, w_ref, b_ref, o_ref, *, act):
    # 1x1 conv (BN scale pre-folded into w) + shift (+ LeakyReLU).
    y = jnp.dot(x_ref[...], w_ref[...], preferred_element_type=jnp.float32)
    y = y + b_ref[...]
    if act:
        y = _lrelu(y)
    o_ref[...] = y


def linear_rows(x, w, b, *, act, tm):
    """x: (M, Cin) -> (M, Cout); row-tiled fused conv1x1 + foldedBN (+LReLU)."""
    m, cin = x.shape
    cout = w.shape[1]
    assert m % tm == 0
    return pl.pallas_call(
        functools.partial(_linear_kernel, act=act),
        out_shape=jax.ShapeDtypeStruct((m, cout), jnp.float32),
        grid=(m // tm,),
        in_specs=[pl.BlockSpec((tm, cin), lambda i: (i, 0)),
                  pl.BlockSpec((cin, cout), lambda i: (0, 0)),
                  pl.BlockSpec((1, cout), lambda i: (0, 0))],
        out_specs=pl.BlockSpec((tm, cout), lambda i: (i, 0)),
        compiler_params=pltpu.CompilerParams(
            dimension_semantics=("parallel",)),
    )(x, w, b)


def _lfa_kernel(fx_ref, fn_ref, *refs, n_bb):
    # Fused building-block stage:
    #   fx   = LReLU(fx_in @ Wbb_s + bbb_s)  applied n_bb times (xyz branch)
    #   f    = concat([f_neigh, fx], channel)
    #   s    = f @ Wfc ; softmax over K ; agg = sum_K(f * scores)
    #   out  = LReLU(agg @ Wmlp + bmlp)      (attention-pooling mlp)
    bb_refs = refs[:2 * n_bb]
    wfc_ref, wmlp_ref, bmlp_ref, o_ref = refs[2 * n_bb:]

    tm, k, cfx_in = fx_ref.shape
    cn = fn_ref.shape[-1]

    fx = fx_ref[...].reshape(tm * k, cfx_in)
    for stage in range(n_bb):
        w_ref, b_ref = bb_refs[2 * stage], bb_refs[2 * stage + 1]
        fx = jnp.dot(fx, w_ref[...], preferred_element_type=jnp.float32)
        fx = _lrelu(fx + b_ref[...])
    cbb = fx.shape[-1]

    fn = fn_ref[...].reshape(tm * k, cn)
    f = jnp.concatenate([fn, fx], axis=-1)                 # (tm*k, cn+cbb)
    c = cn + cbb

    s = jnp.dot(f, wfc_ref[...], preferred_element_type=jnp.float32)
    s = s.reshape(tm, k, c)
    s = s - jnp.max(s, axis=1, keepdims=True)               # softmax over K
    e = jnp.exp(s)
    inv = pl.reciprocal(jnp.sum(e, axis=1, keepdims=True), approx=True)
    scores = e * inv

    agg = jnp.sum(f.reshape(tm, k, c) * scores, axis=1)     # (tm, c)
    y = jnp.dot(agg, wmlp_ref[...], preferred_element_type=jnp.float32)
    o_ref[...] = _lrelu(y + bmlp_ref[...])


def lfa_attention(fx_in, fn, bb_params, wfc, wmlp, bmlp, *, tm):
    """Fused LFA stage over row tiles of the (B*N) axis.

    bb_params: tuple of (W, b) pairs applied sequentially to the xyz branch
    inside the kernel (stage 1: (bb_mlp1,); stage 2: (bb_mlp1, bb_mlp2) —
    recomputed instead of round-tripping f_xyz through HBM).
    """
    m, k, cfx_in = fx_in.shape
    cn = fn.shape[-1]
    cbb = bb_params[-1][0].shape[1]
    cout = wmlp.shape[1]
    assert m % tm == 0
    assert bb_params[0][0].shape[0] == cfx_in
    assert wfc.shape == (cn + cbb, cn + cbb)
    assert wmlp.shape[0] == cn + cbb

    flat_bb = [a for pair in bb_params for a in pair]
    in_specs = [
        pl.BlockSpec((tm, k, cfx_in), lambda i: (i, 0, 0)),
        pl.BlockSpec((tm, k, cn), lambda i: (i, 0, 0)),
    ]
    in_specs += [pl.BlockSpec(a.shape, lambda i: (0, 0)) for a in flat_bb]
    in_specs += [
        pl.BlockSpec(wfc.shape, lambda i: (0, 0)),
        pl.BlockSpec(wmlp.shape, lambda i: (0, 0)),
        pl.BlockSpec(bmlp.shape, lambda i: (0, 0)),
    ]

    return pl.pallas_call(
        functools.partial(_lfa_kernel, n_bb=len(bb_params)),
        out_shape=jax.ShapeDtypeStruct((m, cout), jnp.float32),
        grid=(m // tm,),
        in_specs=in_specs,
        out_specs=pl.BlockSpec((tm, cout), lambda i: (i, 0)),
        compiler_params=pltpu.CompilerParams(
            dimension_semantics=("parallel",)),
    )(fx_in, fn, *flat_bb, wfc, wmlp, bmlp)


def _residual_kernel(x1_ref, x0_ref, w1_ref, w0_ref, b_ref, o_ref):
    # mlp2(x1) + shortcut(x0): two dots accumulating into one tile
    # (BN folded into each weight), then residual LeakyReLU.
    y = jnp.dot(x1_ref[...], w1_ref[...], preferred_element_type=jnp.float32)
    y = y + jnp.dot(x0_ref[...], w0_ref[...], preferred_element_type=jnp.float32)
    o_ref[...] = _lrelu(y + b_ref[...])


def residual_rows(x1, x0, w1, w0, b, *, tm):
    m, c1 = x1.shape
    c0 = x0.shape[1]
    cout = w1.shape[1]
    assert m % tm == 0 and w1.shape[0] == c1 and w0.shape == (c0, cout)
    return pl.pallas_call(
        _residual_kernel,
        out_shape=jax.ShapeDtypeStruct((m, cout), jnp.float32),
        grid=(m // tm,),
        in_specs=[pl.BlockSpec((tm, c1), lambda i: (i, 0)),
                  pl.BlockSpec((tm, c0), lambda i: (i, 0)),
                  pl.BlockSpec((c1, cout), lambda i: (0, 0)),
                  pl.BlockSpec((c0, cout), lambda i: (0, 0)),
                  pl.BlockSpec((1, cout), lambda i: (0, 0))],
        out_specs=pl.BlockSpec((tm, cout), lambda i: (i, 0)),
        compiler_params=pltpu.CompilerParams(
            dimension_semantics=("parallel",)),
    )(x1, x0, w1, w0, b)


# ----------------------------------------------------------------------------
# JAX glue (data-dependent gather / relative position encoding)
# ----------------------------------------------------------------------------
def gather_neighbour(pc, neigh_idx):
    # pc: (B, N, C), neigh_idx: (B, N, K) -> (B, N, K, C)
    # TODO(synk): data-dependent gather stays in JAX; an in-kernel gather via
    #             PrefetchScalarGridSpec + manual DMA would remove the K-expanded
    #             HBM materialization but is not implemented here.
    b, n, c = pc.shape
    k = neigh_idx.shape[-1]
    idx = neigh_idx.reshape(b, n * k)
    g = jnp.take_along_axis(pc, idx[..., None], axis=1)
    return g.reshape(b, n, k, c)


def relative_pos_encoding(xyz, neigh_idx):
    # xyz: (B, N, 3), neigh_idx: (B, N, K) -> (B, N, K, 10)
    neighbor_xyz = gather_neighbour(xyz, neigh_idx)
    xyz_tile = jnp.broadcast_to(xyz[:, :, None, :], neighbor_xyz.shape)
    relative_xyz = xyz_tile - neighbor_xyz
    relative_dis = jnp.sqrt(jnp.sum(relative_xyz ** 2, axis=-1, keepdims=True))
    return jnp.concatenate(
        [relative_dis, relative_xyz, xyz_tile, neighbor_xyz], axis=-1)


# ----------------------------------------------------------------------------
# Parameter preparation: fold BN into weights + lane-dense zero padding
# ----------------------------------------------------------------------------
def _seg_pad(mat, row_segs, col_segs):
    """Embed `mat` blocks into a zero matrix with per-segment zero padding.

    row_segs/col_segs: lists of (true_size, padded_size); `mat` is split into
    contiguous blocks of the true sizes, each placed at the start of its
    padded segment.  Padded rows/cols are zero, keeping the math exact.
    """
    rp = sum(p for _, p in row_segs)
    cp = sum(p for _, p in col_segs)
    out = jnp.zeros((rp, cp), mat.dtype)
    r, rp0 = 0, 0
    for rt, rpd in row_segs:
        c, cp0 = 0, 0
        for ct, cpd in col_segs:
            out = out.at[rp0:rp0 + rt, cp0:cp0 + ct].set(mat[r:r + rt, c:c + ct])
            c += ct
            cp0 += cpd
        r += rt
        rp0 += rpd
    return out


def prepare_pallas_params(p, d_in, d_out):
    d2 = d_out // 2
    d_in_p, d2_p = _padded(d_in), _padded(d2)
    d_out_p, d_res_p = _padded(d_out), _padded(2 * d_out)

    def fold_pad(param, row_segs, col_segs):
        w, scale, shift = param               # scale/shift: (1, cout)
        wp = _seg_pad(w * scale, row_segs, col_segs)   # fold BN scale into W
        bp = _seg_pad(shift, [(1, 1)], col_segs)
        return wp, bp

    pp = {}
    pp['mlp1'] = fold_pad(p['mlp1'], [(d_in, d_in_p)], [(d2, d2_p)])
    # xyz-branch conv (10 -> d/2); 10 input channels kept unpadded (full-extent block)
    pp['bb_mlp1'] = fold_pad(p['bb_mlp1'], [(10, 10)], [(d2, d2_p)])
    # attention 1: concat layout is [neigh(d2) | xyz(d2)], each half lane-padded
    pp['att1_fc'] = _seg_pad(p['att1_fc'],
                             [(d2, d2_p), (d2, d2_p)], [(d2, d2_p), (d2, d2_p)])
    pp['att1_mlp'] = fold_pad(p['att1_mlp'], [(d2, d2_p), (d2, d2_p)], [(d2, d2_p)])
    # xyz-branch conv 2 (d/2 -> d/2), recomputed inside LFA stage 2
    pp['bb_mlp2'] = fold_pad(p['bb_mlp2'], [(d2, d2_p)], [(d2, d2_p)])
    pp['att2_fc'] = _seg_pad(p['att2_fc'],
                             [(d2, d2_p), (d2, d2_p)], [(d2, d2_p), (d2, d2_p)])
    pp['att2_mlp'] = fold_pad(p['att2_mlp'], [(d2, d2_p), (d2, d2_p)],
                              [(d_out, d_out_p)])
    # residual: block-level mlp2 (d_out->2d_out) and shortcut (d_in->2d_out)
    w2, s2, b2 = p['mlp2']
    w0, s0, b0 = p['sc']
    pp['res'] = (_seg_pad(w2 * s2, [(d_out, d_out_p)], [(2 * d_out, d_res_p)]),
                 _seg_pad(w0 * s0, [(d_in, d_in_p)], [(2 * d_out, d_res_p)]),
                 _seg_pad(b2 + b0, [(1, 1)], [(2 * d_out, d_res_p)]))
    pp['dims'] = dict(d2=d2, d_in_p=d_in_p, d2_p=d2_p,
                      d_out_p=d_out_p, d_res_p=d_res_p)
    return pp


# ----------------------------------------------------------------------------
# Full Dilated_res_block forward (Pallas path)
# ----------------------------------------------------------------------------
def dilated_res_block_pallas(feature, xyz, neigh_idx, params, *, tm=128):
    """feature: (B, d_in, N, 1) NCHW; xyz: (B, N, 3); neigh_idx: (B, N, K)."""
    b, d_in, n, _ = feature.shape
    k = neigh_idx.shape[-1]
    d2 = params['mlp1'][0].shape[1]
    d_out = 2 * d2

    tm = max(SUB, _round_up(tm, SUB))
    pp = prepare_pallas_params(params, d_in, d_out)
    d_in_p, d2_p = pp['dims']['d_in_p'], pp['dims']['d2_p']

    m = b * n
    m_pad = _round_up(m, tm)

    # channels-last flattened input, zero-padded rows + lane-padded channels
    x0 = jnp.transpose(feature[..., 0], (0, 2, 1)).reshape(m, d_in)
    x0_p = jnp.pad(x0, ((0, m_pad - m), (0, d_in_p - d_in)))

    # --- mlp1 ---
    f_pc = linear_rows(x0_p, *pp['mlp1'], act=True, tm=tm)          # (Mp, d2_p)

    # --- relative position encoding + neighbor gather (JAX glue) ---
    f_xyz10 = relative_pos_encoding(xyz, neigh_idx).reshape(m, k, 10)
    f_xyz10 = jnp.pad(f_xyz10, ((0, m_pad - m), (0, 0), (0, 0)))

    f_neigh1 = gather_neighbour(f_pc[:m, :d2].reshape(b, n, d2), neigh_idx)
    f_neigh1 = jnp.pad(f_neigh1.reshape(m, k, d2),
                       ((0, m_pad - m), (0, 0), (0, d2_p - d2)))

    # --- fused LFA stage 1: bb_mlp1 + concat + att fc + softmax + pool + att1_mlp ---
    f_pc_agg1 = lfa_attention(
        f_xyz10, f_neigh1, (pp['bb_mlp1'],),
        pp['att1_fc'], *pp['att1_mlp'], tm=tm)                       # (Mp, d2_p)

    f_neigh2 = gather_neighbour(f_pc_agg1[:m, :d2].reshape(b, n, d2), neigh_idx)
    f_neigh2 = jnp.pad(f_neigh2.reshape(m, k, d2),
                       ((0, m_pad - m), (0, 0), (0, d2_p - d2)))

    # --- fused LFA stage 2: (bb_mlp1 -> bb_mlp2 recomputed from 10-ch encoding)
    #     + concat + att fc + softmax + pool + att2_mlp ---
    f_pc_agg2 = lfa_attention(
        f_xyz10, f_neigh2, (pp['bb_mlp1'], pp['bb_mlp2']),
        pp['att2_fc'], *pp['att2_mlp'], tm=tm)                       # (Mp, d_out_p)

    # --- mlp2 + shortcut + residual LeakyReLU (two dots, one fused kernel) ---
    out = residual_rows(f_pc_agg2, x0_p, *pp['res'], tm=tm)          # (Mp, d_res_p)

    out = out[:m, :2 * d_out].reshape(b, n, 2 * d_out)
    return jnp.transpose(out, (0, 2, 1))[..., None]                  # (B, 2*d_out, N, 1)


# ----------------------------------------------------------------------------
# Pure-JAX reference (numerical validation only)
# ----------------------------------------------------------------------------
def _ref_linear(x, w, scale, shift, act):
    y = jnp.dot(x, w, precision=jax.lax.Precision.HIGHEST) * scale + shift
    return _lrelu(y) if act else y


def _ref_att_pool(x, w):
    s = jnp.einsum('mkc,cd->mkd', x, w, precision=jax.lax.Precision.HIGHEST)
    s = jax.nn.softmax(s, axis=1)
    return jnp.sum(x * s, axis=1)


def _ref_residual(x1, w1, s1, b1, x0, w0, s0, b0):
    y = _ref_linear(x1, w1, s1, b1, False) + _ref_linear(x0, w0, s0, b0, False)
    return _lrelu(y)


def dilated_res_block_reference(feature, xyz, neigh_idx, p):
    b, d_in, n, _ = feature.shape
    k = neigh_idx.shape[-1]
    d2 = p['mlp1'][0].shape[1]
    d_out = 2 * d2

    x0 = jnp.transpose(feature[..., 0], (0, 2, 1)).reshape(b * n, d_in)
    f_pc = _ref_linear(x0, *p['mlp1'], True)

    f_xyz10 = relative_pos_encoding(xyz, neigh_idx)
    f_xyz = _ref_linear(f_xyz10.reshape(b * n * k, 10), *p['bb_mlp1'], True)

    f_neigh = gather_neighbour(f_pc.reshape(b, n, d2), neigh_idx).reshape(b * n * k, d2)
    f_concat = jnp.concatenate([f_neigh, f_xyz], axis=-1)
    agg = _ref_att_pool(f_concat.reshape(b * n, k, d_out), p['att1_fc'])
    f_pc_agg = _ref_linear(agg, *p['att1_mlp'], True)

    f_xyz = _ref_linear(f_xyz, *p['bb_mlp2'], True)
    f_neigh = gather_neighbour(f_pc_agg.reshape(b, n, d2), neigh_idx).reshape(b * n * k, d2)
    f_concat = jnp.concatenate([f_neigh, f_xyz], axis=-1)
    agg = _ref_att_pool(f_concat.reshape(b * n, k, d_out), p['att2_fc'])
    f_pc_agg = _ref_linear(agg, *p['att2_mlp'], True)

    out = _ref_residual(f_pc_agg, *p['mlp2'], x0, *p['sc'])
    return jnp.transpose(out.reshape(b, n, 2 * d_out), (0, 2, 1))[..., None]


# ----------------------------------------------------------------------------
# Deterministic synthetic parameters
# ----------------------------------------------------------------------------
def _init_conv_bn(key, cin, cout):
    kw, kg, kb, km, kv = jax.random.split(key, 5)
    w = jax.random.normal(kw, (cin, cout), jnp.float32) / jnp.sqrt(float(cin))
    gamma = 1.0 + 0.1 * jax.random.normal(kg, (cout,), jnp.float32)
    beta = 0.1 * jax.random.normal(kb, (cout,), jnp.float32)
    mean = 0.1 * jax.random.normal(km, (cout,), jnp.float32)
    var = jnp.abs(1.0 + 0.1 * jax.random.normal(kv, (cout,), jnp.float32))
    scale = gamma / jnp.sqrt(var + EPS)
    shift = beta - mean * scale
    return w, scale.reshape(1, cout), shift.reshape(1, cout)


def make_params(key, d_in, d_out):
    d2 = d_out // 2
    keys = jax.random.split(key, 9)

    def fc_w(kk, cin, cout):
        return jax.random.normal(kk, (cin, cout), jnp.float32) / jnp.sqrt(float(cin))

    return {
        'mlp1':     _init_conv_bn(keys[0], d_in, d2),
        'bb_mlp1':  _init_conv_bn(keys[1], 10, d2),
        'att1_fc':  fc_w(keys[2], d_out, d_out),
        'att1_mlp': _init_conv_bn(keys[3], d_out, d2),
        'bb_mlp2':  _init_conv_bn(keys[4], d2, d2),
        'att2_fc':  fc_w(keys[5], d_out, d_out),
        'att2_mlp': _init_conv_bn(keys[6], d_out, d_out),
        'mlp2':     _init_conv_bn(keys[7], d_out, 2 * d_out),
        'sc':       _init_conv_bn(keys[8], d_in, 2 * d_out),
    }


# ----------------------------------------------------------------------------
if __name__ == "__main__":
    B, N, K = 2, 16, 8
    d_in, d_out = 4, 8

    key = jax.random.PRNGKey(0)
    k_feat, k_xyz, k_idx, k_param = jax.random.split(key, 4)

    feature = jax.random.normal(k_feat, (B, d_in, N, 1), jnp.float32)   # NCHW
    xyz = jax.random.normal(k_xyz, (B, N, 3), jnp.float32)
    neigh_idx = jax.random.randint(k_idx, (B, N, K), 0, N, dtype=jnp.int32)
    params = make_params(k_param, d_in, d_out)

    # small tile so the toy sizes exercise a multi-step grid (grid=(4,));
    # real point clouds should use the default tm=128 (or larger on v5e/v6e).
    fwd = jax.jit(functools.partial(dilated_res_block_pallas, tm=8))
    out = jax.block_until_ready(fwd(feature, xyz, neigh_idx, params))
    assert out.shape == (B, 2 * d_out, N, 1), out.shape

    ref = dilated_res_block_reference(feature, xyz, neigh_idx, params)
    if not bool(jnp.allclose(out, ref, rtol=1e-2, atol=1e-2)):
        err = float(jnp.max(jnp.abs(out - ref)))
        raise RuntimeError(
            f"Pallas kernel output mismatch vs JAX reference (max abs err {err})")

    print("KERNEL_OK")
</pallas_src>

<mosaic_0001>
module attributes {stable_mosaic.version = 11 : i64} {
  func.func @_linear_kernel(%arg0: i32, %arg1: memref<8x128xf32, #tpu.memory_space<vmem>>, %arg2: memref<128x128xf32, #tpu.memory_space<vmem>>, %arg3: memref<1x128xf32, #tpu.memory_space<vmem>>, %arg4: memref<8x128xf32, #tpu.memory_space<vmem>>) attributes {dimension_semantics = [#tpu.dimension_semantics<parallel>], iteration_bounds = array<i64: 4>, scalar_prefetch = 0 : i64, scratch_operands = 0 : i64, tpu.core_type = #tpu.core_type<tc>, window_params = [{transform_indices = @transform_0, window_bounds = array<i64: 8, 128>}, {pipeline_mode = #tpu.pipeline_mode<synchronous>, transform_indices = @transform_1, window_bounds = array<i64: 128, 128>}, {pipeline_mode = #tpu.pipeline_mode<synchronous>, transform_indices = @transform_2, window_bounds = array<i64: 1, 128>}, {transform_indices = @transform_3, window_bounds = array<i64: 8, 128>}]} {
    %c0 = arith.constant 0 : index
    %c0_0 = arith.constant 0 : index
    %0 = vector.load %arg1[%c0, %c0_0] : memref<8x128xf32, #tpu.memory_space<vmem>>, vector<8x128xf32>
    %c0_1 = arith.constant 0 : index
    %c0_2 = arith.constant 0 : index
    %1 = vector.load %arg2[%c0_1, %c0_2] : memref<128x128xf32, #tpu.memory_space<vmem>>, vector<128x128xf32>
    %cst = arith.constant dense<0.000000e+00> : vector<8x128xf32>
    %2 = tpu.matmul %0, %1, %cst {dimension_numbers = #tpu.dot_dimension_numbers<[1], [0], [0], [1], [0, 0, 1, 1], [], []>} : vector<8x128xf32>, vector<128x128xf32>, vector<8x128xf32> -> vector<8x128xf32>
    %c0_3 = arith.constant 0 : index
    %c0_4 = arith.constant 0 : index
    %3 = vector.load %arg3[%c0_3, %c0_4] : memref<1x128xf32, #tpu.memory_space<vmem>>, vector<1x128xf32>
    %4 = vector.broadcast %3 : vector<1x128xf32> to vector<8x128xf32>
    %5 = arith.addf %2, %4 : vector<8x128xf32>
    %cst_5 = arith.constant 0.000000e+00 : f32
    %6 = vector.broadcast %cst_5 : f32 to vector<8x128xf32>
    %7 = arith.cmpf ogt, %5, %6 : vector<8x128xf32>
    %cst_6 = arith.constant 2.000000e-01 : f32
    %8 = vector.broadcast %cst_6 : f32 to vector<8x128xf32>
    %9 = arith.mulf %8, %5 : vector<8x128xf32>
    %10 = arith.select %7, %5, %9 : vector<8x128xi1>, vector<8x128xf32>
    %c0_7 = arith.constant 0 : index
    %c0_8 = arith.constant 0 : index
    %11 = vector.load %arg4[%c0_7, %c0_8] : memref<8x128xf32, #tpu.memory_space<vmem>>, vector<8x128xf32>
    tpu.vector_store %arg4[%c0_7, %c0_8], %10 {strides = array<i32>} : memref<8x128xf32, #tpu.memory_space<vmem>>, vector<8x128xf32>,
    return
  }
  func.func @transform_0(%arg0: i32) -> (i32, i32) {
    %c0_i32 = arith.constant 0 : i32
    %c0_i32_0 = arith.constant 0 : i32
    return %arg0, %c0_i32 : i32, i32
  }
  func.func @transform_1(%arg0: i32) -> (i32, i32) {
    %c0_i32 = arith.constant 0 : i32
    %c0_i32_0 = arith.constant 0 : i32
    %c0_i32_1 = arith.constant 0 : i32
    return %c0_i32, %c0_i32_0 : i32, i32
  }
  func.func @transform_2(%arg0: i32) -> (i32, i32) {
    %c0_i32 = arith.constant 0 : i32
    %c0_i32_0 = arith.constant 0 : i32
    %c0_i32_1 = arith.constant 0 : i32
    return %c0_i32, %c0_i32_0 : i32, i32
  }
  func.func @transform_3(%arg0: i32) -> (i32, i32) {
    %c0_i32 = arith.constant 0 : i32
    %c0_i32_0 = arith.constant 0 : i32
    return %arg0, %c0_i32 : i32, i32
  }
}

module attributes {stable_mosaic.version = 11 : i64} {
  func.func @_lfa_kernel(%arg0: i32, %arg1: memref<8x8x10xf32, #tpu.memory_space<vmem>>, %arg2: memref<8x8x128xf32, #tpu.memory_space<vmem>>, %arg3: memref<10x128xf32, #tpu.memory_space<vmem>>, %arg4: memref<1x128xf32, #tpu.memory_space<vmem>>, %arg5: memref<256x256xf32, #tpu.memory_space<vmem>>, %arg6: memref<256x128xf32, #tpu.memory_space<vmem>>, %arg7: memref<1x128xf32, #tpu.memory_space<vmem>>, %arg8: memref<8x128xf32, #tpu.memory_space<vmem>>) attributes {dimension_semantics = [#tpu.dimension_semantics<parallel>], iteration_bounds = array<i64: 4>, scalar_prefetch = 0 : i64, scratch_operands = 0 : i64, tpu.core_type = #tpu.core_type<tc>, window_params = [{transform_indices = @transform_0, window_bounds = array<i64: 8, 8, 10>}, {transform_indices = @transform_1, window_bounds = array<i64: 8, 8, 128>}, {pipeline_mode = #tpu.pipeline_mode<synchronous>, transform_indices = @transform_2, window_bounds = array<i64: 10, 128>}, {pipeline_mode = #tpu.pipeline_mode<synchronous>, transform_indices = @transform_3, window_bounds = array<i64: 1, 128>}, {pipeline_mode = #tpu.pipeline_mode<synchronous>, transform_indices = @transform_4, window_bounds = array<i64: 256, 256>}, {pipeline_mode = #tpu.pipeline_mode<synchronous>, transform_indices = @transform_5, window_bounds = array<i64: 256, 128>}, {pipeline_mode = #tpu.pipeline_mode<synchronous>, transform_indices = @transform_6, window_bounds = array<i64: 1, 128>}, {transform_indices = @transform_7, window_bounds = array<i64: 8, 128>}]} {
    %c0 = arith.constant 0 : index
    %c0_0 = arith.constant 0 : index
    %c0_1 = arith.constant 0 : index
    %0 = vector.load %arg1[%c0, %c0_0, %c0_1] : memref<8x8x10xf32, #tpu.memory_space<vmem>>, vector<8x8x10xf32>
    %1 = vector.shape_cast %0 : vector<8x8x10xf32> to vector<64x10xf32>
    %c0_2 = arith.constant 0 : index
    %c0_3 = arith.constant 0 : index
    %2 = vector.load %arg3[%c0_2, %c0_3] : memref<10x128xf32, #tpu.memory_space<vmem>>, vector<10x128xf32>
    %cst = arith.constant dense<0.000000e+00> : vector<64x128xf32>
    %3 = tpu.matmul %1, %2, %cst {dimension_numbers = #tpu.dot_dimension_numbers<[1], [0], [0], [1], [0, 0, 1, 1], [], []>} : vector<64x10xf32>, vector<10x128xf32>, vector<64x128xf32> -> vector<64x128xf32>
    %c0_4 = arith.constant 0 : index
    %c0_5 = arith.constant 0 : index
    %4 = vector.load %arg4[%c0_4, %c0_5] : memref<1x128xf32, #tpu.memory_space<vmem>>, vector<1x128xf32>
    %5 = vector.broadcast %4 : vector<1x128xf32> to vector<64x128xf32>
    %6 = arith.addf %3, %5 : vector<64x128xf32>
    %cst_6 = arith.constant 0.000000e+00 : f32
    %7 = vector.broadcast %cst_6 : f32 to vector<64x128xf32>
    %8 = arith.cmpf ogt, %6, %7 : vector<64x128xf32>
    %cst_7 = arith.constant 2.000000e-01 : f32
    %9 = vector.broadcast %cst_7 : f32 to vector<64x128xf32>
    %10 = arith.mulf %9, %6 : vector<64x128xf32>
    %11 = arith.select %8, %6, %10 : vector<64x128xi1>, vector<64x128xf32>
    %c0_8 = arith.constant 0 : index
    %c0_9 = arith.constant 0 : index
    %c0_10 = arith.constant 0 : index
    %12 = vector.load %arg2[%c0_8, %c0_9, %c0_10] : memref<8x8x128xf32, #tpu.memory_space<vmem>>, vector<8x8x128xf32>
    %13 = vector.shape_cast %12 : vector<8x8x128xf32> to vector<64x128xf32>
    %14 = tpu.concatenate %13, %11 in 1 : vector<64x128xf32>, vector<64x128xf32> -> vector<64x256xf32>
    %c0_11 = arith.constant 0 : index
    %c0_12 = arith.constant 0 : index
    %15 = vector.load %arg5[%c0_11, %c0_12] : memref<256x256xf32, #tpu.memory_space<vmem>>, vector<256x256xf32>
    %cst_13 = arith.constant dense<0.000000e+00> : vector<64x256xf32>
    %16 = tpu.matmul %14, %15, %cst_13 {dimension_numbers = #tpu.dot_dimension_numbers<[1], [0], [0], [1], [0, 0, 1, 1], [], []>} : vector<64x256xf32>, vector<256x256xf32>, vector<64x256xf32> -> vector<64x256xf32>
    %17 = vector.shape_cast %16 : vector<64x256xf32> to vector<8x8x256xf32>
    %cst_14 = arith.constant dense<0xFF800000> : vector<8x256xf32>
    %18 = vector.multi_reduction <maximumf>, %17, %cst_14 [1] : vector<8x8x256xf32> to vector<8x256xf32>
    %19 = vector.shape_cast %18 : vector<8x256xf32> to vector<8x1x256xf32>
    %20 = vector.broadcast %19 : vector<8x1x256xf32> to vector<8x8x256xf32>
    %21 = arith.subf %17, %20 : vector<8x8x256xf32>
    %22 = math.exp %21 : vector<8x8x256xf32>
    %cst_15 = arith.constant dense<0.000000e+00> : vector<8x256xf32>
    %23 = vector.multi_reduction <add>, %22, %cst_15 [1] : vector<8x8x256xf32> to vector<8x256xf32>
    %24 = vector.shape_cast %23 : vector<8x256xf32> to vector<8x1x256xf32>
    %25 = tpu.reciprocal %24 {approx = true} : vector<8x1x256xf32> -> vector<8x1x256xf32>
    %26 = vector.broadcast %25 : vector<8x1x256xf32> to vector<8x8x256xf32>
    %27 = arith.mulf %22, %26 : vector<8x8x256xf32>
    %28 = vector.shape_cast %14 : vector<64x256xf32> to vector<8x8x256xf32>
    %29 = arith.mulf %28, %27 : vector<8x8x256xf32>
    %cst_16 = arith.constant dense<0.000000e+00> : vector<8x256xf32>
    %30 = vector.multi_reduction <add>, %29, %cst_16 [1] : vector<8x8x256xf32> to vector<8x256xf32>
    %c0_17 = arith.constant 0 : index
    %c0_18 = arith.constant 0 : index
    %31 = vector.load %arg6[%c0_17, %c0_18] : memref<256x128xf32, #tpu.memory_space<vmem>>, vector<256x128xf32>
    %cst_19 = arith.constant dense<0.000000e+00> : vector<8x128xf32>
    %32 = tpu.matmul %30, %31, %cst_19 {dimension_numbers = #tpu.dot_dimension_numbers<[1], [0], [0], [1], [0, 0, 1, 1], [], []>} : vector<8x256xf32>, vector<256x128xf32>, vector<8x128xf32> -> vector<8x128xf32>
    %c0_20 = arith.constant 0 : index
    %c0_21 = arith.constant 0 : index
    %33 = vector.load %arg7[%c0_20, %c0_21] : memref<1x128xf32, #tpu.memory_space<vmem>>, vector<1x128xf32>
    %34 = vector.broadcast %33 : vector<1x128xf32> to vector<8x128xf32>
    %35 = arith.addf %32, %34 : vector<8x128xf32>
    %cst_22 = arith.constant 0.000000e+00 : f32
    %36 = vector.broadcast %cst_22 : f32 to vector<8x128xf32>
    %37 = arith.cmpf ogt, %35, %36 : vector<8x128xf32>
    %cst_23 = arith.constant 2.000000e-01 : f32
    %38 = vector.broadcast %cst_23 : f32 to vector<8x128xf32>
    %39 = arith.mulf %38, %35 : vector<8x128xf32>
    %40 = arith.select %37, %35, %39 : vector<8x128xi1>, vector<8x128xf32>
    %c0_24 = arith.constant 0 : index
    %c0_25 = arith.constant 0 : index
    %41 = vector.load %arg8[%c0_24, %c0_25] : memref<8x128xf32, #tpu.memory_space<vmem>>, vector<8x128xf32>
    tpu.vector_store %arg8[%c0_24, %c0_25], %40 {strides = array<i32>} : memref<8x128xf32, #tpu.memory_space<vmem>>, vector<8x128xf32>,
    return
  }
  func.func @transform_0(%arg0: i32) -> (i32, i32, i32) {
    %c0_i32 = arith.constant 0 : i32
    %c0_i32_0 = arith.constant 0 : i32
    %c0_i32_1 = arith.constant 0 : i32
    return %arg0, %c0_i32, %c0_i32_0 : i32, i32, i32
  }
  func.func @transform_1(%arg0: i32) -> (i32, i32, i32) {
    %c0_i32 = arith.constant 0 : i32
    %c0_i32_0 = arith.constant 0 : i32
    %c0_i32_1 = arith.constant 0 : i32
    return %arg0, %c0_i32, %c0_i32_0 : i32, i32, i32
  }
  func.func @transform_2(%arg0: i32) -> (i32, i32) {
    %c0_i32 = arith.constant 0 : i32
    %c0_i32_0 = arith.constant 0 : i32
    %c0_i32_1 = arith.constant 0 : i32
    return %c0_i32, %c0_i32_0 : i32, i32
  }
  func.func @transform_3(%arg0: i32) -> (i32, i32) {
    %c0_i32 = arith.constant 0 : i32
    %c0_i32_0 = arith.constant 0 : i32
    %c0_i32_1 = arith.constant 0 : i32
    return %c0_i32, %c0_i32_0 : i32, i32
  }
  func.func @transform_4(%arg0: i32) -> (i32, i32) {
    %c0_i32 = arith.constant 0 : i32
    %c0_i32_0 = arith.constant 0 : i32
    %c0_i32_1 = arith.constant 0 : i32
    return %c0_i32, %c0_i32_0 : i32, i32
  }
  func.func @transform_5(%arg0: i32) -> (i32, i32) {
    %c0_i32 = arith.constant 0 : i32
    %c0_i32_0 = arith.constant 0 : i32
    %c0_i32_1 = arith.constant 0 : i32
    return %c0_i32, %c0_i32_0 : i32, i32
  }
  func.func @transform_6(%arg0: i32) -> (i32, i32) {
    %c0_i32 = arith.constant 0 : i32
    %c0_i32_0 = arith.constant 0 : i32
    %c0_i32_1 = arith.constant 0 : i32
    return %c0_i32, %c0_i32_0 : i32, i32
  }
  func.func @transform_7(%arg0: i32) -> (i32, i32) {
    %c0_i32 = arith.constant 0 : i32
    %c0_i32_0 = arith.constant 0 : i32
    return %arg0, %c0_i32 : i32, i32
  }
}

module attributes {stable_mosaic.version = 11 : i64} {
  func.func @_lfa_kernel(%arg0: i32, %arg1: memref<8x8x10xf32, #tpu.memory_space<vmem>>, %arg2: memref<8x8x128xf32, #tpu.memory_space<vmem>>, %arg3: memref<10x128xf32, #tpu.memory_space<vmem>>, %arg4: memref<1x128xf32, #tpu.memory_space<vmem>>, %arg5: memref<128x128xf32, #tpu.memory_space<vmem>>, %arg6: memref<1x128xf32, #tpu.memory_space<vmem>>, %arg7: memref<256x256xf32, #tpu.memory_space<vmem>>, %arg8: memref<256x128xf32, #tpu.memory_space<vmem>>, %arg9: memref<1x128xf32, #tpu.memory_space<vmem>>, %arg10: memref<8x128xf32, #tpu.memory_space<vmem>>) attributes {dimension_semantics = [#tpu.dimension_semantics<parallel>], iteration_bounds = array<i64: 4>, scalar_prefetch = 0 : i64, scratch_operands = 0 : i64, tpu.core_type = #tpu.core_type<tc>, window_params = [{transform_indices = @transform_0, window_bounds = array<i64: 8, 8, 10>}, {transform_indices = @transform_1, window_bounds = array<i64: 8, 8, 128>}, {pipeline_mode = #tpu.pipeline_mode<synchronous>, transform_indices = @transform_2, window_bounds = array<i64: 10, 128>}, {pipeline_mode = #tpu.pipeline_mode<synchronous>, transform_indices = @transform_3, window_bounds = array<i64: 1, 128>}, {pipeline_mode = #tpu.pipeline_mode<synchronous>, transform_indices = @transform_4, window_bounds = array<i64: 128, 128>}, {pipeline_mode = #tpu.pipeline_mode<synchronous>, transform_indices = @transform_5, window_bounds = array<i64: 1, 128>}, {pipeline_mode = #tpu.pipeline_mode<synchronous>, transform_indices = @transform_6, window_bounds = array<i64: 256, 256>}, {pipeline_mode = #tpu.pipeline_mode<synchronous>, transform_indices = @transform_7, window_bounds = array<i64: 256, 128>}, {pipeline_mode = #tpu.pipeline_mode<synchronous>, transform_indices = @transform_8, window_bounds = array<i64: 1, 128>}, {transform_indices = @transform_9, window_bounds = array<i64: 8, 128>}]} {
    %c0 = arith.constant 0 : index
    %c0_0 = arith.constant 0 : index
    %c0_1 = arith.constant 0 : index
    %0 = vector.load %arg1[%c0, %c0_0, %c0_1] : memref<8x8x10xf32, #tpu.memory_space<vmem>>, vector<8x8x10xf32>
    %1 = vector.shape_cast %0 : vector<8x8x10xf32> to vector<64x10xf32>
    %c0_2 = arith.constant 0 : index
    %c0_3 = arith.constant 0 : index
    %2 = vector.load %arg3[%c0_2, %c0_3] : memref<10x128xf32, #tpu.memory_space<vmem>>, vector<10x128xf32>
    %cst = arith.constant dense<0.000000e+00> : vector<64x128xf32>
    %3 = tpu.matmul %1, %2, %cst {dimension_numbers = #tpu.dot_dimension_numbers<[1], [0], [0], [1], [0, 0, 1, 1], [], []>} : vector<64x10xf32>, vector<10x128xf32>, vector<64x128xf32> -> vector<64x128xf32>
    %c0_4 = arith.constant 0 : index
    %c0_5 = arith.constant 0 : index
    %4 = vector.load %arg4[%c0_4, %c0_5] : memref<1x128xf32, #tpu.memory_space<vmem>>, vector<1x128xf32>
    %5 = vector.broadcast %4 : vector<1x128xf32> to vector<64x128xf32>
    %6 = arith.addf %3, %5 : vector<64x128xf32>
    %cst_6 = arith.constant 0.000000e+00 : f32
    %7 = vector.broadcast %cst_6 : f32 to vector<64x128xf32>
    %8 = arith.cmpf ogt, %6, %7 : vector<64x128xf32>
    %cst_7 = arith.constant 2.000000e-01 : f32
    %9 = vector.broadcast %cst_7 : f32 to vector<64x128xf32>
    %10 = arith.mulf %9, %6 : vector<64x128xf32>
    %11 = arith.select %8, %6, %10 : vector<64x128xi1>, vector<64x128xf32>
    %c0_8 = arith.constant 0 : index
    %c0_9 = arith.constant 0 : index
    %12 = vector.load %arg5[%c0_8, %c0_9] : memref<128x128xf32, #tpu.memory_space<vmem>>, vector<128x128xf32>
    %cst_10 = arith.constant dense<0.000000e+00> : vector<64x128xf32>
    %13 = tpu.matmul %11, %12, %cst_10 {dimension_numbers = #tpu.dot_dimension_numbers<[1], [0], [0], [1], [0, 0, 1, 1], [], []>} : vector<64x128xf32>, vector<128x128xf32>, vector<64x128xf32> -> vector<64x128xf32>
    %c0_11 = arith.constant 0 : index
    %c0_12 = arith.constant 0 : index
    %14 = vector.load %arg6[%c0_11, %c0_12] : memref<1x128xf32, #tpu.memory_space<vmem>>, vector<1x128xf32>
    %15 = vector.broadcast %14 : vector<1x128xf32> to vector<64x128xf32>
    %16 = arith.addf %13, %15 : vector<64x128xf32>
    %cst_13 = arith.constant 0.000000e+00 : f32
    %17 = vector.broadcast %cst_13 : f32 to vector<64x128xf32>
    %18 = arith.cmpf ogt, %16, %17 : vector<64x128xf32>
    %cst_14 = arith.constant 2.000000e-01 : f32
    %19 = vector.broadcast %cst_14 : f32 to vector<64x128xf32>
    %20 = arith.mulf %19, %16 : vector<64x128xf32>
    %21 = arith.select %18, %16, %20 : vector<64x128xi1>, vector<64x128xf32>
    %c0_15 = arith.constant 0 : index
    %c0_16 = arith.constant 0 : index
    %c0_17 = arith.constant 0 : index
    %22 = vector.load %arg2[%c0_15, %c0_16, %c0_17] : memref<8x8x128xf32, #tpu.memory_space<vmem>>, vector<8x8x128xf32>
    %23 = vector.shape_cast %22 : vector<8x8x128xf32> to vector<64x128xf32>
    %24 = tpu.concatenate %23, %21 in 1 : vector<64x128xf32>, vector<64x128xf32> -> vector<64x256xf32>
    %c0_18 = arith.constant 0 : index
    %c0_19 = arith.constant 0 : index
    %25 = vector.load %arg7[%c0_18, %c0_19] : memref<256x256xf32, #tpu.memory_space<vmem>>, vector<256x256xf32>
    %cst_20 = arith.constant dense<0.000000e+00> : vector<64x256xf32>
    %26 = tpu.matmul %24, %25, %cst_20 {dimension_numbers = #tpu.dot_dimension_numbers<[1], [0], [0], [1], [0, 0, 1, 1], [], []>} : vector<64x256xf32>, vector<256x256xf32>, vector<64x256xf32> -> vector<64x256xf32>
    %27 = vector.shape_cast %26 : vector<64x256xf32> to vector<8x8x256xf32>
    %cst_21 = arith.constant dense<0xFF800000> : vector<8x256xf32>
    %28 = vector.multi_reduction <maximumf>, %27, %cst_21 [1] : vector<8x8x256xf32> to vector<8x256xf32>
    %29 = vector.shape_cast %28 : vector<8x256xf32> to vector<8x1x256xf32>
    %30 = vector.broadcast %29 : vector<8x1x256xf32> to vector<8x8x256xf32>
    %31 = arith.subf %27, %30 : vector<8x8x256xf32>
    %32 = math.exp %31 : vector<8x8x256xf32>
    %cst_22 = arith.constant dense<0.000000e+00> : vector<8x256xf32>
    %33 = vector.multi_reduction <add>, %32, %cst_22 [1] : vector<8x8x256xf32> to vector<8x256xf32>
    %34 = vector.shape_cast %33 : vector<8x256xf32> to vector<8x1x256xf32>
    %35 = tpu.reciprocal %34 {approx = true} : vector<8x1x256xf32> -> vector<8x1x256xf32>
    %36 = vector.broadcast %35 : vector<8x1x256xf32> to vector<8x8x256xf32>
    %37 = arith.mulf %32, %36 : vector<8x8x256xf32>
    %38 = vector.shape_cast %24 : vector<64x256xf32> to vector<8x8x256xf32>
    %39 = arith.mulf %38, %37 : vector<8x8x256xf32>
    %cst_23 = arith.constant dense<0.000000e+00> : vector<8x256xf32>
    %40 = vector.multi_reduction <add>, %39, %cst_23 [1] : vector<8x8x256xf32> to vector<8x256xf32>
    %c0_24 = arith.constant 0 : index
    %c0_25 = arith.constant 0 : index
    %41 = vector.load %arg8[%c0_24, %c0_25] : memref<256x128xf32, #tpu.memory_space<vmem>>, vector<256x128xf32>
    %cst_26 = arith.constant dense<0.000000e+00> : vector<8x128xf32>
    %42 = tpu.matmul %40, %41, %cst_26 {dimension_numbers = #tpu.dot_dimension_numbers<[1], [0], [0], [1], [0, 0, 1, 1], [], []>} : vector<8x256xf32>, vector<256x128xf32>, vector<8x128xf32> -> vector<8x128xf32>
    %c0_27 = arith.constant 0 : index
    %c0_28 = arith.constant 0 : index
    %43 = vector.load %arg9[%c0_27, %c0_28] : memref<1x128xf32, #tpu.memory_space<vmem>>, vector<1x128xf32>
    %44 = vector.broadcast %43 : vector<1x128xf32> to vector<8x128xf32>
    %45 = arith.addf %42, %44 : vector<8x128xf32>
    %cst_29 = arith.constant 0.000000e+00 : f32
    %46 = vector.broadcast %cst_29 : f32 to vector<8x128xf32>
    %47 = arith.cmpf ogt, %45, %46 : vector<8x128xf32>
    %cst_30 = arith.constant 2.000000e-01 : f32
    %48 = vector.broadcast %cst_30 : f32 to vector<8x128xf32>
    %49 = arith.mulf %48, %45 : vector<8x128xf32>
    %50 = arith.select %47, %45, %49 : vector<8x128xi1>, vector<8x128xf32>
    %c0_31 = arith.constant 0 : index
    %c0_32 = arith.constant 0 : index
    %51 = vector.load %arg10[%c0_31, %c0_32] : memref<8x128xf32, #tpu.memory_space<vmem>>, vector<8x128xf32>
    tpu.vector_store %arg10[%c0_31, %c0_32], %50 {strides = array<i32>} : memref<8x128xf32, #tpu.memory_space<vmem>>, vector<8x128xf32>,
    return
  }
  func.func @transform_0(%arg0: i32) -> (i32, i32, i32) {
    %c0_i32 = arith.constant 0 : i32
    %c0_i32_0 = arith.constant 0 : i32
    %c0_i32_1 = arith.constant 0 : i32
    return %arg0, %c0_i32, %c0_i32_0 : i32, i32, i32
  }
  func.func @transform_1(%arg0: i32) -> (i32, i32, i32) {
    %c0_i32 = arith.constant 0 : i32
    %c0_i32_0 = arith.constant 0 : i32
    %c0_i32_1 = arith.constant 0 : i32
    return %arg0, %c0_i32, %c0_i32_0 : i32, i32, i32
  }
  func.func @transform_2(%arg0: i32) -> (i32, i32) {
    %c0_i32 = arith.constant 0 : i32
    %c0_i32_0 = arith.constant 0 : i32
    %c0_i32_1 = arith.constant 0 : i32
    return %c0_i32, %c0_i32_0 : i32, i32
  }
  func.func @transform_3(%arg0: i32) -> (i32, i32) {
    %c0_i32 = arith.constant 0 : i32
    %c0_i32_0 = arith.constant 0 : i32
    %c0_i32_1 = arith.constant 0 : i32
    return %c0_i32, %c0_i32_0 : i32, i32
  }
  func.func @transform_4(%arg0: i32) -> (i32, i32) {
    %c0_i32 = arith.constant 0 : i32
    %c0_i32_0 = arith.constant 0 : i32
    %c0_i32_1 = arith.constant 0 : i32
    return %c0_i32, %c0_i32_0 : i32, i32
  }
  func.func @transform_5(%arg0: i32) -> (i32, i32) {
    %c0_i32 = arith.constant 0 : i32
    %c0_i32_0 = arith.constant 0 : i32
    %c0_i32_1 = arith.constant 0 : i32
    return %c0_i32, %c0_i32_0 : i32, i32
  }
  func.func @transform_6(%arg0: i32) -> (i32, i32) {
    %c0_i32 = arith.constant 0 : i32
    %c0_i32_0 = arith.constant 0 : i32
    %c0_i32_1 = arith.constant 0 : i32
    return %c0_i32, %c0_i32_0 : i32, i32
  }
  func.func @transform_7(%arg0: i32) -> (i32, i32) {
    %c0_i32 = arith.constant 0 : i32
    %c0_i32_0 = arith.constant 0 : i32
    %c0_i32_1 = arith.constant 0 : i32
    return %c0_i32, %c0_i32_0 : i32, i32
  }
  func.func @transform_8(%arg0: i32) -> (i32, i32) {
    %c0_i32 = arith.constant 0 : i32
    %c0_i32_0 = arith.constant 0 : i32
    %c0_i32_1 = arith.constant 0 : i32
    return %c0_i32, %c0_i32_0 : i32, i32
  }
  func.func @transform_9(%arg0: i32) -> (i32, i32) {
    %c0_i32 = arith.constant 0 : i32
    %c0_i32_0 = arith.constant 0 : i32
    return %arg0, %c0_i32 : i32, i32
  }
}

module attributes {stable_mosaic.version = 11 : i64} {
  func.func @_residual_kernel(%arg0: i32, %arg1: memref<8x128xf32, #tpu.memory_space<vmem>>, %arg2: memref<8x128xf32, #tpu.memory_space<vmem>>, %arg3: memref<128x128xf32, #tpu.memory_space<vmem>>, %arg4: memref<128x128xf32, #tpu.memory_space<vmem>>, %arg5: memref<1x128xf32, #tpu.memory_space<vmem>>, %arg6: memref<8x128xf32, #tpu.memory_space<vmem>>) attributes {dimension_semantics = [#tpu.dimension_semantics<parallel>], iteration_bounds = array<i64: 4>, scalar_prefetch = 0 : i64, scratch_operands = 0 : i64, tpu.core_type = #tpu.core_type<tc>, window_params = [{transform_indices = @transform_0, window_bounds = array<i64: 8, 128>}, {transform_indices = @transform_1, window_bounds = array<i64: 8, 128>}, {pipeline_mode = #tpu.pipeline_mode<synchronous>, transform_indices = @transform_2, window_bounds = array<i64: 128, 128>}, {pipeline_mode = #tpu.pipeline_mode<synchronous>, transform_indices = @transform_3, window_bounds = array<i64: 128, 128>}, {pipeline_mode = #tpu.pipeline_mode<synchronous>, transform_indices = @transform_4, window_bounds = array<i64: 1, 128>}, {transform_indices = @transform_5, window_bounds = array<i64: 8, 128>}]} {
    %c0 = arith.constant 0 : index
    %c0_0 = arith.constant 0 : index
    %0 = vector.load %arg1[%c0, %c0_0] : memref<8x128xf32, #tpu.memory_space<vmem>>, vector<8x128xf32>
    %c0_1 = arith.constant 0 : index
    %c0_2 = arith.constant 0 : index
    %1 = vector.load %arg3[%c0_1, %c0_2] : memref<128x128xf32, #tpu.memory_space<vmem>>, vector<128x128xf32>
    %cst = arith.constant dense<0.000000e+00> : vector<8x128xf32>
    %2 = tpu.matmul %0, %1, %cst {dimension_numbers = #tpu.dot_dimension_numbers<[1], [0], [0], [1], [0, 0, 1, 1], [], []>} : vector<8x128xf32>, vector<128x128xf32>, vector<8x128xf32> -> vector<8x128xf32>
    %c0_3 = arith.constant 0 : index
    %c0_4 = arith.constant 0 : index
    %3 = vector.load %arg2[%c0_3, %c0_4] : memref<8x128xf32, #tpu.memory_space<vmem>>, vector<8x128xf32>
    %c0_5 = arith.constant 0 : index
    %c0_6 = arith.constant 0 : index
    %4 = vector.load %arg4[%c0_5, %c0_6] : memref<128x128xf32, #tpu.memory_space<vmem>>, vector<128x128xf32>
    %cst_7 = arith.constant dense<0.000000e+00> : vector<8x128xf32>
    %5 = tpu.matmul %3, %4, %cst_7 {dimension_numbers = #tpu.dot_dimension_numbers<[1], [0], [0], [1], [0, 0, 1, 1], [], []>} : vector<8x128xf32>, vector<128x128xf32>, vector<8x128xf32> -> vector<8x128xf32>
    %6 = arith.addf %2, %5 : vector<8x128xf32>
    %c0_8 = arith.constant 0 : index
    %c0_9 = arith.constant 0 : index
    %7 = vector.load %arg5[%c0_8, %c0_9] : memref<1x128xf32, #tpu.memory_space<vmem>>, vector<1x128xf32>
    %8 = vector.broadcast %7 : vector<1x128xf32> to vector<8x128xf32>
    %9 = arith.addf %6, %8 : vector<8x128xf32>
    %cst_10 = arith.constant 0.000000e+00 : f32
    %10 = vector.broadcast %cst_10 : f32 to vector<8x128xf32>
    %11 = arith.cmpf ogt, %9, %10 : vector<8x128xf32>
    %cst_11 = arith.constant 2.000000e-01 : f32
    %12 = vector.broadcast %cst_11 : f32 to vector<8x128xf32>
    %13 = arith.mulf %12, %9 : vector<8x128xf32>
    %14 = arith.select %11, %9, %13 : vector<8x128xi1>, vector<8x128xf32>
    %c0_12 = arith.constant 0 : index
    %c0_13 = arith.constant 0 : index
    %15 = vector.load %arg6[%c0_12, %c0_13] : memref<8x128xf32, #tpu.memory_space<vmem>>, vector<8x128xf32>
    tpu.vector_store %arg6[%c0_12, %c0_13], %14 {strides = array<i32>} : memref<8x128xf32, #tpu.memory_space<vmem>>, vector<8x128xf32>,
    return
  }
  func.func @transform_0(%arg0: i32) -> (i32, i32) {
    %c0_i32 = arith.constant 0 : i32
    %c0_i32_0 = arith.constant 0 : i32
    return %arg0, %c0_i32 : i32, i32
  }
  func.func @transform_1(%arg0: i32) -> (i32, i32) {
    %c0_i32 = arith.constant 0 : i32
    %c0_i32_0 = arith.constant 0 : i32
    return %arg0, %c0_i32 : i32, i32
  }
  func.func @transform_2(%arg0: i32) -> (i32, i32) {
    %c0_i32 = arith.constant 0 : i32
    %c0_i32_0 = arith.constant 0 : i32
    %c0_i32_1 = arith.constant 0 : i32
    return %c0_i32, %c0_i32_0 : i32, i32
  }
  func.func @transform_3(%arg0: i32) -> (i32, i32) {
    %c0_i32 = arith.constant 0 : i32
    %c0_i32_0 = arith.constant 0 : i32
    %c0_i32_1 = arith.constant 0 : i32
    return %c0_i32, %c0_i32_0 : i32, i32
  }
  func.func @transform_4(%arg0: i32) -> (i32, i32) {
    %c0_i32 = arith.constant 0 : i32
    %c0_i32_0 = arith.constant 0 : i32
    %c0_i32_1 = arith.constant 0 : i32
    return %c0_i32, %c0_i32_0 : i32, i32
  }
  func.func @transform_5(%arg0: i32) -> (i32, i32) {
    %c0_i32 = arith.constant 0 : i32
    %c0_i32_0 = arith.constant 0 : i32
    return %arg0, %c0_i32 : i32, i32
  }
}

</mosaic_0001>

<llo_original>
// kernel: dilated_res_block_pallas.4
$region0: #{dilated_res_block_pallas.4}
  #allocation0 [shape = 'u32[]', space=smem, size = 0x4, offset = 0x4, fixed_abs, tag = 'smem constant byte address 0x4 - core index']
  #allocation1 [shape = 'u32[144,128]{1,0:T(1,128)}', space=vmem, size = 0x12000, scoped, tag = 'internal scratch']
  %s0 = inlined_call_operand.vmem [shape: f32[32,128], index: 0, kind: input, shape index: {}]
  %s1 = inlined_call_operand.vmem [shape: f32[128,128], index: 1, kind: input, shape index: {}]
  %s2 = inlined_call_operand.vmem [shape: f32[1,128], index: 2, kind: input, shape index: {}]
  %s3 = inlined_call_operand.vmem [shape: f32[32,128], index: 3, kind: output, shape index: {}]
  %s4 = sld [smem:[#allocation0]]
  $region45: #{dilated_res_block_pallas.4} parent=0
    _
  %s6 = ssub.s32 1, %s4
  %s7 = scalar_select 0, %s6, %s4
  loop: start=0, step=1, limit=6
  $region2: #{dilated_res_block_pallas.4} parent=0 // loop_pre_header
    _
  $region3: #{dilated_res_block_pallas.4} parent=0 // loop_header
    %s9 = sphi 0, %s13
    %p10 = scmp.ge.s32.totalorder %s9, 6
    %s19 = sphi 0, %s21
    %s22 = sphi 0, %s19
    %s23 = sphi 0, %s22
    %s39 = sphi 0, %s23
    %s43 = sphi 0, %s43
    %s45 = sphi 0, %s43
    %s46 = sphi 0, %s45
    %s60 = sphi 0, %s46
    %s64 = sphi 0, %s64
    %s66 = sphi 0, %s64
    %s67 = sphi 0, %s66
    %s81 = sphi 0, %s67
    %s87 = sphi 0, %s89
    %s90 = sphi 0, %s87
    %s91 = sphi 0, %s90
    %s107 = sphi 0, %s91
  $region4: #{dilated_res_block_pallas.4} parent=0 // loop_header_branch
    %12 = sbr.rel (%p10) target = $region8
  $region5: #{dilated_res_block_pallas.4} parent=0 // loop_body
    %s14 = ssub.s32 %s9, 1
    %s15 = ssub.s32 %s9, 2
    %s16 = sadd.s32 %s9, 1
    %s17 = ssub.s32 %s9, %s16
    %p18 = scmp.eq.s32.totalorder %s17, 0
    %s20 = sadd.s32 %s19, 1
    %s21 = scalar_select %p18, %s19, %s20
    %p24 = pneg %p18
    %p25 = scmp.eq.s32.totalorder %s9, 3
    %p26 = por %p24, %p25
    %p27 = scmp.ne.s32.totalorder %s19, %s22
    %p28 = scmp.eq.s32.totalorder %s9, 0
    %p29 = por %p27, %p28
    %p30 = scmp.ne.s32.totalorder %s19, %s22
    %p31 = scmp.eq.s32.totalorder %s14, 3
    %p32 = por %p30, %p31
    %p33 = scmp.ne.s32.totalorder %s22, %s23
    %p34 = scmp.eq.s32.totalorder %s14, 0
    %p35 = por %p33, %p34
    %p36 = scmp.ne.s32.totalorder %s22, %s23
    %p37 = scmp.eq.s32.totalorder %s15, 3
    %p38 = por %p36, %p37
    %p40 = scmp.ne.s32.totalorder %s23, %s39
    %p41 = scmp.eq.s32.totalorder %s15, 0
    %p42 = por %p40, %p41
    %s44 = sadd.s32 %s43, 1
    %p47 = scmp.eq.s32.totalorder %s9, 3
    %p48 = scmp.ne.s32.totalorder %s43, %s45
    %p49 = scmp.eq.s32.totalorder %s9, 0
    %p50 = por %p48, %p49
    %p51 = scmp.ne.s32.totalorder %s43, %s45
    %p52 = scmp.eq.s32.totalorder %s14, 3
    %p53 = por %p51, %p52
    %p54 = scmp.ne.s32.totalorder %s45, %s46
    %p55 = scmp.eq.s32.totalorder %s14, 0
    %p56 = por %p54, %p55
    %p57 = scmp.ne.s32.totalorder %s45, %s46
    %p58 = scmp.eq.s32.totalorder %s15, 3
    %p59 = por %p57, %p58
    %p61 = scmp.ne.s32.totalorder %s46, %s60
    %p62 = scmp.eq.s32.totalorder %s15, 0
    %p63 = por %p61, %p62
    %s65 = sadd.s32 %s64, 1
    %p68 = scmp.eq.s32.totalorder %s9, 3
    %p69 = scmp.ne.s32.totalorder %s64, %s66
    %p70 = scmp.eq.s32.totalorder %s9, 0
    %p71 = por %p69, %p70
    %p72 = scmp.ne.s32.totalorder %s64, %s66
    %p73 = scmp.eq.s32.totalorder %s14, 3
    %p74 = por %p72, %p73
    %p75 = scmp.ne.s32.totalorder %s66, %s67
    %p76 = scmp.eq.s32.totalorder %s14, 0
    %p77 = por %p75, %p76
    %p78 = scmp.ne.s32.totalorder %s66, %s67
    %p79 = scmp.eq.s32.totalorder %s15, 3
    %p80 = por %p78, %p79
    %p82 = scmp.ne.s32.totalorder %s67, %s81
    %p83 = scmp.eq.s32.totalorder %s15, 0
    %p84 = por %p82, %p83
    %s85 = ssub.s32 %s9, %s16
    %p86 = scmp.eq.s32.totalorder %s85, 0
    %s88 = sadd.s32 %s87, 1
    %s89 = scalar_select %p86, %s87, %s88
    %p92 = pneg %p86
    %p93 = scmp.eq.s32.totalorder %s9, 3
    %p94 = por %p92, %p93
    %p95 = scmp.ne.s32.totalorder %s87, %s90
    %p96 = scmp.eq.s32.totalorder %s9, 0
    %p97 = por %p95, %p96
    %p98 = scmp.ne.s32.totalorder %s87, %s90
    %p99 = scmp.eq.s32.totalorder %s14, 3
    %p100 = por %p98, %p99
    %p101 = scmp.ne.s32.totalorder %s90, %s91
    %p102 = scmp.eq.s32.totalorder %s14, 0
    %p103 = por %p101, %p102
    %p104 = scmp.ne.s32.totalorder %s90, %s91
    %p105 = scmp.eq.s32.totalorder %s15, 3
    %p106 = por %p104, %p105
    %p108 = scmp.ne.s32.totalorder %s91, %s107
    %p109 = scmp.eq.s32.totalorder %s15, 0
    %p110 = por %p108, %p109
    %p111 = scmp.le.s32.totalorder 1, %s9
    %p112 = scmp.lt.s32.totalorder %s9, 5
    %p113 = pnand %p111, %p112
    %p114 = pneg %p113
    // Predicated region
    $region9: #{dilated_res_block_pallas.4} parent=5 // pred_check
      _
    $region10: #{dilated_res_block_pallas.4} parent=5 // pred_check_branch
      %116 = sbr.rel (%p113) target = $region12
    $region11: #{dilated_res_block_pallas.4} parent=5 // pred_region
      %s117 = ssub.s32 %s9, 1
      // Predicated region
      $region13: #{dilated_res_block_pallas.4} parent=11 // pred_check
        %p118 = pneg %p56
      $region14: #{dilated_res_block_pallas.4} parent=11 // pred_check_branch
        %120 = sbr.rel (%p118) target = $region16
      $region15: #{dilated_res_block_pallas.4} parent=11 // pred_region
        _
      $region16: #{dilated_res_block_pallas.4} parent=11 // pred_fallthru
        _
      // Predicated region
      $region17: #{dilated_res_block_pallas.4} parent=11 // pred_check
        %p121 = pneg %p77
      $region18: #{dilated_res_block_pallas.4} parent=11 // pred_check_branch
        %123 = sbr.rel (%p121) target = $region20
      $region19: #{dilated_res_block_pallas.4} parent=11 // pred_region
        _
      $region20: #{dilated_res_block_pallas.4} parent=11 // pred_fallthru
        _
    $region12: #{dilated_res_block_pallas.4} parent=5 // pred_fallthru
      _
    %p124 = scmp.lt.s32.totalorder %s9, 4
    // Predicated region
    $region21: #{dilated_res_block_pallas.4} parent=5 // pred_check
      %p125 = pneg %p124
    $region22: #{dilated_res_block_pallas.4} parent=5 // pred_check_branch
      %127 = sbr.rel (%p125) target = $region24
    $region23: #{dilated_res_block_pallas.4} parent=5 // pred_region
      // Predicated region
      $region25: #{dilated_res_block_pallas.4} parent=23 // pred_check
        %p128 = pneg %p29
      $region26: #{dilated_res_block_pallas.4} parent=23 // pred_check_branch
        %130 = sbr.rel (%p128) target = $region28
      $region27: #{dilated_res_block_pallas.4} parent=23 // pred_region
        %p131 = scmp.lt.s32.totalorder %s9, 3
        %s132 = scalar_select %p131, %s9, 3
        %s133 = smul.addr %s132, 8
        %s134 = scalar_lea.vmem %s0, %s133
      $region28: #{dilated_res_block_pallas.4} parent=23 // pred_fallthru
        _
    $region24: #{dilated_res_block_pallas.4} parent=5 // pred_fallthru
      _
    %p135 = scmp.le.s32.totalorder 1, %s9
    %p136 = scmp.lt.s32.totalorder %s9, 5
    %p137 = pnand %p135, %p136
    %p138 = pneg %p137
    // Predicated region
    $region29: #{dilated_res_block_pallas.4} parent=5 // pred_check
      _
    $region30: #{dilated_res_block_pallas.4} parent=5 // pred_check_branch
      %140 = sbr.rel (%p137) target = $region32
    $region31: #{dilated_res_block_pallas.4} parent=5 // pred_region
      %s141 = ssub.s32 %s9, 1
      %p142 = scmp.lt.s32.totalorder %s14, 3
      %s143 = scalar_select %p142, %s14, 3
      %s144 = smul.addr %s143, 8
      %s145 = scalar_lea.vmem %s0, %s144
      %p146 = pneg %p35
      %p147 = pneg %p32
      %p148 = pneg %p56
      %p149 = pneg %p53
      %p150 = pneg %p77
      %p151 = pneg %p74
      %p152 = pneg %p103
      %p153 = pneg %p100
      %p154 = scmp.lt.s32.totalorder %s14, 3
      %s155 = scalar_select %p154, %s14, 3
      %s156 = smul.addr %s155, 8
      %s157 = scalar_lea.vmem %s3, %s156
      %p158 = scmp.lt.s32.totalorder %s14, 3
      %s159 = scalar_select %p158, %s14, 3
      %s160 = smul.addr %s159, 8
      %s161 = scalar_lea.vmem %s0, %s160
      %p162 = scmp.lt.s32.totalorder %s14, 3
      %s163 = scalar_select %p162, %s14, 3
      %s164 = smul.addr %s163, 8
      %s165 = scalar_lea.vmem %s3, %s164
      %v166 = vld [vmem:[%s161] sm:$0xff]
      %v167 = vld [vmem:[%s1] sm:$0xff]
      %v168 = vld [vmem:[%s1 + $0x8] sm:$0xff]
      %v169 = vld [vmem:[%s1 + $0x10] sm:$0xff]
      %v170 = vld [vmem:[%s1 + $0x18] sm:$0xff]
      %v171 = vld [vmem:[%s1 + $0x20] sm:$0xff]
      %v172 = vld [vmem:[%s1 + $0x28] sm:$0xff]
      %v173 = vld [vmem:[%s1 + $0x30] sm:$0xff]
      %v174 = vld [vmem:[%s1 + $0x38] sm:$0xff]
      %v175 = vld [vmem:[%s1 + $0x40] sm:$0xff]
      %v176 = vld [vmem:[%s1 + $0x48] sm:$0xff]
      %v177 = vld [vmem:[%s1 + $0x50] sm:$0xff]
      %v178 = vld [vmem:[%s1 + $0x58] sm:$0xff]
      %v179 = vld [vmem:[%s1 + $0x60] sm:$0xff]
      %v180 = vld [vmem:[%s1 + $0x68] sm:$0xff]
      %v181 = vld [vmem:[%s1 + $0x70] sm:$0xff]
      %v182 = vld [vmem:[%s1 + $0x78] sm:$0xff]
      %v183 = vld [vmem:[%s2] sm:$0x1]
      %v185 = vlaneseq
      %v186 = vshrl.u32 %v185, 7
      %v187 = vsub.s32 0, %v186
      %v188 = vrot.slane %v183, %v187
      %190 = vmatprep.subr.mxu0 0.0
      %191 = vmatpush1.msra.mxu0 %v167
      %192 = vmatprep.subr.mxu0 0.0
      %193 = vmatpush1.msra.mxu0 %v168
      %194 = vmatprep.subr.mxu0 0.0
      %195 = vmatpush1.msra.mxu0 %v169
      %196 = vmatprep.subr.mxu0 0.0
      %197 = vmatpush1.msra.mxu0 %v170
      %198 = vmatprep.subr.mxu0 0.0
      %199 = vmatpush1.msra.mxu0 %v171
      %200 = vmatprep.subr.mxu0 0.0
      %201 = vmatpush1.msra.mxu0 %v172
      %202 = vmatprep.subr.mxu0 0.0
      %203 = vmatpush1.msra.mxu0 %v173
      %204 = vmatprep.subr.mxu0 0.0
      %205 = vmatpush1.msra.mxu0 %v174
      %206 = vmatprep.subr.mxu0 0.0
      %207 = vmatpush1.msra.mxu0 %v175
      %208 = vmatprep.subr.mxu0 0.0
      %209 = vmatpush1.msra.mxu0 %v176
      %210 = vmatprep.subr.mxu0 0.0
      %211 = vmatpush1.msra.mxu0 %v177
      %212 = vmatprep.subr.mxu0 0.0
      %213 = vmatpush1.msra.mxu0 %v178
      %214 = vmatprep.subr.mxu0 0.0
      %215 = vmatpush1.msra.mxu0 %v179
      %216 = vmatprep.subr.mxu0 0.0
      %217 = vmatpush1.msra.mxu0 %v180
      %218 = vmatprep.subr.mxu0 0.0
      %219 = vmatpush1.msra.mxu0 %v181
      %220 = vmatprep.subr.mxu0 0.0
      %221 = vmatpush1.msra.mxu0 %v182
      %222 = vmatprep.subr.mxu0 0.0
      %223 = vmatpush1.msra.mxu0 0.0
      %224 = vmatprep.subr.mxu0 0.0
      %225 = vmatpush1.msra.mxu0 0.0
      %226 = vmatprep.subr.mxu0 0.0
      %227 = vmatpush1.msra.mxu0 0.0
      %228 = vmatprep.subr.mxu0 0.0
      %229 = vmatpush1.msra.mxu0 0.0
      %230 = vmatprep.subr.mxu0 0.0
      %231 = vmatpush1.msra.mxu0 0.0
      %232 = vmatprep.subr.mxu0 0.0
      %233 = vmatpush1.msra.mxu0 0.0
      %234 = vmatprep.subr.mxu0 0.0
      %235 = vmatpush1.msra.mxu0 0.0
      %236 = vmatprep.subr.mxu0 0.0
      %237 = vmatpush1.msra.mxu0 0.0
      %238 = vmatprep.subr.mxu0 0.0
      %239 = vmatpush1.msra.mxu0 0.0
      %240 = vmatprep.subr.mxu0 0.0
      %241 = vmatpush1.msra.mxu0 0.0
      %242 = vmatprep.subr.mxu0 0.0
      %243 = vmatpush1.msra.mxu0 0.0
      %244 = vmatprep.subr.mxu0 0.0
      %245 = vmatpush1.msra.mxu0 0.0
      %246 = vmatprep.subr.mxu0 0.0
      %247 = vmatpush1.msra.mxu0 0.0
      %248 = vmatprep.subr.mxu0 0.0
      %249 = vmatpush1.msra.mxu0 0.0
      %250 = vmatprep.subr.mxu0 0.0
      %251 = vmatpush1.msra.mxu0 0.0
      %252 = vmatprep.subr.mxu0 0.0
      %253 = vmatpush1.msra.mxu0 0.0
      %254 = vmatprep.mubr.f32.mxu0 0.0
      %255 = vmatmul.mubr.f32.gmra.mrb[0].mxu0 %v166
      %v256 = vpop.f32.mrb[0].mxu0
      %v257 = vadd.f32 %v188, %v256
      %v258 = vpop.f32.mrb[0].mxu0
      %259 = vdwg.mxu0
      %vm260 = vcmp.gt.f32.partialorder %v257, 0.0
      %v261 = vmul.f32 %v257, 0.2
      %v262 = vsel %vm260, %v257, %v261
      %263 = vst [vmem:[%s165] sm:$0xff] %v262
      %p264 = scmp.lt.s32.totalorder %s14, 3
      %s265 = scalar_select %p264, %s14, 3
      %s266 = smul.addr %s265, 8
      %s267 = scalar_lea.vmem %s3, %s266
      // Predicated region
      $region33: #{dilated_res_block_pallas.4} parent=31 // pred_check
        %p268 = pneg %p100
      $region34: #{dilated_res_block_pallas.4} parent=31 // pred_check_branch
        %270 = sbr.rel (%p268) target = $region36
      $region35: #{dilated_res_block_pallas.4} parent=31 // pred_region
        _
      $region36: #{dilated_res_block_pallas.4} parent=31 // pred_fallthru
        _
    $region32: #{dilated_res_block_pallas.4} parent=5 // pred_fallthru
      _
    %p271 = scmp.le.s32.totalorder 2, %s9
    // Predicated region
    $region37: #{dilated_res_block_pallas.4} parent=5 // pred_check
      %p272 = pneg %p271
    $region38: #{dilated_res_block_pallas.4} parent=5 // pred_check_branch
      %274 = sbr.rel (%p272) target = $region40
    $region39: #{dilated_res_block_pallas.4} parent=5 // pred_region
      %s275 = ssub.s32 %s9, 2
      // Predicated region
      $region41: #{dilated_res_block_pallas.4} parent=39 // pred_check
        %p276 = pneg %p106
      $region42: #{dilated_res_block_pallas.4} parent=39 // pred_check_branch
        %278 = sbr.rel (%p276) target = $region44
      $region43: #{dilated_res_block_pallas.4} parent=39 // pred_region
        %p279 = scmp.lt.s32.totalorder %s15, 3
        %s280 = scalar_select %p279, %s15, 3
        %s281 = smul.addr %s280, 8
        %s282 = scalar_lea.vmem %s3, %s281
      $region44: #{dilated_res_block_pallas.4} parent=39 // pred_fallthru
        _
    $region40: #{dilated_res_block_pallas.4} parent=5 // pred_fallthru
      _
  $region6: #{dilated_res_block_pallas.4} parent=0 // loop_footer
    %s13 = sadd.s32 1, %s9
  $region7: #{dilated_res_block_pallas.4} parent=0 // loop_footer_branch
    %8 = sbr.rel target = $region3
  $region8: #{dilated_res_block_pallas.4} parent=0 // loop_exit
    _

// kernel: dilated_res_block_pallas.5
$region0: #{dilated_res_block_pallas.5}
  #allocation0 [shape = 'u32[]', space=smem, size = 0x4, offset = 0x4, fixed_abs, tag = 'smem constant byte address 0x4 - core index']
  #allocation1 [shape = 'u32[144,128]{1,0:T(1,128)}', space=vmem, size = 0x12000, scoped, tag = 'internal scratch']
  %s0 = inlined_call_operand.vmem [shape: f32[32,8,10], index: 0, kind: input, shape index: {}]
  %s1 = inlined_call_operand.vmem [shape: f32[32,8,128], index: 1, kind: input, shape index: {}]
  %s2 = inlined_call_operand.vmem [shape: f32[10,128], index: 2, kind: input, shape index: {}]
  %s3 = inlined_call_operand.vmem [shape: f32[1,128], index: 3, kind: input, shape index: {}]
  %s4 = inlined_call_operand.vmem [shape: f32[256,256], index: 4, kind: input, shape index: {}]
  %s5 = inlined_call_operand.vmem [shape: f32[256,128], index: 5, kind: input, shape index: {}]
  %s6 = inlined_call_operand.vmem [shape: f32[1,128], index: 6, kind: input, shape index: {}]
  %s7 = inlined_call_operand.vmem [shape: f32[32,128], index: 7, kind: output, shape index: {}]
  %s8 = sld [smem:[#allocation0]]
  $region61: #{dilated_res_block_pallas.5} parent=0
    _
  %s10 = ssub.s32 1, %s8
  %s11 = scalar_select 0, %s10, %s8
  loop: start=0, step=1, limit=6
  $region2: #{dilated_res_block_pallas.5} parent=0 // loop_pre_header
    _
  $region3: #{dilated_res_block_pallas.5} parent=0 // loop_header
    %s13 = sphi 0, %s17
    %p14 = scmp.ge.s32.totalorder %s13, 6
    %s23 = sphi 0, %s25
    %s26 = sphi 0, %s23
    %s27 = sphi 0, %s26
    %s43 = sphi 0, %s27
    %s49 = sphi 0, %s51
    %s52 = sphi 0, %s49
    %s53 = sphi 0, %s52
    %s69 = sphi 0, %s53
    %s73 = sphi 0, %s73
    %s75 = sphi 0, %s73
    %s76 = sphi 0, %s75
    %s90 = sphi 0, %s76
    %s94 = sphi 0, %s94
    %s96 = sphi 0, %s94
    %s97 = sphi 0, %s96
    %s111 = sphi 0, %s97
    %s115 = sphi 0, %s115
    %s117 = sphi 0, %s115
    %s118 = sphi 0, %s117
    %s132 = sphi 0, %s118
    %s136 = sphi 0, %s136
    %s138 = sphi 0, %s136
    %s139 = sphi 0, %s138
    %s153 = sphi 0, %s139
    %s157 = sphi 0, %s157
    %s159 = sphi 0, %s157
    %s160 = sphi 0, %s159
    %s174 = sphi 0, %s160
    %s180 = sphi 0, %s182
    %s183 = sphi 0, %s180
    %s184 = sphi 0, %s183
    %s200 = sphi 0, %s184
  $region4: #{dilated_res_block_pallas.5} parent=0 // loop_header_branch
    %16 = sbr.rel (%p14) target = $region8
  $region5: #{dilated_res_block_pallas.5} parent=0 // loop_body
    %s18 = ssub.s32 %s13, 1
    %s19 = ssub.s32 %s13, 2
    %s20 = sadd.s32 %s13, 1
    %s21 = ssub.s32 %s13, %s20
    %p22 = scmp.eq.s32.totalorder %s21, 0
    %s24 = sadd.s32 %s23, 1
    %s25 = scalar_select %p22, %s23, %s24
    %p28 = pneg %p22
    %p29 = scmp.eq.s32.totalorder %s13, 3
    %p30 = por %p28, %p29
    %p31 = scmp.ne.s32.totalorder %s23, %s26
    %p32 = scmp.eq.s32.totalorder %s13, 0
    %p33 = por %p31, %p32
    %p34 = scmp.ne.s32.totalorder %s23, %s26
    %p35 = scmp.eq.s32.totalorder %s18, 3
    %p36 = por %p34, %p35
    %p37 = scmp.ne.s32.totalorder %s26, %s27
    %p38 = scmp.eq.s32.totalorder %s18, 0
    %p39 = por %p37, %p38
    %p40 = scmp.ne.s32.totalorder %s26, %s27
    %p41 = scmp.eq.s32.totalorder %s19, 3
    %p42 = por %p40, %p41
    %p44 = scmp.ne.s32.totalorder %s27, %s43
    %p45 = scmp.eq.s32.totalorder %s19, 0
    %p46 = por %p44, %p45
    %s47 = ssub.s32 %s13, %s20
    %p48 = scmp.eq.s32.totalorder %s47, 0
    %s50 = sadd.s32 %s49, 1
    %s51 = scalar_select %p48, %s49, %s50
    %p54 = pneg %p48
    %p55 = scmp.eq.s32.totalorder %s13, 3
    %p56 = por %p54, %p55
    %p57 = scmp.ne.s32.totalorder %s49, %s52
    %p58 = scmp.eq.s32.totalorder %s13, 0
    %p59 = por %p57, %p58
    %p60 = scmp.ne.s32.totalorder %s49, %s52
    %p61 = scmp.eq.s32.totalorder %s18, 3
    %p62 = por %p60, %p61
    %p63 = scmp.ne.s32.totalorder %s52, %s53
    %p64 = scmp.eq.s32.totalorder %s18, 0
    %p65 = por %p63, %p64
    %p66 = scmp.ne.s32.totalorder %s52, %s53
    %p67 = scmp.eq.s32.totalorder %s19, 3
    %p68 = por %p66, %p67
    %p70 = scmp.ne.s32.totalorder %s53, %s69
    %p71 = scmp.eq.s32.totalorder %s19, 0
    %p72 = por %p70, %p71
    %s74 = sadd.s32 %s73, 1
    %p77 = scmp.eq.s32.totalorder %s13, 3
    %p78 = scmp.ne.s32.totalorder %s73, %s75
    %p79 = scmp.eq.s32.totalorder %s13, 0
    %p80 = por %p78, %p79
    %p81 = scmp.ne.s32.totalorder %s73, %s75
    %p82 = scmp.eq.s32.totalorder %s18, 3
    %p83 = por %p81, %p82
    %p84 = scmp.ne.s32.totalorder %s75, %s76
    %p85 = scmp.eq.s32.totalorder %s18, 0
    %p86 = por %p84, %p85
    %p87 = scmp.ne.s32.totalorder %s75, %s76
    %p88 = scmp.eq.s32.totalorder %s19, 3
    %p89 = por %p87, %p88
    %p91 = scmp.ne.s32.totalorder %s76, %s90
    %p92 = scmp.eq.s32.totalorder %s19, 0
    %p93 = por %p91, %p92
    %s95 = sadd.s32 %s94, 1
    %p98 = scmp.eq.s32.totalorder %s13, 3
    %p99 = scmp.ne.s32.totalorder %s94, %s96
    %p100 = scmp.eq.s32.totalorder %s13, 0
    %p101 = por %p99, %p100
    %p102 = scmp.ne.s32.totalorder %s94, %s96
    %p103 = scmp.eq.s32.totalorder %s18, 3
    %p104 = por %p102, %p103
    %p105 = scmp.ne.s32.totalorder %s96, %s97
    %p106 = scmp.eq.s32.totalorder %s18, 0
    %p107 = por %p105, %p106
    %p108 = scmp.ne.s32.totalorder %s96, %s97
    %p109 = scmp.eq.s32.totalorder %s19, 3
    %p110 = por %p108, %p109
    %p112 = scmp.ne.s32.totalorder %s97, %s111
    %p113 = scmp.eq.s32.totalorder %s19, 0
    %p114 = por %p112, %p113
    %s116 = sadd.s32 %s115, 1
    %p119 = scmp.eq.s32.totalorder %s13, 3
    %p120 = scmp.ne.s32.totalorder %s115, %s117
    %p121 = scmp.eq.s32.totalorder %s13, 0
    %p122 = por %p120, %p121
    %p123 = scmp.ne.s32.totalorder %s115, %s117
    %p124 = scmp.eq.s32.totalorder %s18, 3
    %p125 = por %p123, %p124
    %p126 = scmp.ne.s32.totalorder %s117, %s118
    %p127 = scmp.eq.s32.totalorder %s18, 0
    %p128 = por %p126, %p127
    %p129 = scmp.ne.s32.totalorder %s117, %s118
    %p130 = scmp.eq.s32.totalorder %s19, 3
    %p131 = por %p129, %p130
    %p133 = scmp.ne.s32.totalorder %s118, %s132
    %p134 = scmp.eq.s32.totalorder %s19, 0
    %p135 = por %p133, %p134
    %s137 = sadd.s32 %s136, 1
    %p140 = scmp.eq.s32.totalorder %s13, 3
    %p141 = scmp.ne.s32.totalorder %s136, %s138
    %p142 = scmp.eq.s32.totalorder %s13, 0
    %p143 = por %p141, %p142
    %p144 = scmp.ne.s32.totalorder %s136, %s138
    %p145 = scmp.eq.s32.totalorder %s18, 3
    %p146 = por %p144, %p145
    %p147 = scmp.ne.s32.totalorder %s138, %s139
    %p148 = scmp.eq.s32.totalorder %s18, 0
    %p149 = por %p147, %p148
    %p150 = scmp.ne.s32.totalorder %s138, %s139
    %p151 = scmp.eq.s32.totalorder %s19, 3
    %p152 = por %p150, %p151
    %p154 = scmp.ne.s32.totalorder %s139, %s153
    %p155 = scmp.eq.s32.totalorder %s19, 0
    %p156 = por %p154, %p155
    %s158 = sadd.s32 %s157, 1
    %p161 = scmp.eq.s32.totalorder %s13, 3
    %p162 = scmp.ne.s32.totalorder %s157, %s159
    %p163 = scmp.eq.s32.totalorder %s13, 0
    %p164 = por %p162, %p163
    %p165 = scmp.ne.s32.totalorder %s157, %s159
    %p166 = scmp.eq.s32.totalorder %s18, 3
    %p167 = por %p165, %p166
    %p168 = scmp.ne.s32.totalorder %s159, %s160
    %p169 = scmp.eq.s32.totalorder %s18, 0
    %p170 = por %p168, %p169
    %p171 = scmp.ne.s32.totalorder %s159, %s160
    %p172 = scmp.eq.s32.totalorder %s19, 3
    %p173 = por %p171, %p172
    %p175 = scmp.ne.s32.totalorder %s160, %s174
    %p176 = scmp.eq.s32.totalorder %s19, 0
    %p177 = por %p175, %p176
    %s178 = ssub.s32 %s13, %s20
    %p179 = scmp.eq.s32.totalorder %s178, 0
    %s181 = sadd.s32 %s180, 1
    %s182 = scalar_select %p179, %s180, %s181
    %p185 = pneg %p179
    %p186 = scmp.eq.s32.totalorder %s13, 3
    %p187 = por %p185, %p186
    %p188 = scmp.ne.s32.totalorder %s180, %s183
    %p189 = scmp.eq.s32.totalorder %s13, 0
    %p190 = por %p188, %p189
    %p191 = scmp.ne.s32.totalorder %s180, %s183
    %p192 = scmp.eq.s32.totalorder %s18, 3
    %p193 = por %p191, %p192
    %p194 = scmp.ne.s32.totalorder %s183, %s184
    %p195 = scmp.eq.s32.totalorder %s18, 0
    %p196 = por %p194, %p195
    %p197 = scmp.ne.s32.totalorder %s183, %s184
    %p198 = scmp.eq.s32.totalorder %s19, 3
    %p199 = por %p197, %p198
    %p201 = scmp.ne.s32.totalorder %s184, %s200
    %p202 = scmp.eq.s32.totalorder %s19, 0
    %p203 = por %p201, %p202
    %p204 = scmp.le.s32.totalorder 1, %s13
    %p205 = scmp.lt.s32.totalorder %s13, 5
    %p206 = pnand %p204, %p205
    %p207 = pneg %p206
    // Predicated region
    $region9: #{dilated_res_block_pallas.5} parent=5 // pred_check
      _
    $region10: #{dilated_res_block_pallas.5} parent=5 // pred_check_branch
      %209 = sbr.rel (%p206) target = $region12
    $region11: #{dilated_res_block_pallas.5} parent=5 // pred_region
      %s210 = ssub.s32 %s13, 1
      // Predicated region
      $region13: #{dilated_res_block_pallas.5} parent=11 // pred_check
        %p211 = pneg %p86
      $region14: #{dilated_res_block_pallas.5} parent=11 // pred_check_branch
        %213 = sbr.rel (%p211) target = $region16
      $region15: #{dilated_res_block_pallas.5} parent=11 // pred_region
        _
      $region16: #{dilated_res_block_pallas.5} parent=11 // pred_fallthru
        _
      // Predicated region
      $region17: #{dilated_res_block_pallas.5} parent=11 // pred_check
        %p214 = pneg %p107
      $region18: #{dilated_res_block_pallas.5} parent=11 // pred_check_branch
        %216 = sbr.rel (%p214) target = $region20
      $region19: #{dilated_res_block_pallas.5} parent=11 // pred_region
        _
      $region20: #{dilated_res_block_pallas.5} parent=11 // pred_fallthru
        _
      // Predicated region
      $region21: #{dilated_res_block_pallas.5} parent=11 // pred_check
        %p217 = pneg %p128
      $region22: #{dilated_res_block_pallas.5} parent=11 // pred_check_branch
        %219 = sbr.rel (%p217) target = $region24
      $region23: #{dilated_res_block_pallas.5} parent=11 // pred_region
        _
      $region24: #{dilated_res_block_pallas.5} parent=11 // pred_fallthru
        _
      // Predicated region
      $region25: #{dilated_res_block_pallas.5} parent=11 // pred_check
        %p220 = pneg %p149
      $region26: #{dilated_res_block_pallas.5} parent=11 // pred_check_branch
        %222 = sbr.rel (%p220) target = $region28
      $region27: #{dilated_res_block_pallas.5} parent=11 // pred_region
        _
      $region28: #{dilated_res_block_pallas.5} parent=11 // pred_fallthru
        _
      // Predicated region
      $region29: #{dilated_res_block_pallas.5} parent=11 // pred_check
        %p223 = pneg %p170
      $region30: #{dilated_res_block_pallas.5} parent=11 // pred_check_branch
        %225 = sbr.rel (%p223) target = $region32
      $region31: #{dilated_res_block_pallas.5} parent=11 // pred_region
        _
      $region32: #{dilated_res_block_pallas.5} parent=11 // pred_fallthru
        _
    $region12: #{dilated_res_block_pallas.5} parent=5 // pred_fallthru
      _
    %p226 = scmp.lt.s32.totalorder %s13, 4
    // Predicated region
    $region33: #{dilated_res_block_pallas.5} parent=5 // pred_check
      %p227 = pneg %p226
    $region34: #{dilated_res_block_pallas.5} parent=5 // pred_check_branch
      %229 = sbr.rel (%p227) target = $region36
    $region35: #{dilated_res_block_pallas.5} parent=5 // pred_region
      // Predicated region
      $region37: #{dilated_res_block_pallas.5} parent=35 // pred_check
        %p230 = pneg %p33
      $region38: #{dilated_res_block_pallas.5} parent=35 // pred_check_branch
        %232 = sbr.rel (%p230) target = $region40
      $region39: #{dilated_res_block_pallas.5} parent=35 // pred_region
        %s233 = smul.u32 8, %s13
        %p234 = scmp.lt.s32.totalorder %s233, 31
        %s235 = scalar_select %p234, %s233, 31
        %s236 = smul.addr %s235, 8
        %s237 = scalar_lea.vmem %s0, %s236
        %s238 = smul.u32 8, %s13
      $region40: #{dilated_res_block_pallas.5} parent=35 // pred_fallthru
        _
      // Predicated region
      $region41: #{dilated_res_block_pallas.5} parent=35 // pred_check
        %p239 = pneg %p59
      $region42: #{dilated_res_block_pallas.5} parent=35 // pred_check_branch
        %241 = sbr.rel (%p239) target = $region44
      $region43: #{dilated_res_block_pallas.5} parent=35 // pred_region
        %s242 = smul.u32 8, %s13
        %p243 = scmp.lt.s32.totalorder %s242, 31
        %s244 = scalar_select %p243, %s242, 31
        %s245 = smul.addr %s244, 8
        %s246 = scalar_lea.vmem %s1, %s245
        %s247 = smul.u32 8, %s13
      $region44: #{dilated_res_block_pallas.5} parent=35 // pred_fallthru
        _
    $region36: #{dilated_res_block_pallas.5} parent=5 // pred_fallthru
      _
    %p248 = scmp.le.s32.totalorder 1, %s13
    %p249 = scmp.lt.s32.totalorder %s13, 5
    %p250 = pnand %p248, %p249
    %p251 = pneg %p250
    // Predicated region
    $region45: #{dilated_res_block_pallas.5} parent=5 // pred_check
      _
    $region46: #{dilated_res_block_pallas.5} parent=5 // pred_check_branch
      %253 = sbr.rel (%p250) target = $region48
    $region47: #{dilated_res_block_pallas.5} parent=5 // pred_region
      %s254 = ssub.s32 %s13, 1
      %s255 = smul.u32 8, %s18
      %p256 = scmp.lt.s32.totalorder %s255, 31
      %s257 = scalar_select %p256, %s255, 31
      %s258 = smul.addr %s257, 8
      %s259 = scalar_lea.vmem %s0, %s258
      %p260 = pneg %p39
      %p261 = pneg %p36
      %s262 = smul.u32 8, %s18
      %p263 = scmp.lt.s32.totalorder %s262, 31
      %s264 = scalar_select %p263, %s262, 31
      %s265 = smul.addr %s264, 8
      %s266 = scalar_lea.vmem %s1, %s265
      %p267 = pneg %p65
      %p268 = pneg %p62
      %p269 = pneg %p86
      %p270 = pneg %p83
      %p271 = pneg %p107
      %p272 = pneg %p104
      %p273 = pneg %p128
      %p274 = pneg %p125
      %p275 = pneg %p149
      %p276 = pneg %p146
      %p277 = pneg %p170
      %p278 = pneg %p167
      %p279 = pneg %p196
      %p280 = pneg %p193
      %p281 = scmp.lt.s32.totalorder %s18, 3
      %s282 = scalar_select %p281, %s18, 3
      %s283 = smul.addr %s282, 8
      %s284 = scalar_lea.vmem %s7, %s283
      %s285 = smul.u32 8, %s18
      %p286 = scmp.lt.s32.totalorder %s285, 31
      %s287 = scalar_select %p286, %s285, 31
      %s288 = smul.addr %s287, 8
      %s289 = scalar_lea.vmem %s0, %s288
      %s290 = smul.u32 8, %s18
      %s291 = smul.u32 8, %s18
      %p292 = scmp.lt.s32.totalorder %s291, 31
      %s293 = scalar_select %p292, %s291, 31
      %s294 = smul.addr %s293, 8
      %s295 = scalar_lea.vmem %s1, %s294
      %s296 = smul.u32 8, %s18
      %p297 = scmp.lt.s32.totalorder %s18, 3
      %s298 = scalar_select %p297, %s18, 3
      %s299 = smul.addr %s298, 8
      %s300 = scalar_lea.vmem %s7, %s299
      %v301 = vld [vmem:[%s289] sm:$0xff]
      %v302 = vld [vmem:[%s289 + $0x8] sm:$0xff]
      %v303 = vld [vmem:[%s289 + $0x10] sm:$0xff]
      %v304 = vld [vmem:[%s289 + $0x18] sm:$0xff]
      %v305 = vld [vmem:[%s289 + $0x20] sm:$0xff]
      %v306 = vld [vmem:[%s289 + $0x28] sm:$0xff]
      %v307 = vld [vmem:[%s289 + $0x30] sm:$0xff]
      %v308 = vld [vmem:[%s289 + $0x38] sm:$0xff]
      %v309 = vld [vmem:[%s2] sm:$0xff]
      %v310 = vld [vmem:[%s2 + $0x8] sm:$0x3]
      %v311 = vld [vmem:[%s3] sm:$0x1]
      %v313 = vlaneseq
      %v314 = vshrl.u32 %v313, 7
      %v315 = vsub.s32 0, %v314
      %v316 = vrot.slane %v311, %v315
      %vm318 = vcmask 80896
      %v320 = vsel %vm318, %v301, 0
      %v323 = vsel %vm318, %v302, 0
      %v326 = vsel %vm318, %v303, 0
      %v329 = vsel %vm318, %v304, 0
      %v332 = vsel %vm318, %v305, 0
      %v335 = vsel %vm318, %v306, 0
      %v338 = vsel %vm318, %v307, 0
      %v341 = vsel %vm318, %v308, 0
      %vm343 = vcmask 1041408
      %v345 = vsel %vm343, %v310, 0
      %347 = vmatprep.subr.mxu0 0.0
      %348 = vmatpush1.msra.mxu0 %v309
      %349 = vmatprep.subr.mxu0 0.0
      %350 = vmatpush1.msra.mxu0 %v345
      %351 = vmatprep.subr.mxu0 0.0
      %352 = vmatpush1.msra.mxu0 0.0
      %353 = vmatprep.subr.mxu0 0.0
      %354 = vmatpush1.msra.mxu0 0.0
      %355 = vmatprep.subr.mxu0 0.0
      %356 = vmatpush1.msra.mxu0 0.0
      %357 = vmatprep.subr.mxu0 0.0
      %358 = vmatpush1.msra.mxu0 0.0
      %359 = vmatprep.subr.mxu0 0.0
      %360 = vmatpush1.msra.mxu0 0.0
      %361 = vmatprep.subr.mxu0 0.0
      %362 = vmatpush1.msra.mxu0 0.0
      %363 = vmatprep.subr.mxu0 0.0
      %364 = vmatpush1.msra.mxu0 0.0
      %365 = vmatprep.subr.mxu0 0.0
      %366 = vmatpush1.msra.mxu0 0.0
      %367 = vmatprep.subr.mxu0 0.0
      %368 = vmatpush1.msra.mxu0 0.0
      %369 = vmatprep.subr.mxu0 0.0
      %370 = vmatpush1.msra.mxu0 0.0
      %371 = vmatprep.subr.mxu0 0.0
      %372 = vmatpush1.msra.mxu0 0.0
      %373 = vmatprep.subr.mxu0 0.0
      %374 = vmatpush1.msra.mxu0 0.0
      %375 = vmatprep.subr.mxu0 0.0
      %376 = vmatpush1.msra.mxu0 0.0
      %377 = vmatprep.subr.mxu0 0.0
      %378 = vmatpush1.msra.mxu0 0.0
      %379 = vmatprep.subr.mxu0 0.0
      %380 = vmatpush1.msra.mxu0 0.0
      %381 = vmatprep.subr.mxu0 0.0
      %382 = vmatpush1.msra.mxu0 0.0
      %383 = vmatprep.subr.mxu0 0.0
      %384 = vmatpush1.msra.mxu0 0.0
      %385 = vmatprep.subr.mxu0 0.0
      %386 = vmatpush1.msra.mxu0 0.0
      %387 = vmatprep.subr.mxu0 0.0
      %388 = vmatpush1.msra.mxu0 0.0
      %389 = vmatprep.subr.mxu0 0.0
      %390 = vmatpush1.msra.mxu0 0.0
      %391 = vmatprep.subr.mxu0 0.0
      %392 = vmatpush1.msra.mxu0 0.0
      %393 = vmatprep.subr.mxu0 0.0
      %394 = vmatpush1.msra.mxu0 0.0
      %395 = vmatprep.subr.mxu0 0.0
      %396 = vmatpush1.msra.mxu0 0.0
      %397 = vmatprep.subr.mxu0 0.0
      %398 = vmatpush1.msra.mxu0 0.0
      %399 = vmatprep.subr.mxu0 0.0
      %400 = vmatpush1.msra.mxu0 0.0
      %401 = vmatprep.subr.mxu0 0.0
      %402 = vmatpush1.msra.mxu0 0.0
      %403 = vmatprep.subr.mxu0 0.0
      %404 = vmatpush1.msra.mxu0 0.0
      %405 = vmatprep.subr.mxu0 0.0
      %406 = vmatpush1.msra.mxu0 0.0
      %407 = vmatprep.subr.mxu0 0.0
      %408 = vmatpush1.msra.mxu0 0.0
      %409 = vmatprep.subr.mxu0 0.0
      %410 = vmatpush1.msra.mxu0 0.0
      %411 = vmatprep.mubr.f32.mxu0 0.0
      %412 = vmatmul.mubr.f32.gmra.mrb[0].mxu0 %v320
      %v413 = vpop.f32.mrb[0].mxu0
      %v414 = vadd.f32 %v316, %v413
      %v415 = vpop.f32.mrb[0].mxu0
      %416 = vmatprep.mubr.f32.mxu0 0.0
      %417 = vmatmul.mubr.f32.gmra.mrb[0].mxu0 %v323
      %v418 = vpop.f32.mrb[0].mxu0
      %v419 = vadd.f32 %v316, %v418
      %v420 = vpop.f32.mrb[0].mxu0
      %421 = vmatprep.mubr.f32.mxu0 0.0
      %422 = vmatmul.mubr.f32.gmra.mrb[0].mxu0 %v326
      %v423 = vpop.f32.mrb[0].mxu0
      %v424 = vadd.f32 %v316, %v423
      %v425 = vpop.f32.mrb[0].mxu0
      %426 = vmatprep.mubr.f32.mxu0 0.0
      %427 = vmatmul.mubr.f32.gmra.mrb[0].mxu0 %v329
      %v428 = vpop.f32.mrb[0].mxu0
      %v429 = vadd.f32 %v316, %v428
      %v430 = vpop.f32.mrb[0].mxu0
      %431 = vmatprep.mubr.f32.mxu0 0.0
      %432 = vmatmul.mubr.f32.gmra.mrb[0].mxu0 %v332
      %v433 = vpop.f32.mrb[0].mxu0
      %v434 = vadd.f32 %v316, %v433
      %v435 = vpop.f32.mrb[0].mxu0
      %436 = vmatprep.mubr.f32.mxu0 0.0
      %437 = vmatmul.mubr.f32.gmra.mrb[0].mxu0 %v335
      %v438 = vpop.f32.mrb[0].mxu0
      %v439 = vadd.f32 %v316, %v438
      %v440 = vpop.f32.mrb[0].mxu0
      %441 = vmatprep.mubr.f32.mxu0 0.0
      %442 = vmatmul.mubr.f32.gmra.mrb[0].mxu0 %v338
      %v443 = vpop.f32.mrb[0].mxu0
      %v444 = vadd.f32 %v316, %v443
      %v445 = vpop.f32.mrb[0].mxu0
      %446 = vmatprep.mubr.f32.mxu0 0.0
      %447 = vmatmul.mubr.f32.gmra.mrb[0].mxu0 %v341
      %v448 = vpop.f32.mrb[0].mxu0
      %v449 = vadd.f32 %v316, %v448
      %v450 = vpop.f32.mrb[0].mxu0
      %451 = vdwg.mxu0
      %vm452 = vcmp.gt.f32.partialorder %v414, 0.0
      %vm453 = vcmp.gt.f32.partialorder %v419, 0.0
      %vm454 = vcmp.gt.f32.partialorder %v424, 0.0
      %vm455 = vcmp.gt.f32.partialorder %v429, 0.0
      %vm456 = vcmp.gt.f32.partialorder %v434, 0.0
      %vm457 = vcmp.gt.f32.partialorder %v439, 0.0
      %vm458 = vcmp.gt.f32.partialorder %v444, 0.0
      %vm459 = vcmp.gt.f32.partialorder %v449, 0.0
      %v460 = vmul.f32 %v414, 0.2
      %v461 = vmul.f32 %v419, 0.2
      %v462 = vmul.f32 %v424, 0.2
      %v463 = vmul.f32 %v429, 0.2
      %v464 = vmul.f32 %v434, 0.2
      %v465 = vmul.f32 %v439, 0.2
      %v466 = vmul.f32 %v444, 0.2
      %v467 = vmul.f32 %v449, 0.2
      %v468 = vsel %vm452, %v414, %v460
      %v469 = vsel %vm453, %v419, %v461
      %v470 = vsel %vm454, %v424, %v462
      %v471 = vsel %vm455, %v429, %v463
      %v472 = vsel %vm456, %v434, %v464
      %v473 = vsel %vm457, %v439, %v465
      %v474 = vsel %vm458, %v444, %v466
      %v475 = vsel %vm459, %v449, %v467
      %v476 = vld [vmem:[%s295] sm:$0xff]
      %v477 = vld [vmem:[%s295 + $0x8] sm:$0xff]
      %v478 = vld [vmem:[%s295 + $0x10] sm:$0xff]
      %v479 = vld [vmem:[%s295 + $0x18] sm:$0xff]
      %v480 = vld [vmem:[%s295 + $0x20] sm:$0xff]
      %v481 = vld [vmem:[%s295 + $0x28] sm:$0xff]
      %v482 = vld [vmem:[%s295 + $0x30] sm:$0xff]
      %v483 = vld [vmem:[%s295 + $0x38] sm:$0xff]
      %v484 = vld [vmem:[%s4] sm:$0xff]
      %v485 = vld [vmem:[%s4 + $0x8] sm:$0xff]
      %v486 = vld [vmem:[%s4 + $0x10] sm:$0xff]
      %v487 = vld [vmem:[%s4 + $0x18] sm:$0xff]
      %v488 = vld [vmem:[%s4 + $0x20] sm:$0xff]
      %v489 = vld [vmem:[%s4 + $0x28] sm:$0xff]
      %v490 = vld [vmem:[%s4 + $0x30] sm:$0xff]
      %v491 = vld [vmem:[%s4 + $0x38] sm:$0xff]
      %v492 = vld [vmem:[%s4 + $0x40] sm:$0xff]
      %v493 = vld [vmem:[%s4 + $0x48] sm:$0xff]
      %v494 = vld [vmem:[%s4 + $0x50] sm:$0xff]
      %v495 = vld [vmem:[%s4 + $0x58] sm:$0xff]
      %v496 = vld [vmem:[%s4 + $0x60] sm:$0xff]
      %v497 = vld [vmem:[%s4 + $0x68] sm:$0xff]
      %v498 = vld [vmem:[%s4 + $0x70] sm:$0xff]
      %v499 = vld [vmem:[%s4 + $0x78] sm:$0xff]
      %v500 = vld [vmem:[%s4 + $0x80] sm:$0xff]
      %v501 = vld [vmem:[%s4 + $0x88] sm:$0xff]
      %v502 = vld [vmem:[%s4 + $0x90] sm:$0xff]
      %v503 = vld [vmem:[%s4 + $0x98] sm:$0xff]
      %v504 = vld [vmem:[%s4 + $0xa0] sm:$0xff]
      %v505 = vld [vmem:[%s4 + $0xa8] sm:$0xff]
      %v506 = vld [vmem:[%s4 + $0xb0] sm:$0xff]
      %v507 = vld [vmem:[%s4 + $0xb8] sm:$0xff]
      %v508 = vld [vmem:[%s4 + $0xc0] sm:$0xff]
      %v509 = vld [vmem:[%s4 + $0xc8] sm:$0xff]
      %v510 = vld [vmem:[%s4 + $0xd0] sm:$0xff]
      %v511 = vld [vmem:[%s4 + $0xd8] sm:$0xff]
      %v512 = vld [vmem:[%s4 + $0xe0] sm:$0xff]
      %v513 = vld [vmem:[%s4 + $0xe8] sm:$0xff]
      %v514 = vld [vmem:[%s4 + $0xf0] sm:$0xff]
      %v515 = vld [vmem:[%s4 + $0xf8] sm:$0xff]
      %v516 = vld [vmem:[%s4 + $0x100] sm:$0xff]
      %v517 = vld [vmem:[%s4 + $0x108] sm:$0xff]
      %v518 = vld [vmem:[%s4 + $0x110] sm:$0xff]
      %v519 = vld [vmem:[%s4 + $0x118] sm:$0xff]
      %v520 = vld [vmem:[%s4 + $0x120] sm:$0xff]
      %v521 = vld [vmem:[%s4 + $0x128] sm:$0xff]
      %v522 = vld [vmem:[%s4 + $0x130] sm:$0xff]
      %v523 = vld [vmem:[%s4 + $0x138] sm:$0xff]
      %v524 = vld [vmem:[%s4 + $0x140] sm:$0xff]
      %v525 = vld [vmem:[%s4 + $0x148] sm:$0xff]
      %v526 = vld [vmem:[%s4 + $0x150] sm:$0xff]
      %v527 = vld [vmem:[%s4 + $0x158] sm:$0xff]
      %v528 = vld [vmem:[%s4 + $0x160] sm:$0xff]
      %v529 = vld [vmem:[%s4 + $0x168] sm:$0xff]
      %v530 = vld [vmem:[%s4 + $0x170] sm:$0xff]
      %v531 = vld [vmem:[%s4 + $0x178] sm:$0xff]
      %v532 = vld [vmem:[%s4 + $0x180] sm:$0xff]
      %v533 = vld [vmem:[%s4 + $0x188] sm:$0xff]
      %v534 = vld [vmem:[%s4 + $0x190] sm:$0xff]
      %v535 = vld [vmem:[%s4 + $0x198] sm:$0xff]
      %v536 = vld [vmem:[%s4 + $0x1a0] sm:$0xff]
      %v537 = vld [vmem:[%s4 + $0x1a8] sm:$0xff]
      %v538 = vld [vmem:[%s4 + $0x1b0] sm:$0xff]
      %v539 = vld [vmem:[%s4 + $0x1b8] sm:$0xff]
      %v540 = vld [vmem:[%s4 + $0x1c0] sm:$0xff]
      %v541 = vld [vmem:[%s4 + $0x1c8] sm:$0xff]
      %v542 = vld [vmem:[%s4 + $0x1d0] sm:$0xff]
      %v543 = vld [vmem:[%s4 + $0x1d8] sm:$0xff]
      %v544 = vld [vmem:[%s4 + $0x1e0] sm:$0xff]
      %v545 = vld [vmem:[%s4 + $0x1e8] sm:$0xff]
      %v546 = vld [vmem:[%s4 + $0x1f0] sm:$0xff]
      %v547 = vld [vmem:[%s4 + $0x1f8] sm:$0xff]
      %548 = vmatprep.subr.mxu0 %v485
      %549 = vmatpush1.msra.mxu0 %v484
      %550 = vmatprep.subr.mxu0 %v487
      %551 = vmatpush1.msra.mxu0 %v486
      %552 = vmatprep.subr.mxu0 %v489
      %553 = vmatpush1.msra.mxu0 %v488
      %554 = vmatprep.subr.mxu0 %v491
      %555 = vmatpush1.msra.mxu0 %v490
      %556 = vmatprep.subr.mxu0 %v493
      %557 = vmatpush1.msra.mxu0 %v492
      %558 = vmatprep.subr.mxu0 %v495
      %559 = vmatpush1.msra.mxu0 %v494
      %560 = vmatprep.subr.mxu0 %v497
      %561 = vmatpush1.msra.mxu0 %v496
      %562 = vmatprep.subr.mxu0 %v499
      %563 = vmatpush1.msra.mxu0 %v498
      %564 = vmatprep.subr.mxu0 %v501
      %565 = vmatpush1.msra.mxu0 %v500
      %566 = vmatprep.subr.mxu0 %v503
      %567 = vmatpush1.msra.mxu0 %v502
      %568 = vmatprep.subr.mxu0 %v505
      %569 = vmatpush1.msra.mxu0 %v504
      %570 = vmatprep.subr.mxu0 %v507
      %571 = vmatpush1.msra.mxu0 %v506
      %572 = vmatprep.subr.mxu0 %v509
      %573 = vmatpush1.msra.mxu0 %v508
      %574 = vmatprep.subr.mxu0 %v511
      %575 = vmatpush1.msra.mxu0 %v510
      %576 = vmatprep.subr.mxu0 %v513
      %577 = vmatpush1.msra.mxu0 %v512
      %578 = vmatprep.subr.mxu0 %v515
      %579 = vmatpush1.msra.mxu0 %v514
      %580 = vmatprep.subr.mxu0 %v517
      %581 = vmatpush1.msra.mxu0 %v516
      %582 = vmatprep.subr.mxu0 %v519
      %583 = vmatpush1.msra.mxu0 %v518
      %584 = vmatprep.subr.mxu0 %v521
      %585 = vmatpush1.msra.mxu0 %v520
      %586 = vmatprep.subr.mxu0 %v523
      %587 = vmatpush1.msra.mxu0 %v522
      %588 = vmatprep.subr.mxu0 %v525
      %589 = vmatpush1.msra.mxu0 %v524
      %590 = vmatprep.subr.mxu0 %v527
      %591 = vmatpush1.msra.mxu0 %v526
      %592 = vmatprep.subr.mxu0 %v529
      %593 = vmatpush1.msra.mxu0 %v528
      %594 = vmatprep.subr.mxu0 %v531
      %595 = vmatpush1.msra.mxu0 %v530
      %596 = vmatprep.subr.mxu0 %v533
      %597 = vmatpush1.msra.mxu0 %v532
      %598 = vmatprep.subr.mxu0 %v535
      %599 = vmatpush1.msra.mxu0 %v534
      %600 = vmatprep.subr.mxu0 %v537
      %601 = vmatpush1.msra.mxu0 %v536
      %602 = vmatprep.subr.mxu0 %v539
      %603 = vmatpush1.msra.mxu0 %v538
      %604 = vmatprep.subr.mxu0 %v541
      %605 = vmatpush1.msra.mxu0 %v540
      %606 = vmatprep.subr.mxu0 %v543
      %607 = vmatpush1.msra.mxu0 %v542
      %608 = vmatprep.subr.mxu0 %v545
      %609 = vmatpush1.msra.mxu0 %v544
      %610 = vmatprep.subr.mxu0 %v547
      %611 = vmatpush1.msra.mxu0 %v546
      %612 = vmatprep.mubr.f32.mxu0 %v468
      %613 = vmatmul.mubr.f32.gmra.mrb[0].mxu0 %v476
      %v614 = vpop.f32.mrb[0].mxu0
      %v615 = vadd.f32 0.0, %v614
      %v616 = vpop.f32.mrb[0].mxu0
      %v617 = vadd.f32 0.0, %v616
      %618 = vmatprep.mubr.f32.mxu0 %v469
      %619 = vmatmul.mubr.f32.gmra.mrb[0].mxu0 %v477
      %v620 = vpop.f32.mrb[0].mxu0
      %v621 = vadd.f32 0.0, %v620
      %v622 = vpop.f32.mrb[0].mxu0
      %v623 = vadd.f32 0.0, %v622
      %624 = vmatprep.mubr.f32.mxu0 %v470
      %625 = vmatmul.mubr.f32.gmra.mrb[0].mxu0 %v478
      %v626 = vpop.f32.mrb[0].mxu0
      %v627 = vadd.f32 0.0, %v626
      %v628 = vpop.f32.mrb[0].mxu0
      %v629 = vadd.f32 0.0, %v628
      %630 = vmatprep.mubr.f32.mxu0 %v471
      %631 = vmatmul.mubr.f32.gmra.mrb[0].mxu0 %v479
      %v632 = vpop.f32.mrb[0].mxu0
      %v633 = vadd.f32 0.0, %v632
      %v634 = vpop.f32.mrb[0].mxu0
      %v635 = vadd.f32 0.0, %v634
      %636 = vmatprep.mubr.f32.mxu0 %v472
      %637 = vmatmul.mubr.f32.gmra.mrb[0].mxu0 %v480
      %v638 = vpop.f32.mrb[0].mxu0
      %v639 = vadd.f32 0.0, %v638
      %v640 = vpop.f32.mrb[0].mxu0
      %v641 = vadd.f32 0.0, %v640
      %642 = vmatprep.mubr.f32.mxu0 %v473
      %643 = vmatmul.mubr.f32.gmra.mrb[0].mxu0 %v481
      %v644 = vpop.f32.mrb[0].mxu0
      %v645 = vadd.f32 0.0, %v644
      %v646 = vpop.f32.mrb[0].mxu0
      %v647 = vadd.f32 0.0, %v646
      %648 = vmatprep.mubr.f32.mxu0 %v474
      %649 = vmatmul.mubr.f32.gmra.mrb[0].mxu0 %v482
      %v650 = vpop.f32.mrb[0].mxu0
      %v651 = vadd.f32 0.0, %v650
      %v652 = vpop.f32.mrb[0].mxu0
      %v653 = vadd.f32 0.0, %v652
      %654 = vmatprep.mubr.f32.mxu0 %v475
      %655 = vmatmul.mubr.f32.gmra.mrb[0].mxu0 %v483
      %v656 = vpop.f32.mrb[0].mxu0
      %v657 = vadd.f32 0.0, %v656
      %v658 = vpop.f32.mrb[0].mxu0
      %v659 = vadd.f32 0.0, %v658
      %660 = vdwg.mxu0
      %v661 = vrot.slane %v615, 4
      %v662 = vmax.f32 %v615, %v661
      %v663 = vrot.slane %v662, 2
      %v664 = vmax.f32 %v662, %v663
      %v665 = vrot.slane %v664, 1
      %v666 = vmax.f32 %v664, %v665
      %v667 = vrot.slane %v617, 4
      %v668 = vmax.f32 %v617, %v667
      %v669 = vrot.slane %v668, 2
      %v670 = vmax.f32 %v668, %v669
      %v671 = vrot.slane %v670, 1
      %v672 = vmax.f32 %v670, %v671
      %v673 = vrot.slane %v621, 4
      %v674 = vmax.f32 %v621, %v673
      %v675 = vrot.slane %v674, 2
      %v676 = vmax.f32 %v674, %v675
      %v677 = vrot.slane %v676, 1
      %v678 = vmax.f32 %v676, %v677
      %v679 = vrot.slane %v623, 4
      %v680 = vmax.f32 %v623, %v679
      %v681 = vrot.slane %v680, 2
      %v682 = vmax.f32 %v680, %v681
      %v683 = vrot.slane %v682, 1
      %v684 = vmax.f32 %v682, %v683
      %v685 = vrot.slane %v627, 4
      %v686 = vmax.f32 %v627, %v685
      %v687 = vrot.slane %v686, 2
      %v688 = vmax.f32 %v686, %v687
      %v689 = vrot.slane %v688, 1
      %v690 = vmax.f32 %v688, %v689
      %v691 = vrot.slane %v629, 4
      %v692 = vmax.f32 %v629, %v691
      %v693 = vrot.slane %v692, 2
      %v694 = vmax.f32 %v692, %v693
      %v695 = vrot.slane %v694, 1
      %v696 = vmax.f32 %v694, %v695
      %v697 = vrot.slane %v633, 4
      %v698 = vmax.f32 %v633, %v697
      %v699 = vrot.slane %v698, 2
      %v700 = vmax.f32 %v698, %v699
      %v701 = vrot.slane %v700, 1
      %v702 = vmax.f32 %v700, %v701
      %v703 = vrot.slane %v635, 4
      %v704 = vmax.f32 %v635, %v703
      %v705 = vrot.slane %v704, 2
      %v706 = vmax.f32 %v704, %v705
      %v707 = vrot.slane %v706, 1
      %v708 = vmax.f32 %v706, %v707
      %v709 = vrot.slane %v639, 4
      %v710 = vmax.f32 %v639, %v709
      %v711 = vrot.slane %v710, 2
      %v712 = vmax.f32 %v710, %v711
      %v713 = vrot.slane %v712, 1
      %v714 = vmax.f32 %v712, %v713
      %v715 = vrot.slane %v641, 4
      %v716 = vmax.f32 %v641, %v715
      %v717 = vrot.slane %v716, 2
      %v718 = vmax.f32 %v716, %v717
      %v719 = vrot.slane %v718, 1
      %v720 = vmax.f32 %v718, %v719
      %v721 = vrot.slane %v645, 4
      %v722 = vmax.f32 %v645, %v721
      %v723 = vrot.slane %v722, 2
      %v724 = vmax.f32 %v722, %v723
      %v725 = vrot.slane %v724, 1
      %v726 = vmax.f32 %v724, %v725
      %v727 = vrot.slane %v647, 4
      %v728 = vmax.f32 %v647, %v727
      %v729 = vrot.slane %v728, 2
      %v730 = vmax.f32 %v728, %v729
      %v731 = vrot.slane %v730, 1
      %v732 = vmax.f32 %v730, %v731
      %v733 = vrot.slane %v651, 4
      %v734 = vmax.f32 %v651, %v733
      %v735 = vrot.slane %v734, 2
      %v736 = vmax.f32 %v734, %v735
      %v737 = vrot.slane %v736, 1
      %v738 = vmax.f32 %v736, %v737
      %v739 = vrot.slane %v653, 4
      %v740 = vmax.f32 %v653, %v739
      %v741 = vrot.slane %v740, 2
      %v742 = vmax.f32 %v740, %v741
      %v743 = vrot.slane %v742, 1
      %v744 = vmax.f32 %v742, %v743
      %v745 = vrot.slane %v657, 4
      %v746 = vmax.f32 %v657, %v745
      %v747 = vrot.slane %v746, 2
      %v748 = vmax.f32 %v746, %v747
      %v749 = vrot.slane %v748, 1
      %v750 = vmax.f32 %v748, %v749
      %v751 = vrot.slane %v659, 4
      %v752 = vmax.f32 %v659, %v751
      %v753 = vrot.slane %v752, 2
      %v754 = vmax.f32 %v752, %v753
      %v755 = vrot.slane %v754, 1
      %v756 = vmax.f32 %v754, %v755
      %v757 = vsub.f32 %v615, %v666
      %v758 = vsub.f32 %v617, %v672
      %v759 = vsub.f32 %v621, %v678
      %v760 = vsub.f32 %v623, %v684
      %v761 = vsub.f32 %v627, %v690
      %v762 = vsub.f32 %v629, %v696
      %v763 = vsub.f32 %v633, %v702
      %v764 = vsub.f32 %v635, %v708
      %v765 = vsub.f32 %v639, %v714
      %v766 = vsub.f32 %v641, %v720
      %v767 = vsub.f32 %v645, %v726
      %v768 = vsub.f32 %v647, %v732
      %v769 = vsub.f32 %v651, %v738
      %v770 = vsub.f32 %v653, %v744
      %v771 = vsub.f32 %v657, %v750
      %v772 = vsub.f32 %v659, %v756
      %v773 = vmul.f32 %v757, 1.442695
      %v774 = vpow.pop %v773
      %v775 = vmul.f32 %v758, 1.442695
      %v776 = vpow.pop %v775
      %v777 = vmul.f32 %v759, 1.442695
      %v778 = vpow.pop %v777
      %v779 = vmul.f32 %v760, 1.442695
      %v780 = vpow.pop %v779
      %v781 = vmul.f32 %v761, 1.442695
      %v782 = vpow.pop %v781
      %v783 = vmul.f32 %v762, 1.442695
      %v784 = vpow.pop %v783
      %v785 = vmul.f32 %v763, 1.442695
      %v786 = vpow.pop %v785
      %v787 = vmul.f32 %v764, 1.442695
      %v788 = vpow.pop %v787
      %v789 = vmul.f32 %v765, 1.442695
      %v790 = vpow.pop %v789
      %v791 = vmul.f32 %v766, 1.442695
      %v792 = vpow.pop %v791
      %v793 = vmul.f32 %v767, 1.442695
      %v794 = vpow.pop %v793
      %v795 = vmul.f32 %v768, 1.442695
      %v796 = vpow.pop %v795
      %v797 = vmul.f32 %v769, 1.442695
      %v798 = vpow.pop %v797
      %v799 = vmul.f32 %v770, 1.442695
      %v800 = vpow.pop %v799
      %v801 = vmul.f32 %v771, 1.442695
      %v802 = vpow.pop %v801
      %v803 = vmul.f32 %v772, 1.442695
      %v804 = vpow.pop %v803
      %v805 = vrot.slane %v774, 4
      %v806 = vadd.f32 %v774, %v805
      %v807 = vrot.slane %v806, 2
      %v808 = vadd.f32 %v806, %v807
      %v809 = vrot.slane %v808, 1
      %v810 = vadd.f32 %v808, %v809
      %v811 = vrot.slane %v776, 4
      %v812 = vadd.f32 %v776, %v811
      %v813 = vrot.slane %v812, 2
      %v814 = vadd.f32 %v812, %v813
      %v815 = vrot.slane %v814, 1
      %v816 = vadd.f32 %v814, %v815
      %v817 = vrot.slane %v778, 4
      %v818 = vadd.f32 %v778, %v817
      %v819 = vrot.slane %v818, 2
      %v820 = vadd.f32 %v818, %v819
      %v821 = vrot.slane %v820, 1
      %v822 = vadd.f32 %v820, %v821
      %v823 = vrot.slane %v780, 4
      %v824 = vadd.f32 %v780, %v823
      %v825 = vrot.slane %v824, 2
      %v826 = vadd.f32 %v824, %v825
      %v827 = vrot.slane %v826, 1
      %v828 = vadd.f32 %v826, %v827
      %v829 = vrot.slane %v782, 4
      %v830 = vadd.f32 %v782, %v829
      %v831 = vrot.slane %v830, 2
      %v832 = vadd.f32 %v830, %v831
      %v833 = vrot.slane %v832, 1
      %v834 = vadd.f32 %v832, %v833
      %v835 = vrot.slane %v784, 4
      %v836 = vadd.f32 %v784, %v835
      %v837 = vrot.slane %v836, 2
      %v838 = vadd.f32 %v836, %v837
      %v839 = vrot.slane %v838, 1
      %v840 = vadd.f32 %v838, %v839
      %v841 = vrot.slane %v786, 4
      %v842 = vadd.f32 %v786, %v841
      %v843 = vrot.slane %v842, 2
      %v844 = vadd.f32 %v842, %v843
      %v845 = vrot.slane %v844, 1
      %v846 = vadd.f32 %v844, %v845
      %v847 = vrot.slane %v788, 4
      %v848 = vadd.f32 %v788, %v847
      %v849 = vrot.slane %v848, 2
      %v850 = vadd.f32 %v848, %v849
      %v851 = vrot.slane %v850, 1
      %v852 = vadd.f32 %v850, %v851
      %v853 = vrot.slane %v790, 4
      %v854 = vadd.f32 %v790, %v853
      %v855 = vrot.slane %v854, 2
      %v856 = vadd.f32 %v854, %v855
      %v857 = vrot.slane %v856, 1
      %v858 = vadd.f32 %v856, %v857
      %v859 = vrot.slane %v792, 4
      %v860 = vadd.f32 %v792, %v859
      %v861 = vrot.slane %v860, 2
      %v862 = vadd.f32 %v860, %v861
      %v863 = vrot.slane %v862, 1
      %v864 = vadd.f32 %v862, %v863
      %v865 = vrot.slane %v794, 4
      %v866 = vadd.f32 %v794, %v865
      %v867 = vrot.slane %v866, 2
      %v868 = vadd.f32 %v866, %v867
      %v869 = vrot.slane %v868, 1
      %v870 = vadd.f32 %v868, %v869
      %v871 = vrot.slane %v796, 4
      %v872 = vadd.f32 %v796, %v871
      %v873 = vrot.slane %v872, 2
      %v874 = vadd.f32 %v872, %v873
      %v875 = vrot.slane %v874, 1
      %v876 = vadd.f32 %v874, %v875
      %v877 = vrot.slane %v798, 4
      %v878 = vadd.f32 %v798, %v877
      %v879 = vrot.slane %v878, 2
      %v880 = vadd.f32 %v878, %v879
      %v881 = vrot.slane %v880, 1
      %v882 = vadd.f32 %v880, %v881
      %v883 = vrot.slane %v800, 4
      %v884 = vadd.f32 %v800, %v883
      %v885 = vrot.slane %v884, 2
      %v886 = vadd.f32 %v884, %v885
      %v887 = vrot.slane %v886, 1
      %v888 = vadd.f32 %v886, %v887
      %v889 = vrot.slane %v802, 4
      %v890 = vadd.f32 %v802, %v889
      %v891 = vrot.slane %v890, 2
      %v892 = vadd.f32 %v890, %v891
      %v893 = vrot.slane %v892, 1
      %v894 = vadd.f32 %v892, %v893
      %v895 = vrot.slane %v804, 4
      %v896 = vadd.f32 %v804, %v895
      %v897 = vrot.slane %v896, 2
      %v898 = vadd.f32 %v896, %v897
      %v899 = vrot.slane %v898, 1
      %v900 = vadd.f32 %v898, %v899
      %v901 = vrcp.pop %v810
      %v902 = vrcp.pop %v816
      %v903 = vrcp.pop %v822
      %v904 = vrcp.pop %v828
      %v905 = vrcp.pop %v834
      %v906 = vrcp.pop %v840
      %v907 = vrcp.pop %v846
      %v908 = vrcp.pop %v852
      %v909 = vrcp.pop %v858
      %v910 = vrcp.pop %v864
      %v911 = vrcp.pop %v870
      %v912 = vrcp.pop %v876
      %v913 = vrcp.pop %v882
      %v914 = vrcp.pop %v888
      %v915 = vrcp.pop %v894
      %v916 = vrcp.pop %v900
      %v917 = vmul.f32 %v774, %v901
      %v918 = vmul.f32 %v776, %v902
      %v919 = vmul.f32 %v778, %v903
      %v920 = vmul.f32 %v780, %v904
      %v921 = vmul.f32 %v782, %v905
      %v922 = vmul.f32 %v784, %v906
      %v923 = vmul.f32 %v786, %v907
      %v924 = vmul.f32 %v788, %v908
      %v925 = vmul.f32 %v790, %v909
      %v926 = vmul.f32 %v792, %v910
      %v927 = vmul.f32 %v794, %v911
      %v928 = vmul.f32 %v796, %v912
      %v929 = vmul.f32 %v798, %v913
      %v930 = vmul.f32 %v800, %v914
      %v931 = vmul.f32 %v802, %v915
      %v932 = vmul.f32 %v804, %v916
      %v933 = vmul.f32 %v476, %v917
      %v934 = vmul.f32 %v468, %v918
      %v935 = vmul.f32 %v477, %v919
      %v936 = vmul.f32 %v469, %v920
      %v937 = vmul.f32 %v478, %v921
      %v938 = vmul.f32 %v470, %v922
      %v939 = vmul.f32 %v479, %v923
      %v940 = vmul.f32 %v471, %v924
      %v941 = vmul.f32 %v480, %v925
      %v942 = vmul.f32 %v472, %v926
      %v943 = vmul.f32 %v481, %v927
      %v944 = vmul.f32 %v473, %v928
      %v945 = vmul.f32 %v482, %v929
      %v946 = vmul.f32 %v474, %v930
      %v947 = vmul.f32 %v483, %v931
      %v948 = vmul.f32 %v475, %v932
      %v949 = vrot.slane %v933, 4
      %v950 = vadd.f32 %v933, %v949
      %v951 = vrot.slane %v950, 2
      %v952 = vadd.f32 %v950, %v951
      %v953 = vrot.slane %v952, 1
      %v954 = vadd.f32 %v952, %v953
      %v955 = vrot.slane %v934, 4
      %v956 = vadd.f32 %v934, %v955
      %v957 = vrot.slane %v956, 2
      %v958 = vadd.f32 %v956, %v957
      %v959 = vrot.slane %v958, 1
      %v960 = vadd.f32 %v958, %v959
      %v961 = vrot.slane %v935, 4
      %v962 = vadd.f32 %v935, %v961
      %v963 = vrot.slane %v962, 2
      %v964 = vadd.f32 %v962, %v963
      %v965 = vrot.slane %v964, 1
      %v966 = vadd.f32 %v964, %v965
      %v967 = vrot.slane %v936, 4
      %v968 = vadd.f32 %v936, %v967
      %v969 = vrot.slane %v968, 2
      %v970 = vadd.f32 %v968, %v969
      %v971 = vrot.slane %v970, 1
      %v972 = vadd.f32 %v970, %v971
      %v973 = vrot.slane %v937, 4
      %v974 = vadd.f32 %v937, %v973
      %v975 = vrot.slane %v974, 2
      %v976 = vadd.f32 %v974, %v975
      %v977 = vrot.slane %v976, 1
      %v978 = vadd.f32 %v976, %v977
      %v979 = vrot.slane %v938, 4
      %v980 = vadd.f32 %v938, %v979
      %v981 = vrot.slane %v980, 2
      %v982 = vadd.f32 %v980, %v981
      %v983 = vrot.slane %v982, 1
      %v984 = vadd.f32 %v982, %v983
      %v985 = vrot.slane %v939, 4
      %v986 = vadd.f32 %v939, %v985
      %v987 = vrot.slane %v986, 2
      %v988 = vadd.f32 %v986, %v987
      %v989 = vrot.slane %v988, 1
      %v990 = vadd.f32 %v988, %v989
      %v991 = vrot.slane %v940, 4
      %v992 = vadd.f32 %v940, %v991
      %v993 = vrot.slane %v992, 2
      %v994 = vadd.f32 %v992, %v993
      %v995 = vrot.slane %v994, 1
      %v996 = vadd.f32 %v994, %v995
      %v997 = vrot.slane %v941, 4
      %v998 = vadd.f32 %v941, %v997
      %v999 = vrot.slane %v998, 2
      %v1000 = vadd.f32 %v998, %v999
      %v1001 = vrot.slane %v1000, 1
      %v1002 = vadd.f32 %v1000, %v1001
      %v1003 = vrot.slane %v942, 4
      %v1004 = vadd.f32 %v942, %v1003
      %v1005 = vrot.slane %v1004, 2
      %v1006 = vadd.f32 %v1004, %v1005
      %v1007 = vrot.slane %v1006, 1
      %v1008 = vadd.f32 %v1006, %v1007
      %v1009 = vrot.slane %v943, 4
      %v1010 = vadd.f32 %v943, %v1009
      %v1011 = vrot.slane %v1010, 2
      %v1012 = vadd.f32 %v1010, %v1011
      %v1013 = vrot.slane %v1012, 1
      %v1014 = vadd.f32 %v1012, %v1013
      %v1015 = vrot.slane %v944, 4
      %v1016 = vadd.f32 %v944, %v1015
      %v1017 = vrot.slane %v1016, 2
      %v1018 = vadd.f32 %v1016, %v1017
      %v1019 = vrot.slane %v1018, 1
      %v1020 = vadd.f32 %v1018, %v1019
      %v1021 = vrot.slane %v945, 4
      %v1022 = vadd.f32 %v945, %v1021
      %v1023 = vrot.slane %v1022, 2
      %v1024 = vadd.f32 %v1022, %v1023
      %v1025 = vrot.slane %v1024, 1
      %v1026 = vadd.f32 %v1024, %v1025
      %v1027 = vrot.slane %v946, 4
      %v1028 = vadd.f32 %v946, %v1027
      %v1029 = vrot.slane %v1028, 2
      %v1030 = vadd.f32 %v1028, %v1029
      %v1031 = vrot.slane %v1030, 1
      %v1032 = vadd.f32 %v1030, %v1031
      %v1033 = vrot.slane %v947, 4
      %v1034 = vadd.f32 %v947, %v1033
      %v1035 = vrot.slane %v1034, 2
      %v1036 = vadd.f32 %v1034, %v1035
      %v1037 = vrot.slane %v1036, 1
      %v1038 = vadd.f32 %v1036, %v1037
      %v1039 = vrot.slane %v948, 4
      %v1040 = vadd.f32 %v948, %v1039
      %v1041 = vrot.slane %v1040, 2
      %v1042 = vadd.f32 %v1040, %v1041
      %v1043 = vrot.slane %v1042, 1
      %v1044 = vadd.f32 %v1042, %v1043
      %v1045 = vld [vmem:[%s5] sm:$0xff]
      %v1046 = vld [vmem:[%s5 + $0x8] sm:$0xff]
      %v1047 = vld [vmem:[%s5 + $0x10] sm:$0xff]
      %v1048 = vld [vmem:[%s5 + $0x18] sm:$0xff]
      %v1049 = vld [vmem:[%s5 + $0x20] sm:$0xff]
      %v1050 = vld [vmem:[%s5 + $0x28] sm:$0xff]
      %v1051 = vld [vmem:[%s5 + $0x30] sm:$0xff]
      %v1052 = vld [vmem:[%s5 + $0x38] sm:$0xff]
      %v1053 = vld [vmem:[%s5 + $0x40] sm:$0xff]
      %v1054 = vld [vmem:[%s5 + $0x48] sm:$0xff]
      %v1055 = vld [vmem:[%s5 + $0x50] sm:$0xff]
      %v1056 = vld [vmem:[%s5 + $0x58] sm:$0xff]
      %v1057 = vld [vmem:[%s5 + $0x60] sm:$0xff]
      %v1058 = vld [vmem:[%s5 + $0x68] sm:$0xff]
      %v1059 = vld [vmem:[%s5 + $0x70] sm:$0xff]
      %v1060 = vld [vmem:[%s5 + $0x78] sm:$0xff]
      %v1061 = vld [vmem:[%s5 + $0x80] sm:$0xff]
      %v1062 = vld [vmem:[%s5 + $0x88] sm:$0xff]
      %v1063 = vld [vmem:[%s5 + $0x90] sm:$0xff]
      %v1064 = vld [vmem:[%s5 + $0x98] sm:$0xff]
      %v1065 = vld [vmem:[%s5 + $0xa0] sm:$0xff]
      %v1066 = vld [vmem:[%s5 + $0xa8] sm:$0xff]
      %v1067 = vld [vmem:[%s5 + $0xb0] sm:$0xff]
      %v1068 = vld [vmem:[%s5 + $0xb8] sm:$0xff]
      %v1069 = vld [vmem:[%s5 + $0xc0] sm:$0xff]
      %v1070 = vld [vmem:[%s5 + $0xc8] sm:$0xff]
      %v1071 = vld [vmem:[%s5 + $0xd0] sm:$0xff]
      %v1072 = vld [vmem:[%s5 + $0xd8] sm:$0xff]
      %v1073 = vld [vmem:[%s5 + $0xe0] sm:$0xff]
      %v1074 = vld [vmem:[%s5 + $0xe8] sm:$0xff]
      %v1075 = vld [vmem:[%s5 + $0xf0] sm:$0xff]
      %v1076 = vld [vmem:[%s5 + $0xf8] sm:$0xff]
      %v1077 = vld [vmem:[%s6] sm:$0x1]
      %v1079 = vlaneseq
      %v1080 = vshrl.u32 %v1079, 7
      %v1081 = vsub.s32 0, %v1080
      %v1082 = vrot.slane %v1077, %v1081
      %vm1100 = vcmask 1041409
      %v1101 = vsel %vm1100, %v966, %v954
      %vm1102 = vcmask 1042434
      %v1103 = vsel %vm1102, %v978, %v1101
      %vm1104 = vcmask 1043459
      %v1105 = vsel %vm1104, %v990, %v1103
      %vm1106 = vcmask 1044484
      %v1107 = vsel %vm1106, %v1002, %v1105
      %vm1108 = vcmask 1045509
      %v1109 = vsel %vm1108, %v1014, %v1107
      %vm1110 = vcmask 1046534
      %v1111 = vsel %vm1110, %v1026, %v1109
      %vm1112 = vcmask 1047559
      %v1113 = vsel %vm1112, %v1038, %v1111
      %v1114 = vsel %vm1100, %v972, %v960
      %v1115 = vsel %vm1102, %v984, %v1114
      %v1116 = vsel %vm1104, %v996, %v1115
      %v1117 = vsel %vm1106, %v1008, %v1116
      %v1118 = vsel %vm1108, %v1020, %v1117
      %v1119 = vsel %vm1110, %v1032, %v1118
      %v1120 = vsel %vm1112, %v1044, %v1119
      %1123 = vmatprep.subr.mxu0 0.0
      %1124 = vmatpush1.msra.mxu0 %v1045
      %1125 = vmatprep.subr.mxu0 0.0
      %1126 = vmatpush1.msra.mxu0 %v1046
      %1127 = vmatprep.subr.mxu0 0.0
      %1128 = vmatpush1.msra.mxu0 %v1047
      %1129 = vmatprep.subr.mxu0 0.0
      %1130 = vmatpush1.msra.mxu0 %v1048
      %1131 = vmatprep.subr.mxu0 0.0
      %1132 = vmatpush1.msra.mxu0 %v1049
      %1133 = vmatprep.subr.mxu0 0.0
      %1134 = vmatpush1.msra.mxu0 %v1050
      %1135 = vmatprep.subr.mxu0 0.0
      %1136 = vmatpush1.msra.mxu0 %v1051
      %1137 = vmatprep.subr.mxu0 0.0
      %1138 = vmatpush1.msra.mxu0 %v1052
      %1139 = vmatprep.subr.mxu0 0.0
      %1140 = vmatpush1.msra.mxu0 %v1053
      %1141 = vmatprep.subr.mxu0 0.0
      %1142 = vmatpush1.msra.mxu0 %v1054
      %1143 = vmatprep.subr.mxu0 0.0
      %1144 = vmatpush1.msra.mxu0 %v1055
      %1145 = vmatprep.subr.mxu0 0.0
      %1146 = vmatpush1.msra.mxu0 %v1056
      %1147 = vmatprep.subr.mxu0 0.0
      %1148 = vmatpush1.msra.mxu0 %v1057
      %1149 = vmatprep.subr.mxu0 0.0
      %1150 = vmatpush1.msra.mxu0 %v1058
      %1151 = vmatprep.subr.mxu0 0.0
      %1152 = vmatpush1.msra.mxu0 %v1059
      %1153 = vmatprep.subr.mxu0 0.0
      %1154 = vmatpush1.msra.mxu0 %v1060
      %1155 = vmatprep.subr.mxu0 0.0
      %1156 = vmatpush1.msra.mxu0 %v1061
      %1157 = vmatprep.subr.mxu0 0.0
      %1158 = vmatpush1.msra.mxu0 %v1062
      %1159 = vmatprep.subr.mxu0 0.0
      %1160 = vmatpush1.msra.mxu0 %v1063
      %1161 = vmatprep.subr.mxu0 0.0
      %1162 = vmatpush1.msra.mxu0 %v1064
      %1163 = vmatprep.subr.mxu0 0.0
      %1164 = vmatpush1.msra.mxu0 %v1065
      %1165 = vmatprep.subr.mxu0 0.0
      %1166 = vmatpush1.msra.mxu0 %v1066
      %1167 = vmatprep.subr.mxu0 0.0
      %1168 = vmatpush1.msra.mxu0 %v1067
      %1169 = vmatprep.subr.mxu0 0.0
      %1170 = vmatpush1.msra.mxu0 %v1068
      %1171 = vmatprep.subr.mxu0 0.0
      %1172 = vmatpush1.msra.mxu0 %v1069
      %1173 = vmatprep.subr.mxu0 0.0
      %1174 = vmatpush1.msra.mxu0 %v1070
      %1175 = vmatprep.subr.mxu0 0.0
      %1176 = vmatpush1.msra.mxu0 %v1071
      %1177 = vmatprep.subr.mxu0 0.0
      %1178 = vmatpush1.msra.mxu0 %v1072
      %1179 = vmatprep.subr.mxu0 0.0
      %1180 = vmatpush1.msra.mxu0 %v1073
      %1181 = vmatprep.subr.mxu0 0.0
      %1182 = vmatpush1.msra.mxu0 %v1074
      %1183 = vmatprep.subr.mxu0 0.0
      %1184 = vmatpush1.msra.mxu0 %v1075
      %1185 = vmatprep.subr.mxu0 0.0
      %1186 = vmatpush1.msra.mxu0 %v1076
      %1187 = vmatprep.mubr.f32.mxu0 %v1120
      %1188 = vmatmul.mubr.f32.gmra.mrb[0].mxu0 %v1113
      %v1189 = vpop.f32.mrb[0].mxu0
      %v1190 = vadd.f32 %v1082, %v1189
      %v1191 = vpop.f32.mrb[0].mxu0
      %1192 = vdwg.mxu0
      %vm1193 = vcmp.gt.f32.partialorder %v1190, 0.0
      %v1194 = vmul.f32 %v1190, 0.2
      %v1195 = vsel %vm1193, %v1190, %v1194
      %1196 = vst [vmem:[%s300] sm:$0xff] %v1195
      %p1197 = scmp.lt.s32.totalorder %s18, 3
      %s1198 = scalar_select %p1197, %s18, 3
      %s1199 = smul.addr %s1198, 8
      %s1200 = scalar_lea.vmem %s7, %s1199
      // Predicated region
      $region49: #{dilated_res_block_pallas.5} parent=47 // pred_check
        %p1201 = pneg %p193
      $region50: #{dilated_res_block_pallas.5} parent=47 // pred_check_branch
        %1203 = sbr.rel (%p1201) target = $region52
      $region51: #{dilated_res_block_pallas.5} parent=47 // pred_region
        _
      $region52: #{dilated_res_block_pallas.5} parent=47 // pred_fallthru
        _
    $region48: #{dilated_res_block_pallas.5} parent=5 // pred_fallthru
      _
    %p1204 = scmp.le.s32.totalorder 2, %s13
    // Predicated region
    $region53: #{dilated_res_block_pallas.5} parent=5 // pred_check
      %p1205 = pneg %p1204
    $region54: #{dilated_res_block_pallas.5} parent=5 // pred_check_branch
      %1207 = sbr.rel (%p1205) target = $region56
    $region55: #{dilated_res_block_pallas.5} parent=5 // pred_region
      %s1208 = ssub.s32 %s13, 2
      // Predicated region
      $region57: #{dilated_res_block_pallas.5} parent=55 // pred_check
        %p1209 = pneg %p199
      $region58: #{dilated_res_block_pallas.5} parent=55 // pred_check_branch
        %1211 = sbr.rel (%p1209) target = $region60
      $region59: #{dilated_res_block_pallas.5} parent=55 // pred_region
        %p1212 = scmp.lt.s32.totalorder %s19, 3
        %s1213 = scalar_select %p1212, %s19, 3
        %s1214 = smul.addr %s1213, 8
        %s1215 = scalar_lea.vmem %s7, %s1214
      $region60: #{dilated_res_block_pallas.5} parent=55 // pred_fallthru
        _
    $region56: #{dilated_res_block_pallas.5} parent=5 // pred_fallthru
      _
  $region6: #{dilated_res_block_pallas.5} parent=0 // loop_footer
    %s17 = sadd.s32 1, %s13
  $region7: #{dilated_res_block_pallas.5} parent=0 // loop_footer_branch
    %12 = sbr.rel target = $region3
  $region8: #{dilated_res_block_pallas.5} parent=0 // loop_exit
    _

// kernel: dilated_res_block_pallas.6
$region0: #{dilated_res_block_pallas.6}
  #allocation0 [shape = 'u32[]', space=smem, size = 0x4, offset = 0x4, fixed_abs, tag = 'smem constant byte address 0x4 - core index']
  #allocation1 [shape = 'u32[144,128]{1,0:T(1,128)}', space=vmem, size = 0x12000, scoped, tag = 'internal scratch']
  %s0 = inlined_call_operand.vmem [shape: f32[32,8,10], index: 0, kind: input, shape index: {}]
  %s1 = inlined_call_operand.vmem [shape: f32[32,8,128], index: 1, kind: input, shape index: {}]
  %s2 = inlined_call_operand.vmem [shape: f32[10,128], index: 2, kind: input, shape index: {}]
  %s3 = inlined_call_operand.vmem [shape: f32[1,128], index: 3, kind: input, shape index: {}]
  %s4 = inlined_call_operand.vmem [shape: f32[128,128], index: 4, kind: input, shape index: {}]
  %s5 = inlined_call_operand.vmem [shape: f32[1,128], index: 5, kind: input, shape index: {}]
  %s6 = inlined_call_operand.vmem [shape: f32[256,256], index: 6, kind: input, shape index: {}]
  %s7 = inlined_call_operand.vmem [shape: f32[256,128], index: 7, kind: input, shape index: {}]
  %s8 = inlined_call_operand.vmem [shape: f32[1,128], index: 8, kind: input, shape index: {}]
  %s9 = inlined_call_operand.vmem [shape: f32[32,128], index: 9, kind: output, shape index: {}]
  %s10 = sld [smem:[#allocation0]]
  $region69: #{dilated_res_block_pallas.6} parent=0
    _
  %s12 = ssub.s32 1, %s10
  %s13 = scalar_select 0, %s12, %s10
  loop: start=0, step=1, limit=6
  $region2: #{dilated_res_block_pallas.6} parent=0 // loop_pre_header
    _
  $region3: #{dilated_res_block_pallas.6} parent=0 // loop_header
    %s15 = sphi 0, %s19
    %p16 = scmp.ge.s32.totalorder %s15, 6
    %s25 = sphi 0, %s27
    %s28 = sphi 0, %s25
    %s29 = sphi 0, %s28
    %s45 = sphi 0, %s29
    %s51 = sphi 0, %s53
    %s54 = sphi 0, %s51
    %s55 = sphi 0, %s54
    %s71 = sphi 0, %s55
    %s75 = sphi 0, %s75
    %s77 = sphi 0, %s75
    %s78 = sphi 0, %s77
    %s92 = sphi 0, %s78
    %s96 = sphi 0, %s96
    %s98 = sphi 0, %s96
    %s99 = sphi 0, %s98
    %s113 = sphi 0, %s99
    %s117 = sphi 0, %s117
    %s119 = sphi 0, %s117
    %s120 = sphi 0, %s119
    %s134 = sphi 0, %s120
    %s138 = sphi 0, %s138
    %s140 = sphi 0, %s138
    %s141 = sphi 0, %s140
    %s155 = sphi 0, %s141
    %s159 = sphi 0, %s159
    %s161 = sphi 0, %s159
    %s162 = sphi 0, %s161
    %s176 = sphi 0, %s162
    %s180 = sphi 0, %s180
    %s182 = sphi 0, %s180
    %s183 = sphi 0, %s182
    %s197 = sphi 0, %s183
    %s201 = sphi 0, %s201
    %s203 = sphi 0, %s201
    %s204 = sphi 0, %s203
    %s218 = sphi 0, %s204
    %s224 = sphi 0, %s226
    %s227 = sphi 0, %s224
    %s228 = sphi 0, %s227
    %s244 = sphi 0, %s228
  $region4: #{dilated_res_block_pallas.6} parent=0 // loop_header_branch
    %18 = sbr.rel (%p16) target = $region8
  $region5: #{dilated_res_block_pallas.6} parent=0 // loop_body
    %s20 = ssub.s32 %s15, 1
    %s21 = ssub.s32 %s15, 2
    %s22 = sadd.s32 %s15, 1
    %s23 = ssub.s32 %s15, %s22
    %p24 = scmp.eq.s32.totalorder %s23, 0
    %s26 = sadd.s32 %s25, 1
    %s27 = scalar_select %p24, %s25, %s26
    %p30 = pneg %p24
    %p31 = scmp.eq.s32.totalorder %s15, 3
    %p32 = por %p30, %p31
    %p33 = scmp.ne.s32.totalorder %s25, %s28
    %p34 = scmp.eq.s32.totalorder %s15, 0
    %p35 = por %p33, %p34
    %p36 = scmp.ne.s32.totalorder %s25, %s28
    %p37 = scmp.eq.s32.totalorder %s20, 3
    %p38 = por %p36, %p37
    %p39 = scmp.ne.s32.totalorder %s28, %s29
    %p40 = scmp.eq.s32.totalorder %s20, 0
    %p41 = por %p39, %p40
    %p42 = scmp.ne.s32.totalorder %s28, %s29
    %p43 = scmp.eq.s32.totalorder %s21, 3
    %p44 = por %p42, %p43
    %p46 = scmp.ne.s32.totalorder %s29, %s45
    %p47 = scmp.eq.s32.totalorder %s21, 0
    %p48 = por %p46, %p47
    %s49 = ssub.s32 %s15, %s22
    %p50 = scmp.eq.s32.totalorder %s49, 0
    %s52 = sadd.s32 %s51, 1
    %s53 = scalar_select %p50, %s51, %s52
    %p56 = pneg %p50
    %p57 = scmp.eq.s32.totalorder %s15, 3
    %p58 = por %p56, %p57
    %p59 = scmp.ne.s32.totalorder %s51, %s54
    %p60 = scmp.eq.s32.totalorder %s15, 0
    %p61 = por %p59, %p60
    %p62 = scmp.ne.s32.totalorder %s51, %s54
    %p63 = scmp.eq.s32.totalorder %s20, 3
    %p64 = por %p62, %p63
    %p65 = scmp.ne.s32.totalorder %s54, %s55
    %p66 = scmp.eq.s32.totalorder %s20, 0
    %p67 = por %p65, %p66
    %p68 = scmp.ne.s32.totalorder %s54, %s55
    %p69 = scmp.eq.s32.totalorder %s21, 3
    %p70 = por %p68, %p69
    %p72 = scmp.ne.s32.totalorder %s55, %s71
    %p73 = scmp.eq.s32.totalorder %s21, 0
    %p74 = por %p72, %p73
    %s76 = sadd.s32 %s75, 1
    %p79 = scmp.eq.s32.totalorder %s15, 3
    %p80 = scmp.ne.s32.totalorder %s75, %s77
    %p81 = scmp.eq.s32.totalorder %s15, 0
    %p82 = por %p80, %p81
    %p83 = scmp.ne.s32.totalorder %s75, %s77
    %p84 = scmp.eq.s32.totalorder %s20, 3
    %p85 = por %p83, %p84
    %p86 = scmp.ne.s32.totalorder %s77, %s78
    %p87 = scmp.eq.s32.totalorder %s20, 0
    %p88 = por %p86, %p87
    %p89 = scmp.ne.s32.totalorder %s77, %s78
    %p90 = scmp.eq.s32.totalorder %s21, 3
    %p91 = por %p89, %p90
    %p93 = scmp.ne.s32.totalorder %s78, %s92
    %p94 = scmp.eq.s32.totalorder %s21, 0
    %p95 = por %p93, %p94
    %s97 = sadd.s32 %s96, 1
    %p100 = scmp.eq.s32.totalorder %s15, 3
    %p101 = scmp.ne.s32.totalorder %s96, %s98
    %p102 = scmp.eq.s32.totalorder %s15, 0
    %p103 = por %p101, %p102
    %p104 = scmp.ne.s32.totalorder %s96, %s98
    %p105 = scmp.eq.s32.totalorder %s20, 3
    %p106 = por %p104, %p105
    %p107 = scmp.ne.s32.totalorder %s98, %s99
    %p108 = scmp.eq.s32.totalorder %s20, 0
    %p109 = por %p107, %p108
    %p110 = scmp.ne.s32.totalorder %s98, %s99
    %p111 = scmp.eq.s32.totalorder %s21, 3
    %p112 = por %p110, %p111
    %p114 = scmp.ne.s32.totalorder %s99, %s113
    %p115 = scmp.eq.s32.totalorder %s21, 0
    %p116 = por %p114, %p115
    %s118 = sadd.s32 %s117, 1
    %p121 = scmp.eq.s32.totalorder %s15, 3
    %p122 = scmp.ne.s32.totalorder %s117, %s119
    %p123 = scmp.eq.s32.totalorder %s15, 0
    %p124 = por %p122, %p123
    %p125 = scmp.ne.s32.totalorder %s117, %s119
    %p126 = scmp.eq.s32.totalorder %s20, 3
    %p127 = por %p125, %p126
    %p128 = scmp.ne.s32.totalorder %s119, %s120
    %p129 = scmp.eq.s32.totalorder %s20, 0
    %p130 = por %p128, %p129
    %p131 = scmp.ne.s32.totalorder %s119, %s120
    %p132 = scmp.eq.s32.totalorder %s21, 3
    %p133 = por %p131, %p132
    %p135 = scmp.ne.s32.totalorder %s120, %s134
    %p136 = scmp.eq.s32.totalorder %s21, 0
    %p137 = por %p135, %p136
    %s139 = sadd.s32 %s138, 1
    %p142 = scmp.eq.s32.totalorder %s15, 3
    %p143 = scmp.ne.s32.totalorder %s138, %s140
    %p144 = scmp.eq.s32.totalorder %s15, 0
    %p145 = por %p143, %p144
    %p146 = scmp.ne.s32.totalorder %s138, %s140
    %p147 = scmp.eq.s32.totalorder %s20, 3
    %p148 = por %p146, %p147
    %p149 = scmp.ne.s32.totalorder %s140, %s141
    %p150 = scmp.eq.s32.totalorder %s20, 0
    %p151 = por %p149, %p150
    %p152 = scmp.ne.s32.totalorder %s140, %s141
    %p153 = scmp.eq.s32.totalorder %s21, 3
    %p154 = por %p152, %p153
    %p156 = scmp.ne.s32.totalorder %s141, %s155
    %p157 = scmp.eq.s32.totalorder %s21, 0
    %p158 = por %p156, %p157
    %s160 = sadd.s32 %s159, 1
    %p163 = scmp.eq.s32.totalorder %s15, 3
    %p164 = scmp.ne.s32.totalorder %s159, %s161
    %p165 = scmp.eq.s32.totalorder %s15, 0
    %p166 = por %p164, %p165
    %p167 = scmp.ne.s32.totalorder %s159, %s161
    %p168 = scmp.eq.s32.totalorder %s20, 3
    %p169 = por %p167, %p168
    %p170 = scmp.ne.s32.totalorder %s161, %s162
    %p171 = scmp.eq.s32.totalorder %s20, 0
    %p172 = por %p170, %p171
    %p173 = scmp.ne.s32.totalorder %s161, %s162
    %p174 = scmp.eq.s32.totalorder %s21, 3
    %p175 = por %p173, %p174
    %p177 = scmp.ne.s32.totalorder %s162, %s176
    %p178 = scmp.eq.s32.totalorder %s21, 0
    %p179 = por %p177, %p178
    %s181 = sadd.s32 %s180, 1
    %p184 = scmp.eq.s32.totalorder %s15, 3
    %p185 = scmp.ne.s32.totalorder %s180, %s182
    %p186 = scmp.eq.s32.totalorder %s15, 0
    %p187 = por %p185, %p186
    %p188 = scmp.ne.s32.totalorder %s180, %s182
    %p189 = scmp.eq.s32.totalorder %s20, 3
    %p190 = por %p188, %p189
    %p191 = scmp.ne.s32.totalorder %s182, %s183
    %p192 = scmp.eq.s32.totalorder %s20, 0
    %p193 = por %p191, %p192
    %p194 = scmp.ne.s32.totalorder %s182, %s183
    %p195 = scmp.eq.s32.totalorder %s21, 3
    %p196 = por %p194, %p195
    %p198 = scmp.ne.s32.totalorder %s183, %s197
    %p199 = scmp.eq.s32.totalorder %s21, 0
    %p200 = por %p198, %p199
    %s202 = sadd.s32 %s201, 1
    %p205 = scmp.eq.s32.totalorder %s15, 3
    %p206 = scmp.ne.s32.totalorder %s201, %s203
    %p207 = scmp.eq.s32.totalorder %s15, 0
    %p208 = por %p206, %p207
    %p209 = scmp.ne.s32.totalorder %s201, %s203
    %p210 = scmp.eq.s32.totalorder %s20, 3
    %p211 = por %p209, %p210
    %p212 = scmp.ne.s32.totalorder %s203, %s204
    %p213 = scmp.eq.s32.totalorder %s20, 0
    %p214 = por %p212, %p213
    %p215 = scmp.ne.s32.totalorder %s203, %s204
    %p216 = scmp.eq.s32.totalorder %s21, 3
    %p217 = por %p215, %p216
    %p219 = scmp.ne.s32.totalorder %s204, %s218
    %p220 = scmp.eq.s32.totalorder %s21, 0
    %p221 = por %p219, %p220
    %s222 = ssub.s32 %s15, %s22
    %p223 = scmp.eq.s32.totalorder %s222, 0
    %s225 = sadd.s32 %s224, 1
    %s226 = scalar_select %p223, %s224, %s225
    %p229 = pneg %p223
    %p230 = scmp.eq.s32.totalorder %s15, 3
    %p231 = por %p229, %p230
    %p232 = scmp.ne.s32.totalorder %s224, %s227
    %p233 = scmp.eq.s32.totalorder %s15, 0
    %p234 = por %p232, %p233
    %p235 = scmp.ne.s32.totalorder %s224, %s227
    %p236 = scmp.eq.s32.totalorder %s20, 3
    %p237 = por %p235, %p236
    %p238 = scmp.ne.s32.totalorder %s227, %s228
    %p239 = scmp.eq.s32.totalorder %s20, 0
    %p240 = por %p238, %p239
    %p241 = scmp.ne.s32.totalorder %s227, %s228
    %p242 = scmp.eq.s32.totalorder %s21, 3
    %p243 = por %p241, %p242
    %p245 = scmp.ne.s32.totalorder %s228, %s244
    %p246 = scmp.eq.s32.totalorder %s21, 0
    %p247 = por %p245, %p246
    %p248 = scmp.le.s32.totalorder 1, %s15
    %p249 = scmp.lt.s32.totalorder %s15, 5
    %p250 = pnand %p248, %p249
    %p251 = pneg %p250
    // Predicated region
    $region9: #{dilated_res_block_pallas.6} parent=5 // pred_check
      _
    $region10: #{dilated_res_block_pallas.6} parent=5 // pred_check_branch
      %253 = sbr.rel (%p250) target = $region12
    $region11: #{dilated_res_block_pallas.6} parent=5 // pred_region
      %s254 = ssub.s32 %s15, 1
      // Predicated region
      $region13: #{dilated_res_block_pallas.6} parent=11 // pred_check
        %p255 = pneg %p88
      $region14: #{dilated_res_block_pallas.6} parent=11 // pred_check_branch
        %257 = sbr.rel (%p255) target = $region16
      $region15: #{dilated_res_block_pallas.6} parent=11 // pred_region
        _
      $region16: #{dilated_res_block_pallas.6} parent=11 // pred_fallthru
        _
      // Predicated region
      $region17: #{dilated_res_block_pallas.6} parent=11 // pred_check
        %p258 = pneg %p109
      $region18: #{dilated_res_block_pallas.6} parent=11 // pred_check_branch
        %260 = sbr.rel (%p258) target = $region20
      $region19: #{dilated_res_block_pallas.6} parent=11 // pred_region
        _
      $region20: #{dilated_res_block_pallas.6} parent=11 // pred_fallthru
        _
      // Predicated region
      $region21: #{dilated_res_block_pallas.6} parent=11 // pred_check
        %p261 = pneg %p130
      $region22: #{dilated_res_block_pallas.6} parent=11 // pred_check_branch
        %263 = sbr.rel (%p261) target = $region24
      $region23: #{dilated_res_block_pallas.6} parent=11 // pred_region
        _
      $region24: #{dilated_res_block_pallas.6} parent=11 // pred_fallthru
        _
      // Predicated region
      $region25: #{dilated_res_block_pallas.6} parent=11 // pred_check
        %p264 = pneg %p151
      $region26: #{dilated_res_block_pallas.6} parent=11 // pred_check_branch
        %266 = sbr.rel (%p264) target = $region28
      $region27: #{dilated_res_block_pallas.6} parent=11 // pred_region
        _
      $region28: #{dilated_res_block_pallas.6} parent=11 // pred_fallthru
        _
      // Predicated region
      $region29: #{dilated_res_block_pallas.6} parent=11 // pred_check
        %p267 = pneg %p172
      $region30: #{dilated_res_block_pallas.6} parent=11 // pred_check_branch
        %269 = sbr.rel (%p267) target = $region32
      $region31: #{dilated_res_block_pallas.6} parent=11 // pred_region
        _
      $region32: #{dilated_res_block_pallas.6} parent=11 // pred_fallthru
        _
      // Predicated region
      $region33: #{dilated_res_block_pallas.6} parent=11 // pred_check
        %p270 = pneg %p193
      $region34: #{dilated_res_block_pallas.6} parent=11 // pred_check_branch
        %272 = sbr.rel (%p270) target = $region36
      $region35: #{dilated_res_block_pallas.6} parent=11 // pred_region
        _
      $region36: #{dilated_res_block_pallas.6} parent=11 // pred_fallthru
        _
      // Predicated region
      $region37: #{dilated_res_block_pallas.6} parent=11 // pred_check
        %p273 = pneg %p214
      $region38: #{dilated_res_block_pallas.6} parent=11 // pred_check_branch
        %275 = sbr.rel (%p273) target = $region40
      $region39: #{dilated_res_block_pallas.6} parent=11 // pred_region
        _
      $region40: #{dilated_res_block_pallas.6} parent=11 // pred_fallthru
        _
    $region12: #{dilated_res_block_pallas.6} parent=5 // pred_fallthru
      _
    %p276 = scmp.lt.s32.totalorder %s15, 4
    // Predicated region
    $region41: #{dilated_res_block_pallas.6} parent=5 // pred_check
      %p277 = pneg %p276
    $region42: #{dilated_res_block_pallas.6} parent=5 // pred_check_branch
      %279 = sbr.rel (%p277) target = $region44
    $region43: #{dilated_res_block_pallas.6} parent=5 // pred_region
      // Predicated region
      $region45: #{dilated_res_block_pallas.6} parent=43 // pred_check
        %p280 = pneg %p35
      $region46: #{dilated_res_block_pallas.6} parent=43 // pred_check_branch
        %282 = sbr.rel (%p280) target = $region48
      $region47: #{dilated_res_block_pallas.6} parent=43 // pred_region
        %s283 = smul.u32 8, %s15
        %p284 = scmp.lt.s32.totalorder %s283, 31
        %s285 = scalar_select %p284, %s283, 31
        %s286 = smul.addr %s285, 8
        %s287 = scalar_lea.vmem %s0, %s286
        %s288 = smul.u32 8, %s15
      $region48: #{dilated_res_block_pallas.6} parent=43 // pred_fallthru
        _
      // Predicated region
      $region49: #{dilated_res_block_pallas.6} parent=43 // pred_check
        %p289 = pneg %p61
      $region50: #{dilated_res_block_pallas.6} parent=43 // pred_check_branch
        %291 = sbr.rel (%p289) target = $region52
      $region51: #{dilated_res_block_pallas.6} parent=43 // pred_region
        %s292 = smul.u32 8, %s15
        %p293 = scmp.lt.s32.totalorder %s292, 31
        %s294 = scalar_select %p293, %s292, 31
        %s295 = smul.addr %s294, 8
        %s296 = scalar_lea.vmem %s1, %s295
        %s297 = smul.u32 8, %s15
      $region52: #{dilated_res_block_pallas.6} parent=43 // pred_fallthru
        _
    $region44: #{dilated_res_block_pallas.6} parent=5 // pred_fallthru
      _
    %p298 = scmp.le.s32.totalorder 1, %s15
    %p299 = scmp.lt.s32.totalorder %s15, 5
    %p300 = pnand %p298, %p299
    %p301 = pneg %p300
    // Predicated region
    $region53: #{dilated_res_block_pallas.6} parent=5 // pred_check
      _
    $region54: #{dilated_res_block_pallas.6} parent=5 // pred_check_branch
      %303 = sbr.rel (%p300) target = $region56
    $region55: #{dilated_res_block_pallas.6} parent=5 // pred_region
      %s304 = ssub.s32 %s15, 1
      %s305 = smul.u32 8, %s20
      %p306 = scmp.lt.s32.totalorder %s305, 31
      %s307 = scalar_select %p306, %s305, 31
      %s308 = smul.addr %s307, 8
      %s309 = scalar_lea.vmem %s0, %s308
      %p310 = pneg %p41
      %p311 = pneg %p38
      %s312 = smul.u32 8, %s20
      %p313 = scmp.lt.s32.totalorder %s312, 31
      %s314 = scalar_select %p313, %s312, 31
      %s315 = smul.addr %s314, 8
      %s316 = scalar_lea.vmem %s1, %s315
      %p317 = pneg %p67
      %p318 = pneg %p64
      %p319 = pneg %p88
      %p320 = pneg %p85
      %p321 = pneg %p109
      %p322 = pneg %p106
      %p323 = pneg %p130
      %p324 = pneg %p127
      %p325 = pneg %p151
      %p326 = pneg %p148
      %p327 = pneg %p172
      %p328 = pneg %p169
      %p329 = pneg %p193
      %p330 = pneg %p190
      %p331 = pneg %p214
      %p332 = pneg %p211
      %p333 = pneg %p240
      %p334 = pneg %p237
      %p335 = scmp.lt.s32.totalorder %s20, 3
      %s336 = scalar_select %p335, %s20, 3
      %s337 = smul.addr %s336, 8
      %s338 = scalar_lea.vmem %s9, %s337
      %s339 = smul.u32 8, %s20
      %p340 = scmp.lt.s32.totalorder %s339, 31
      %s341 = scalar_select %p340, %s339, 31
      %s342 = smul.addr %s341, 8
      %s343 = scalar_lea.vmem %s0, %s342
      %s344 = smul.u32 8, %s20
      %s345 = smul.u32 8, %s20
      %p346 = scmp.lt.s32.totalorder %s345, 31
      %s347 = scalar_select %p346, %s345, 31
      %s348 = smul.addr %s347, 8
      %s349 = scalar_lea.vmem %s1, %s348
      %s350 = smul.u32 8, %s20
      %p351 = scmp.lt.s32.totalorder %s20, 3
      %s352 = scalar_select %p351, %s20, 3
      %s353 = smul.addr %s352, 8
      %s354 = scalar_lea.vmem %s9, %s353
      %v355 = vld [vmem:[%s343] sm:$0xff]
      %v356 = vld [vmem:[%s343 + $0x8] sm:$0xff]
      %v357 = vld [vmem:[%s343 + $0x10] sm:$0xff]
      %v358 = vld [vmem:[%s343 + $0x18] sm:$0xff]
      %v359 = vld [vmem:[%s343 + $0x20] sm:$0xff]
      %v360 = vld [vmem:[%s343 + $0x28] sm:$0xff]
      %v361 = vld [vmem:[%s343 + $0x30] sm:$0xff]
      %v362 = vld [vmem:[%s343 + $0x38] sm:$0xff]
      %v363 = vld [vmem:[%s2] sm:$0xff]
      %v364 = vld [vmem:[%s2 + $0x8] sm:$0x3]
      %v365 = vld [vmem:[%s3] sm:$0x1]
      %v367 = vlaneseq
      %v368 = vshrl.u32 %v367, 7
      %v369 = vsub.s32 0, %v368
      %v370 = vrot.slane %v365, %v369
      %vm372 = vcmask 80896
      %v374 = vsel %vm372, %v355, 0
      %v377 = vsel %vm372, %v356, 0
      %v380 = vsel %vm372, %v357, 0
      %v383 = vsel %vm372, %v358, 0
      %v386 = vsel %vm372, %v359, 0
      %v389 = vsel %vm372, %v360, 0
      %v392 = vsel %vm372, %v361, 0
      %v395 = vsel %vm372, %v362, 0
      %vm397 = vcmask 1041408
      %v399 = vsel %vm397, %v364, 0
      %401 = vmatprep.subr.mxu0 0.0
      %402 = vmatpush1.msra.mxu0 %v363
      %403 = vmatprep.subr.mxu0 0.0
      %404 = vmatpush1.msra.mxu0 %v399
      %405 = vmatprep.subr.mxu0 0.0
      %406 = vmatpush1.msra.mxu0 0.0
      %407 = vmatprep.subr.mxu0 0.0
      %408 = vmatpush1.msra.mxu0 0.0
      %409 = vmatprep.subr.mxu0 0.0
      %410 = vmatpush1.msra.mxu0 0.0
      %411 = vmatprep.subr.mxu0 0.0
      %412 = vmatpush1.msra.mxu0 0.0
      %413 = vmatprep.subr.mxu0 0.0
      %414 = vmatpush1.msra.mxu0 0.0
      %415 = vmatprep.subr.mxu0 0.0
      %416 = vmatpush1.msra.mxu0 0.0
      %417 = vmatprep.subr.mxu0 0.0
      %418 = vmatpush1.msra.mxu0 0.0
      %419 = vmatprep.subr.mxu0 0.0
      %420 = vmatpush1.msra.mxu0 0.0
      %421 = vmatprep.subr.mxu0 0.0
      %422 = vmatpush1.msra.mxu0 0.0
      %423 = vmatprep.subr.mxu0 0.0
      %424 = vmatpush1.msra.mxu0 0.0
      %425 = vmatprep.subr.mxu0 0.0
      %426 = vmatpush1.msra.mxu0 0.0
      %427 = vmatprep.subr.mxu0 0.0
      %428 = vmatpush1.msra.mxu0 0.0
      %429 = vmatprep.subr.mxu0 0.0
      %430 = vmatpush1.msra.mxu0 0.0
      %431 = vmatprep.subr.mxu0 0.0
      %432 = vmatpush1.msra.mxu0 0.0
      %433 = vmatprep.subr.mxu0 0.0
      %434 = vmatpush1.msra.mxu0 0.0
      %435 = vmatprep.subr.mxu0 0.0
      %436 = vmatpush1.msra.mxu0 0.0
      %437 = vmatprep.subr.mxu0 0.0
      %438 = vmatpush1.msra.mxu0 0.0
      %439 = vmatprep.subr.mxu0 0.0
      %440 = vmatpush1.msra.mxu0 0.0
      %441 = vmatprep.subr.mxu0 0.0
      %442 = vmatpush1.msra.mxu0 0.0
      %443 = vmatprep.subr.mxu0 0.0
      %444 = vmatpush1.msra.mxu0 0.0
      %445 = vmatprep.subr.mxu0 0.0
      %446 = vmatpush1.msra.mxu0 0.0
      %447 = vmatprep.subr.mxu0 0.0
      %448 = vmatpush1.msra.mxu0 0.0
      %449 = vmatprep.subr.mxu0 0.0
      %450 = vmatpush1.msra.mxu0 0.0
      %451 = vmatprep.subr.mxu0 0.0
      %452 = vmatpush1.msra.mxu0 0.0
      %453 = vmatprep.subr.mxu0 0.0
      %454 = vmatpush1.msra.mxu0 0.0
      %455 = vmatprep.subr.mxu0 0.0
      %456 = vmatpush1.msra.mxu0 0.0
      %457 = vmatprep.subr.mxu0 0.0
      %458 = vmatpush1.msra.mxu0 0.0
      %459 = vmatprep.subr.mxu0 0.0
      %460 = vmatpush1.msra.mxu0 0.0
      %461 = vmatprep.subr.mxu0 0.0
      %462 = vmatpush1.msra.mxu0 0.0
      %463 = vmatprep.subr.mxu0 0.0
      %464 = vmatpush1.msra.mxu0 0.0
      %465 = vmatprep.mubr.f32.mxu0 0.0
      %466 = vmatmul.mubr.f32.gmra.mrb[0].mxu0 %v374
      %v467 = vpop.f32.mrb[0].mxu0
      %v468 = vadd.f32 %v370, %v467
      %v469 = vpop.f32.mrb[0].mxu0
      %470 = vmatprep.mubr.f32.mxu0 0.0
      %471 = vmatmul.mubr.f32.gmra.mrb[0].mxu0 %v377
      %v472 = vpop.f32.mrb[0].mxu0
      %v473 = vadd.f32 %v370, %v472
      %v474 = vpop.f32.mrb[0].mxu0
      %475 = vmatprep.mubr.f32.mxu0 0.0
      %476 = vmatmul.mubr.f32.gmra.mrb[0].mxu0 %v380
      %v477 = vpop.f32.mrb[0].mxu0
      %v478 = vadd.f32 %v370, %v477
      %v479 = vpop.f32.mrb[0].mxu0
      %480 = vmatprep.mubr.f32.mxu0 0.0
      %481 = vmatmul.mubr.f32.gmra.mrb[0].mxu0 %v383
      %v482 = vpop.f32.mrb[0].mxu0
      %v483 = vadd.f32 %v370, %v482
      %v484 = vpop.f32.mrb[0].mxu0
      %485 = vmatprep.mubr.f32.mxu0 0.0
      %486 = vmatmul.mubr.f32.gmra.mrb[0].mxu0 %v386
      %v487 = vpop.f32.mrb[0].mxu0
      %v488 = vadd.f32 %v370, %v487
      %v489 = vpop.f32.mrb[0].mxu0
      %490 = vmatprep.mubr.f32.mxu0 0.0
      %491 = vmatmul.mubr.f32.gmra.mrb[0].mxu0 %v389
      %v492 = vpop.f32.mrb[0].mxu0
      %v493 = vadd.f32 %v370, %v492
      %v494 = vpop.f32.mrb[0].mxu0
      %495 = vmatprep.mubr.f32.mxu0 0.0
      %496 = vmatmul.mubr.f32.gmra.mrb[0].mxu0 %v392
      %v497 = vpop.f32.mrb[0].mxu0
      %v498 = vadd.f32 %v370, %v497
      %v499 = vpop.f32.mrb[0].mxu0
      %500 = vmatprep.mubr.f32.mxu0 0.0
      %501 = vmatmul.mubr.f32.gmra.mrb[0].mxu0 %v395
      %v502 = vpop.f32.mrb[0].mxu0
      %v503 = vadd.f32 %v370, %v502
      %v504 = vpop.f32.mrb[0].mxu0
      %505 = vdwg.mxu0
      %vm506 = vcmp.gt.f32.partialorder %v468, 0.0
      %vm507 = vcmp.gt.f32.partialorder %v473, 0.0
      %vm508 = vcmp.gt.f32.partialorder %v478, 0.0
      %vm509 = vcmp.gt.f32.partialorder %v483, 0.0
      %vm510 = vcmp.gt.f32.partialorder %v488, 0.0
      %vm511 = vcmp.gt.f32.partialorder %v493, 0.0
      %vm512 = vcmp.gt.f32.partialorder %v498, 0.0
      %vm513 = vcmp.gt.f32.partialorder %v503, 0.0
      %v514 = vmul.f32 %v468, 0.2
      %v515 = vmul.f32 %v473, 0.2
      %v516 = vmul.f32 %v478, 0.2
      %v517 = vmul.f32 %v483, 0.2
      %v518 = vmul.f32 %v488, 0.2
      %v519 = vmul.f32 %v493, 0.2
      %v520 = vmul.f32 %v498, 0.2
      %v521 = vmul.f32 %v503, 0.2
      %v522 = vsel %vm506, %v468, %v514
      %v523 = vsel %vm507, %v473, %v515
      %v524 = vsel %vm508, %v478, %v516
      %v525 = vsel %vm509, %v483, %v517
      %v526 = vsel %vm510, %v488, %v518
      %v527 = vsel %vm511, %v493, %v519
      %v528 = vsel %vm512, %v498, %v520
      %v529 = vsel %vm513, %v503, %v521
      %v530 = vld [vmem:[%s4] sm:$0xff]
      %v531 = vld [vmem:[%s4 + $0x8] sm:$0xff]
      %v532 = vld [vmem:[%s4 + $0x10] sm:$0xff]
      %v533 = vld [vmem:[%s4 + $0x18] sm:$0xff]
      %v534 = vld [vmem:[%s4 + $0x20] sm:$0xff]
      %v535 = vld [vmem:[%s4 + $0x28] sm:$0xff]
      %v536 = vld [vmem:[%s4 + $0x30] sm:$0xff]
      %v537 = vld [vmem:[%s4 + $0x38] sm:$0xff]
      %v538 = vld [vmem:[%s4 + $0x40] sm:$0xff]
      %v539 = vld [vmem:[%s4 + $0x48] sm:$0xff]
      %v540 = vld [vmem:[%s4 + $0x50] sm:$0xff]
      %v541 = vld [vmem:[%s4 + $0x58] sm:$0xff]
      %v542 = vld [vmem:[%s4 + $0x60] sm:$0xff]
      %v543 = vld [vmem:[%s4 + $0x68] sm:$0xff]
      %v544 = vld [vmem:[%s4 + $0x70] sm:$0xff]
      %v545 = vld [vmem:[%s4 + $0x78] sm:$0xff]
      %v546 = vld [vmem:[%s5] sm:$0x1]
      %v548 = vlaneseq
      %v549 = vshrl.u32 %v548, 7
      %v550 = vsub.s32 0, %v549
      %v551 = vrot.slane %v546, %v550
      %553 = vmatprep.subr.mxu0 0.0
      %554 = vmatpush1.msra.mxu0 %v530
      %555 = vmatprep.subr.mxu0 0.0
      %556 = vmatpush1.msra.mxu0 %v531
      %557 = vmatprep.subr.mxu0 0.0
      %558 = vmatpush1.msra.mxu0 %v532
      %559 = vmatprep.subr.mxu0 0.0
      %560 = vmatpush1.msra.mxu0 %v533
      %561 = vmatprep.subr.mxu0 0.0
      %562 = vmatpush1.msra.mxu0 %v534
      %563 = vmatprep.subr.mxu0 0.0
      %564 = vmatpush1.msra.mxu0 %v535
      %565 = vmatprep.subr.mxu0 0.0
      %566 = vmatpush1.msra.mxu0 %v536
      %567 = vmatprep.subr.mxu0 0.0
      %568 = vmatpush1.msra.mxu0 %v537
      %569 = vmatprep.subr.mxu0 0.0
      %570 = vmatpush1.msra.mxu0 %v538
      %571 = vmatprep.subr.mxu0 0.0
      %572 = vmatpush1.msra.mxu0 %v539
      %573 = vmatprep.subr.mxu0 0.0
      %574 = vmatpush1.msra.mxu0 %v540
      %575 = vmatprep.subr.mxu0 0.0
      %576 = vmatpush1.msra.mxu0 %v541
      %577 = vmatprep.subr.mxu0 0.0
      %578 = vmatpush1.msra.mxu0 %v542
      %579 = vmatprep.subr.mxu0 0.0
      %580 = vmatpush1.msra.mxu0 %v543
      %581 = vmatprep.subr.mxu0 0.0
      %582 = vmatpush1.msra.mxu0 %v544
      %583 = vmatprep.subr.mxu0 0.0
      %584 = vmatpush1.msra.mxu0 %v545
      %585 = vmatprep.subr.mxu0 0.0
      %586 = vmatpush1.msra.mxu0 0.0
      %587 = vmatprep.subr.mxu0 0.0
      %588 = vmatpush1.msra.mxu0 0.0
      %589 = vmatprep.subr.mxu0 0.0
      %590 = vmatpush1.msra.mxu0 0.0
      %591 = vmatprep.subr.mxu0 0.0
      %592 = vmatpush1.msra.mxu0 0.0
      %593 = vmatprep.subr.mxu0 0.0
      %594 = vmatpush1.msra.mxu0 0.0
      %595 = vmatprep.subr.mxu0 0.0
      %596 = vmatpush1.msra.mxu0 0.0
      %597 = vmatprep.subr.mxu0 0.0
      %598 = vmatpush1.msra.mxu0 0.0
      %599 = vmatprep.subr.mxu0 0.0
      %600 = vmatpush1.msra.mxu0 0.0
      %601 = vmatprep.subr.mxu0 0.0
      %602 = vmatpush1.msra.mxu0 0.0
      %603 = vmatprep.subr.mxu0 0.0
      %604 = vmatpush1.msra.mxu0 0.0
      %605 = vmatprep.subr.mxu0 0.0
      %606 = vmatpush1.msra.mxu0 0.0
      %607 = vmatprep.subr.mxu0 0.0
      %608 = vmatpush1.msra.mxu0 0.0
      %609 = vmatprep.subr.mxu0 0.0
      %610 = vmatpush1.msra.mxu0 0.0
      %611 = vmatprep.subr.mxu0 0.0
      %612 = vmatpush1.msra.mxu0 0.0
      %613 = vmatprep.subr.mxu0 0.0
      %614 = vmatpush1.msra.mxu0 0.0
      %615 = vmatprep.subr.mxu0 0.0
      %616 = vmatpush1.msra.mxu0 0.0
      %617 = vmatprep.mubr.f32.mxu0 0.0
      %618 = vmatmul.mubr.f32.gmra.mrb[0].mxu0 %v522
      %v619 = vpop.f32.mrb[0].mxu0
      %v620 = vadd.f32 %v551, %v619
      %v621 = vpop.f32.mrb[0].mxu0
      %622 = vmatprep.mubr.f32.mxu0 0.0
      %623 = vmatmul.mubr.f32.gmra.mrb[0].mxu0 %v523
      %v624 = vpop.f32.mrb[0].mxu0
      %v625 = vadd.f32 %v551, %v624
      %v626 = vpop.f32.mrb[0].mxu0
      %627 = vmatprep.mubr.f32.mxu0 0.0
      %628 = vmatmul.mubr.f32.gmra.mrb[0].mxu0 %v524
      %v629 = vpop.f32.mrb[0].mxu0
      %v630 = vadd.f32 %v551, %v629
      %v631 = vpop.f32.mrb[0].mxu0
      %632 = vmatprep.mubr.f32.mxu0 0.0
      %633 = vmatmul.mubr.f32.gmra.mrb[0].mxu0 %v525
      %v634 = vpop.f32.mrb[0].mxu0
      %v635 = vadd.f32 %v551, %v634
      %v636 = vpop.f32.mrb[0].mxu0
      %637 = vmatprep.mubr.f32.mxu0 0.0
      %638 = vmatmul.mubr.f32.gmra.mrb[0].mxu0 %v526
      %v639 = vpop.f32.mrb[0].mxu0
      %v640 = vadd.f32 %v551, %v639
      %v641 = vpop.f32.mrb[0].mxu0
      %642 = vmatprep.mubr.f32.mxu0 0.0
      %643 = vmatmul.mubr.f32.gmra.mrb[0].mxu0 %v527
      %v644 = vpop.f32.mrb[0].mxu0
      %v645 = vadd.f32 %v551, %v644
      %v646 = vpop.f32.mrb[0].mxu0
      %647 = vmatprep.mubr.f32.mxu0 0.0
      %648 = vmatmul.mubr.f32.gmra.mrb[0].mxu0 %v528
      %v649 = vpop.f32.mrb[0].mxu0
      %v650 = vadd.f32 %v551, %v649
      %v651 = vpop.f32.mrb[0].mxu0
      %652 = vmatprep.mubr.f32.mxu0 0.0
      %653 = vmatmul.mubr.f32.gmra.mrb[0].mxu0 %v529
      %v654 = vpop.f32.mrb[0].mxu0
      %v655 = vadd.f32 %v551, %v654
      %v656 = vpop.f32.mrb[0].mxu0
      %657 = vdwg.mxu0
      %vm658 = vcmp.gt.f32.partialorder %v620, 0.0
      %vm659 = vcmp.gt.f32.partialorder %v625, 0.0
      %vm660 = vcmp.gt.f32.partialorder %v630, 0.0
      %vm661 = vcmp.gt.f32.partialorder %v635, 0.0
      %vm662 = vcmp.gt.f32.partialorder %v640, 0.0
      %vm663 = vcmp.gt.f32.partialorder %v645, 0.0
      %vm664 = vcmp.gt.f32.partialorder %v650, 0.0
      %vm665 = vcmp.gt.f32.partialorder %v655, 0.0
      %v666 = vmul.f32 %v620, 0.2
      %v667 = vmul.f32 %v625, 0.2
      %v668 = vmul.f32 %v630, 0.2
      %v669 = vmul.f32 %v635, 0.2
      %v670 = vmul.f32 %v640, 0.2
      %v671 = vmul.f32 %v645, 0.2
      %v672 = vmul.f32 %v650, 0.2
      %v673 = vmul.f32 %v655, 0.2
      %v674 = vsel %vm658, %v620, %v666
      %v675 = vsel %vm659, %v625, %v667
      %v676 = vsel %vm660, %v630, %v668
      %v677 = vsel %vm661, %v635, %v669
      %v678 = vsel %vm662, %v640, %v670
      %v679 = vsel %vm663, %v645, %v671
      %v680 = vsel %vm664, %v650, %v672
      %v681 = vsel %vm665, %v655, %v673
      %v682 = vld [vmem:[%s349] sm:$0xff]
      %v683 = vld [vmem:[%s349 + $0x8] sm:$0xff]
      %v684 = vld [vmem:[%s349 + $0x10] sm:$0xff]
      %v685 = vld [vmem:[%s349 + $0x18] sm:$0xff]
      %v686 = vld [vmem:[%s349 + $0x20] sm:$0xff]
      %v687 = vld [vmem:[%s349 + $0x28] sm:$0xff]
      %v688 = vld [vmem:[%s349 + $0x30] sm:$0xff]
      %v689 = vld [vmem:[%s349 + $0x38] sm:$0xff]
      %v690 = vld [vmem:[%s6] sm:$0xff]
      %v691 = vld [vmem:[%s6 + $0x8] sm:$0xff]
      %v692 = vld [vmem:[%s6 + $0x10] sm:$0xff]
      %v693 = vld [vmem:[%s6 + $0x18] sm:$0xff]
      %v694 = vld [vmem:[%s6 + $0x20] sm:$0xff]
      %v695 = vld [vmem:[%s6 + $0x28] sm:$0xff]
      %v696 = vld [vmem:[%s6 + $0x30] sm:$0xff]
      %v697 = vld [vmem:[%s6 + $0x38] sm:$0xff]
      %v698 = vld [vmem:[%s6 + $0x40] sm:$0xff]
      %v699 = vld [vmem:[%s6 + $0x48] sm:$0xff]
      %v700 = vld [vmem:[%s6 + $0x50] sm:$0xff]
      %v701 = vld [vmem:[%s6 + $0x58] sm:$0xff]
      %v702 = vld [vmem:[%s6 + $0x60] sm:$0xff]
      %v703 = vld [vmem:[%s6 + $0x68] sm:$0xff]
      %v704 = vld [vmem:[%s6 + $0x70] sm:$0xff]
      %v705 = vld [vmem:[%s6 + $0x78] sm:$0xff]
      %v706 = vld [vmem:[%s6 + $0x80] sm:$0xff]
      %v707 = vld [vmem:[%s6 + $0x88] sm:$0xff]
      %v708 = vld [vmem:[%s6 + $0x90] sm:$0xff]
      %v709 = vld [vmem:[%s6 + $0x98] sm:$0xff]
      %v710 = vld [vmem:[%s6 + $0xa0] sm:$0xff]
      %v711 = vld [vmem:[%s6 + $0xa8] sm:$0xff]
      %v712 = vld [vmem:[%s6 + $0xb0] sm:$0xff]
      %v713 = vld [vmem:[%s6 + $0xb8] sm:$0xff]
      %v714 = vld [vmem:[%s6 + $0xc0] sm:$0xff]
      %v715 = vld [vmem:[%s6 + $0xc8] sm:$0xff]
      %v716 = vld [vmem:[%s6 + $0xd0] sm:$0xff]
      %v717 = vld [vmem:[%s6 + $0xd8] sm:$0xff]
      %v718 = vld [vmem:[%s6 + $0xe0] sm:$0xff]
      %v719 = vld [vmem:[%s6 + $0xe8] sm:$0xff]
      %v720 = vld [vmem:[%s6 + $0xf0] sm:$0xff]
      %v721 = vld [vmem:[%s6 + $0xf8] sm:$0xff]
      %v722 = vld [vmem:[%s6 + $0x100] sm:$0xff]
      %v723 = vld [vmem:[%s6 + $0x108] sm:$0xff]
      %v724 = vld [vmem:[%s6 + $0x110] sm:$0xff]
      %v725 = vld [vmem:[%s6 + $0x118] sm:$0xff]
      %v726 = vld [vmem:[%s6 + $0x120] sm:$0xff]
      %v727 = vld [vmem:[%s6 + $0x128] sm:$0xff]
      %v728 = vld [vmem:[%s6 + $0x130] sm:$0xff]
      %v729 = vld [vmem:[%s6 + $0x138] sm:$0xff]
      %v730 = vld [vmem:[%s6 + $0x140] sm:$0xff]
      %v731 = vld [vmem:[%s6 + $0x148] sm:$0xff]
      %v732 = vld [vmem:[%s6 + $0x150] sm:$0xff]
      %v733 = vld [vmem:[%s6 + $0x158] sm:$0xff]
      %v734 = vld [vmem:[%s6 + $0x160] sm:$0xff]
      %v735 = vld [vmem:[%s6 + $0x168] sm:$0xff]
      %v736 = vld [vmem:[%s6 + $0x170] sm:$0xff]
      %v737 = vld [vmem:[%s6 + $0x178] sm:$0xff]
      %v738 = vld [vmem:[%s6 + $0x180] sm:$0xff]
      %v739 = vld [vmem:[%s6 + $0x188] sm:$0xff]
      %v740 = vld [vmem:[%s6 + $0x190] sm:$0xff]
      %v741 = vld [vmem:[%s6 + $0x198] sm:$0xff]
      %v742 = vld [vmem:[%s6 + $0x1a0] sm:$0xff]
      %v743 = vld [vmem:[%s6 + $0x1a8] sm:$0xff]
      %v744 = vld [vmem:[%s6 + $0x1b0] sm:$0xff]
      %v745 = vld [vmem:[%s6 + $0x1b8] sm:$0xff]
      %v746 = vld [vmem:[%s6 + $0x1c0] sm:$0xff]
      %v747 = vld [vmem:[%s6 + $0x1c8] sm:$0xff]
      %v748 = vld [vmem:[%s6 + $0x1d0] sm:$0xff]
      %v749 = vld [vmem:[%s6 + $0x1d8] sm:$0xff]
      %v750 = vld [vmem:[%s6 + $0x1e0] sm:$0xff]
      %v751 = vld [vmem:[%s6 + $0x1e8] sm:$0xff]
      %v752 = vld [vmem:[%s6 + $0x1f0] sm:$0xff]
      %v753 = vld [vmem:[%s6 + $0x1f8] sm:$0xff]
      %754 = vmatprep.subr.mxu0 %v691
      %755 = vmatpush1.msra.mxu0 %v690
      %756 = vmatprep.subr.mxu0 %v693
      %757 = vmatpush1.msra.mxu0 %v692
      %758 = vmatprep.subr.mxu0 %v695
      %759 = vmatpush1.msra.mxu0 %v694
      %760 = vmatprep.subr.mxu0 %v697
      %761 = vmatpush1.msra.mxu0 %v696
      %762 = vmatprep.subr.mxu0 %v699
      %763 = vmatpush1.msra.mxu0 %v698
      %764 = vmatprep.subr.mxu0 %v701
      %765 = vmatpush1.msra.mxu0 %v700
      %766 = vmatprep.subr.mxu0 %v703
      %767 = vmatpush1.msra.mxu0 %v702
      %768 = vmatprep.subr.mxu0 %v705
      %769 = vmatpush1.msra.mxu0 %v704
      %770 = vmatprep.subr.mxu0 %v707
      %771 = vmatpush1.msra.mxu0 %v706
      %772 = vmatprep.subr.mxu0 %v709
      %773 = vmatpush1.msra.mxu0 %v708
      %774 = vmatprep.subr.mxu0 %v711
      %775 = vmatpush1.msra.mxu0 %v710
      %776 = vmatprep.subr.mxu0 %v713
      %777 = vmatpush1.msra.mxu0 %v712
      %778 = vmatprep.subr.mxu0 %v715
      %779 = vmatpush1.msra.mxu0 %v714
      %780 = vmatprep.subr.mxu0 %v717
      %781 = vmatpush1.msra.mxu0 %v716
      %782 = vmatprep.subr.mxu0 %v719
      %783 = vmatpush1.msra.mxu0 %v718
      %784 = vmatprep.subr.mxu0 %v721
      %785 = vmatpush1.msra.mxu0 %v720
      %786 = vmatprep.subr.mxu0 %v723
      %787 = vmatpush1.msra.mxu0 %v722
      %788 = vmatprep.subr.mxu0 %v725
      %789 = vmatpush1.msra.mxu0 %v724
      %790 = vmatprep.subr.mxu0 %v727
      %791 = vmatpush1.msra.mxu0 %v726
      %792 = vmatprep.subr.mxu0 %v729
      %793 = vmatpush1.msra.mxu0 %v728
      %794 = vmatprep.subr.mxu0 %v731
      %795 = vmatpush1.msra.mxu0 %v730
      %796 = vmatprep.subr.mxu0 %v733
      %797 = vmatpush1.msra.mxu0 %v732
      %798 = vmatprep.subr.mxu0 %v735
      %799 = vmatpush1.msra.mxu0 %v734
      %800 = vmatprep.subr.mxu0 %v737
      %801 = vmatpush1.msra.mxu0 %v736
      %802 = vmatprep.subr.mxu0 %v739
      %803 = vmatpush1.msra.mxu0 %v738
      %804 = vmatprep.subr.mxu0 %v741
      %805 = vmatpush1.msra.mxu0 %v740
      %806 = vmatprep.subr.mxu0 %v743
      %807 = vmatpush1.msra.mxu0 %v742
      %808 = vmatprep.subr.mxu0 %v745
      %809 = vmatpush1.msra.mxu0 %v744
      %810 = vmatprep.subr.mxu0 %v747
      %811 = vmatpush1.msra.mxu0 %v746
      %812 = vmatprep.subr.mxu0 %v749
      %813 = vmatpush1.msra.mxu0 %v748
      %814 = vmatprep.subr.mxu0 %v751
      %815 = vmatpush1.msra.mxu0 %v750
      %816 = vmatprep.subr.mxu0 %v753
      %817 = vmatpush1.msra.mxu0 %v752
      %818 = vmatprep.mubr.f32.mxu0 %v674
      %819 = vmatmul.mubr.f32.gmra.mrb[0].mxu0 %v682
      %v820 = vpop.f32.mrb[0].mxu0
      %v821 = vadd.f32 0.0, %v820
      %v822 = vpop.f32.mrb[0].mxu0
      %v823 = vadd.f32 0.0, %v822
      %824 = vmatprep.mubr.f32.mxu0 %v675
      %825 = vmatmul.mubr.f32.gmra.mrb[0].mxu0 %v683
      %v826 = vpop.f32.mrb[0].mxu0
      %v827 = vadd.f32 0.0, %v826
      %v828 = vpop.f32.mrb[0].mxu0
      %v829 = vadd.f32 0.0, %v828
      %830 = vmatprep.mubr.f32.mxu0 %v676
      %831 = vmatmul.mubr.f32.gmra.mrb[0].mxu0 %v684
      %v832 = vpop.f32.mrb[0].mxu0
      %v833 = vadd.f32 0.0, %v832
      %v834 = vpop.f32.mrb[0].mxu0
      %v835 = vadd.f32 0.0, %v834
      %836 = vmatprep.mubr.f32.mxu0 %v677
      %837 = vmatmul.mubr.f32.gmra.mrb[0].mxu0 %v685
      %v838 = vpop.f32.mrb[0].mxu0
      %v839 = vadd.f32 0.0, %v838
      %v840 = vpop.f32.mrb[0].mxu0
      %v841 = vadd.f32 0.0, %v840
      %842 = vmatprep.mubr.f32.mxu0 %v678
      %843 = vmatmul.mubr.f32.gmra.mrb[0].mxu0 %v686
      %v844 = vpop.f32.mrb[0].mxu0
      %v845 = vadd.f32 0.0, %v844
      %v846 = vpop.f32.mrb[0].mxu0
      %v847 = vadd.f32 0.0, %v846
      %848 = vmatprep.mubr.f32.mxu0 %v679
      %849 = vmatmul.mubr.f32.gmra.mrb[0].mxu0 %v687
      %v850 = vpop.f32.mrb[0].mxu0
      %v851 = vadd.f32 0.0, %v850
      %v852 = vpop.f32.mrb[0].mxu0
      %v853 = vadd.f32 0.0, %v852
      %854 = vmatprep.mubr.f32.mxu0 %v680
      %855 = vmatmul.mubr.f32.gmra.mrb[0].mxu0 %v688
      %v856 = vpop.f32.mrb[0].mxu0
      %v857 = vadd.f32 0.0, %v856
      %v858 = vpop.f32.mrb[0].mxu0
      %v859 = vadd.f32 0.0, %v858
      %860 = vmatprep.mubr.f32.mxu0 %v681
      %861 = vmatmul.mubr.f32.gmra.mrb[0].mxu0 %v689
      %v862 = vpop.f32.mrb[0].mxu0
      %v863 = vadd.f32 0.0, %v862
      %v864 = vpop.f32.mrb[0].mxu0
      %v865 = vadd.f32 0.0, %v864
      %866 = vdwg.mxu0
      %v867 = vrot.slane %v821, 4
      %v868 = vmax.f32 %v821, %v867
      %v869 = vrot.slane %v868, 2
      %v870 = vmax.f32 %v868, %v869
      %v871 = vrot.slane %v870, 1
      %v872 = vmax.f32 %v870, %v871
      %v873 = vrot.slane %v823, 4
      %v874 = vmax.f32 %v823, %v873
      %v875 = vrot.slane %v874, 2
      %v876 = vmax.f32 %v874, %v875
      %v877 = vrot.slane %v876, 1
      %v878 = vmax.f32 %v876, %v877
      %v879 = vrot.slane %v827, 4
      %v880 = vmax.f32 %v827, %v879
      %v881 = vrot.slane %v880, 2
      %v882 = vmax.f32 %v880, %v881
      %v883 = vrot.slane %v882, 1
      %v884 = vmax.f32 %v882, %v883
      %v885 = vrot.slane %v829, 4
      %v886 = vmax.f32 %v829, %v885
      %v887 = vrot.slane %v886, 2
      %v888 = vmax.f32 %v886, %v887
      %v889 = vrot.slane %v888, 1
      %v890 = vmax.f32 %v888, %v889
      %v891 = vrot.slane %v833, 4
      %v892 = vmax.f32 %v833, %v891
      %v893 = vrot.slane %v892, 2
      %v894 = vmax.f32 %v892, %v893
      %v895 = vrot.slane %v894, 1
      %v896 = vmax.f32 %v894, %v895
      %v897 = vrot.slane %v835, 4
      %v898 = vmax.f32 %v835, %v897
      %v899 = vrot.slane %v898, 2
      %v900 = vmax.f32 %v898, %v899
      %v901 = vrot.slane %v900, 1
      %v902 = vmax.f32 %v900, %v901
      %v903 = vrot.slane %v839, 4
      %v904 = vmax.f32 %v839, %v903
      %v905 = vrot.slane %v904, 2
      %v906 = vmax.f32 %v904, %v905
      %v907 = vrot.slane %v906, 1
      %v908 = vmax.f32 %v906, %v907
      %v909 = vrot.slane %v841, 4
      %v910 = vmax.f32 %v841, %v909
      %v911 = vrot.slane %v910, 2
      %v912 = vmax.f32 %v910, %v911
      %v913 = vrot.slane %v912, 1
      %v914 = vmax.f32 %v912, %v913
      %v915 = vrot.slane %v845, 4
      %v916 = vmax.f32 %v845, %v915
      %v917 = vrot.slane %v916, 2
      %v918 = vmax.f32 %v916, %v917
      %v919 = vrot.slane %v918, 1
      %v920 = vmax.f32 %v918, %v919
      %v921 = vrot.slane %v847, 4
      %v922 = vmax.f32 %v847, %v921
      %v923 = vrot.slane %v922, 2
      %v924 = vmax.f32 %v922, %v923
      %v925 = vrot.slane %v924, 1
      %v926 = vmax.f32 %v924, %v925
      %v927 = vrot.slane %v851, 4
      %v928 = vmax.f32 %v851, %v927
      %v929 = vrot.slane %v928, 2
      %v930 = vmax.f32 %v928, %v929
      %v931 = vrot.slane %v930, 1
      %v932 = vmax.f32 %v930, %v931
      %v933 = vrot.slane %v853, 4
      %v934 = vmax.f32 %v853, %v933
      %v935 = vrot.slane %v934, 2
      %v936 = vmax.f32 %v934, %v935
      %v937 = vrot.slane %v936, 1
      %v938 = vmax.f32 %v936, %v937
      %v939 = vrot.slane %v857, 4
      %v940 = vmax.f32 %v857, %v939
      %v941 = vrot.slane %v940, 2
      %v942 = vmax.f32 %v940, %v941
      %v943 = vrot.slane %v942, 1
      %v944 = vmax.f32 %v942, %v943
      %v945 = vrot.slane %v859, 4
      %v946 = vmax.f32 %v859, %v945
      %v947 = vrot.slane %v946, 2
      %v948 = vmax.f32 %v946, %v947
      %v949 = vrot.slane %v948, 1
      %v950 = vmax.f32 %v948, %v949
      %v951 = vrot.slane %v863, 4
      %v952 = vmax.f32 %v863, %v951
      %v953 = vrot.slane %v952, 2
      %v954 = vmax.f32 %v952, %v953
      %v955 = vrot.slane %v954, 1
      %v956 = vmax.f32 %v954, %v955
      %v957 = vrot.slane %v865, 4
      %v958 = vmax.f32 %v865, %v957
      %v959 = vrot.slane %v958, 2
      %v960 = vmax.f32 %v958, %v959
      %v961 = vrot.slane %v960, 1
      %v962 = vmax.f32 %v960, %v961
      %v963 = vsub.f32 %v821, %v872
      %v964 = vsub.f32 %v823, %v878
      %v965 = vsub.f32 %v827, %v884
      %v966 = vsub.f32 %v829, %v890
      %v967 = vsub.f32 %v833, %v896
      %v968 = vsub.f32 %v835, %v902
      %v969 = vsub.f32 %v839, %v908
      %v970 = vsub.f32 %v841, %v914
      %v971 = vsub.f32 %v845, %v920
      %v972 = vsub.f32 %v847, %v926
      %v973 = vsub.f32 %v851, %v932
      %v974 = vsub.f32 %v853, %v938
      %v975 = vsub.f32 %v857, %v944
      %v976 = vsub.f32 %v859, %v950
      %v977 = vsub.f32 %v863, %v956
      %v978 = vsub.f32 %v865, %v962
      %v979 = vmul.f32 %v963, 1.442695
      %v980 = vpow.pop %v979
      %v981 = vmul.f32 %v964, 1.442695
      %v982 = vpow.pop %v981
      %v983 = vmul.f32 %v965, 1.442695
      %v984 = vpow.pop %v983
      %v985 = vmul.f32 %v966, 1.442695
      %v986 = vpow.pop %v985
      %v987 = vmul.f32 %v967, 1.442695
      %v988 = vpow.pop %v987
      %v989 = vmul.f32 %v968, 1.442695
      %v990 = vpow.pop %v989
      %v991 = vmul.f32 %v969, 1.442695
      %v992 = vpow.pop %v991
      %v993 = vmul.f32 %v970, 1.442695
      %v994 = vpow.pop %v993
      %v995 = vmul.f32 %v971, 1.442695
      %v996 = vpow.pop %v995
      %v997 = vmul.f32 %v972, 1.442695
      %v998 = vpow.pop %v997
      %v999 = vmul.f32 %v973, 1.442695
      %v1000 = vpow.pop %v999
      %v1001 = vmul.f32 %v974, 1.442695
      %v1002 = vpow.pop %v1001
      %v1003 = vmul.f32 %v975, 1.442695
      %v1004 = vpow.pop %v1003
      %v1005 = vmul.f32 %v976, 1.442695
      %v1006 = vpow.pop %v1005
      %v1007 = vmul.f32 %v977, 1.442695
      %v1008 = vpow.pop %v1007
      %v1009 = vmul.f32 %v978, 1.442695
      %v1010 = vpow.pop %v1009
      %v1011 = vrot.slane %v980, 4
      %v1012 = vadd.f32 %v980, %v1011
      %v1013 = vrot.slane %v1012, 2
      %v1014 = vadd.f32 %v1012, %v1013
      %v1015 = vrot.slane %v1014, 1
      %v1016 = vadd.f32 %v1014, %v1015
      %v1017 = vrot.slane %v982, 4
      %v1018 = vadd.f32 %v982, %v1017
      %v1019 = vrot.slane %v1018, 2
      %v1020 = vadd.f32 %v1018, %v1019
      %v1021 = vrot.slane %v1020, 1
      %v1022 = vadd.f32 %v1020, %v1021
      %v1023 = vrot.slane %v984, 4
      %v1024 = vadd.f32 %v984, %v1023
      %v1025 = vrot.slane %v1024, 2
      %v1026 = vadd.f32 %v1024, %v1025
      %v1027 = vrot.slane %v1026, 1
      %v1028 = vadd.f32 %v1026, %v1027
      %v1029 = vrot.slane %v986, 4
      %v1030 = vadd.f32 %v986, %v1029
      %v1031 = vrot.slane %v1030, 2
      %v1032 = vadd.f32 %v1030, %v1031
      %v1033 = vrot.slane %v1032, 1
      %v1034 = vadd.f32 %v1032, %v1033
      %v1035 = vrot.slane %v988, 4
      %v1036 = vadd.f32 %v988, %v1035
      %v1037 = vrot.slane %v1036, 2
      %v1038 = vadd.f32 %v1036, %v1037
      %v1039 = vrot.slane %v1038, 1
      %v1040 = vadd.f32 %v1038, %v1039
      %v1041 = vrot.slane %v990, 4
      %v1042 = vadd.f32 %v990, %v1041
      %v1043 = vrot.slane %v1042, 2
      %v1044 = vadd.f32 %v1042, %v1043
      %v1045 = vrot.slane %v1044, 1
      %v1046 = vadd.f32 %v1044, %v1045
      %v1047 = vrot.slane %v992, 4
      %v1048 = vadd.f32 %v992, %v1047
      %v1049 = vrot.slane %v1048, 2
      %v1050 = vadd.f32 %v1048, %v1049
      %v1051 = vrot.slane %v1050, 1
      %v1052 = vadd.f32 %v1050, %v1051
      %v1053 = vrot.slane %v994, 4
      %v1054 = vadd.f32 %v994, %v1053
      %v1055 = vrot.slane %v1054, 2
      %v1056 = vadd.f32 %v1054, %v1055
      %v1057 = vrot.slane %v1056, 1
      %v1058 = vadd.f32 %v1056, %v1057
      %v1059 = vrot.slane %v996, 4
      %v1060 = vadd.f32 %v996, %v1059
      %v1061 = vrot.slane %v1060, 2
      %v1062 = vadd.f32 %v1060, %v1061
      %v1063 = vrot.slane %v1062, 1
      %v1064 = vadd.f32 %v1062, %v1063
      %v1065 = vrot.slane %v998, 4
      %v1066 = vadd.f32 %v998, %v1065
      %v1067 = vrot.slane %v1066, 2
      %v1068 = vadd.f32 %v1066, %v1067
      %v1069 = vrot.slane %v1068, 1
      %v1070 = vadd.f32 %v1068, %v1069
      %v1071 = vrot.slane %v1000, 4
      %v1072 = vadd.f32 %v1000, %v1071
      %v1073 = vrot.slane %v1072, 2
      %v1074 = vadd.f32 %v1072, %v1073
      %v1075 = vrot.slane %v1074, 1
      %v1076 = vadd.f32 %v1074, %v1075
      %v1077 = vrot.slane %v1002, 4
      %v1078 = vadd.f32 %v1002, %v1077
      %v1079 = vrot.slane %v1078, 2
      %v1080 = vadd.f32 %v1078, %v1079
      %v1081 = vrot.slane %v1080, 1
      %v1082 = vadd.f32 %v1080, %v1081
      %v1083 = vrot.slane %v1004, 4
      %v1084 = vadd.f32 %v1004, %v1083
      %v1085 = vrot.slane %v1084, 2
      %v1086 = vadd.f32 %v1084, %v1085
      %v1087 = vrot.slane %v1086, 1
      %v1088 = vadd.f32 %v1086, %v1087
      %v1089 = vrot.slane %v1006, 4
      %v1090 = vadd.f32 %v1006, %v1089
      %v1091 = vrot.slane %v1090, 2
      %v1092 = vadd.f32 %v1090, %v1091
      %v1093 = vrot.slane %v1092, 1
      %v1094 = vadd.f32 %v1092, %v1093
      %v1095 = vrot.slane %v1008, 4
      %v1096 = vadd.f32 %v1008, %v1095
      %v1097 = vrot.slane %v1096, 2
      %v1098 = vadd.f32 %v1096, %v1097
      %v1099 = vrot.slane %v1098, 1
      %v1100 = vadd.f32 %v1098, %v1099
      %v1101 = vrot.slane %v1010, 4
      %v1102 = vadd.f32 %v1010, %v1101
      %v1103 = vrot.slane %v1102, 2
      %v1104 = vadd.f32 %v1102, %v1103
      %v1105 = vrot.slane %v1104, 1
      %v1106 = vadd.f32 %v1104, %v1105
      %v1107 = vrcp.pop %v1016
      %v1108 = vrcp.pop %v1022
      %v1109 = vrcp.pop %v1028
      %v1110 = vrcp.pop %v1034
      %v1111 = vrcp.pop %v1040
      %v1112 = vrcp.pop %v1046
      %v1113 = vrcp.pop %v1052
      %v1114 = vrcp.pop %v1058
      %v1115 = vrcp.pop %v1064
      %v1116 = vrcp.pop %v1070
      %v1117 = vrcp.pop %v1076
      %v1118 = vrcp.pop %v1082
      %v1119 = vrcp.pop %v1088
      %v1120 = vrcp.pop %v1094
      %v1121 = vrcp.pop %v1100
      %v1122 = vrcp.pop %v1106
      %v1123 = vmul.f32 %v980, %v1107
      %v1124 = vmul.f32 %v982, %v1108
      %v1125 = vmul.f32 %v984, %v1109
      %v1126 = vmul.f32 %v986, %v1110
      %v1127 = vmul.f32 %v988, %v1111
      %v1128 = vmul.f32 %v990, %v1112
      %v1129 = vmul.f32 %v992, %v1113
      %v1130 = vmul.f32 %v994, %v1114
      %v1131 = vmul.f32 %v996, %v1115
      %v1132 = vmul.f32 %v998, %v1116
      %v1133 = vmul.f32 %v1000, %v1117
      %v1134 = vmul.f32 %v1002, %v1118
      %v1135 = vmul.f32 %v1004, %v1119
      %v1136 = vmul.f32 %v1006, %v1120
      %v1137 = vmul.f32 %v1008, %v1121
      %v1138 = vmul.f32 %v1010, %v1122
      %v1139 = vmul.f32 %v682, %v1123
      %v1140 = vmul.f32 %v674, %v1124
      %v1141 = vmul.f32 %v683, %v1125
      %v1142 = vmul.f32 %v675, %v1126
      %v1143 = vmul.f32 %v684, %v1127
      %v1144 = vmul.f32 %v676, %v1128
      %v1145 = vmul.f32 %v685, %v1129
      %v1146 = vmul.f32 %v677, %v1130
      %v1147 = vmul.f32 %v686, %v1131
      %v1148 = vmul.f32 %v678, %v1132
      %v1149 = vmul.f32 %v687, %v1133
      %v1150 = vmul.f32 %v679, %v1134
      %v1151 = vmul.f32 %v688, %v1135
      %v1152 = vmul.f32 %v680, %v1136
      %v1153 = vmul.f32 %v689, %v1137
      %v1154 = vmul.f32 %v681, %v1138
      %v1155 = vrot.slane %v1139, 4
      %v1156 = vadd.f32 %v1139, %v1155
      %v1157 = vrot.slane %v1156, 2
      %v1158 = vadd.f32 %v1156, %v1157
      %v1159 = vrot.slane %v1158, 1
      %v1160 = vadd.f32 %v1158, %v1159
      %v1161 = vrot.slane %v1140, 4
      %v1162 = vadd.f32 %v1140, %v1161
      %v1163 = vrot.slane %v1162, 2
      %v1164 = vadd.f32 %v1162, %v1163
      %v1165 = vrot.slane %v1164, 1
      %v1166 = vadd.f32 %v1164, %v1165
      %v1167 = vrot.slane %v1141, 4
      %v1168 = vadd.f32 %v1141, %v1167
      %v1169 = vrot.slane %v1168, 2
      %v1170 = vadd.f32 %v1168, %v1169
      %v1171 = vrot.slane %v1170, 1
      %v1172 = vadd.f32 %v1170, %v1171
      %v1173 = vrot.slane %v1142, 4
      %v1174 = vadd.f32 %v1142, %v1173
      %v1175 = vrot.slane %v1174, 2
      %v1176 = vadd.f32 %v1174, %v1175
      %v1177 = vrot.slane %v1176, 1
      %v1178 = vadd.f32 %v1176, %v1177
      %v1179 = vrot.slane %v1143, 4
      %v1180 = vadd.f32 %v1143, %v1179
      %v1181 = vrot.slane %v1180, 2
      %v1182 = vadd.f32 %v1180, %v1181
      %v1183 = vrot.slane %v1182, 1
      %v1184 = vadd.f32 %v1182, %v1183
      %v1185 = vrot.slane %v1144, 4
      %v1186 = vadd.f32 %v1144, %v1185
      %v1187 = vrot.slane %v1186, 2
      %v1188 = vadd.f32 %v1186, %v1187
      %v1189 = vrot.slane %v1188, 1
      %v1190 = vadd.f32 %v1188, %v1189
      %v1191 = vrot.slane %v1145, 4
      %v1192 = vadd.f32 %v1145, %v1191
      %v1193 = vrot.slane %v1192, 2
      %v1194 = vadd.f32 %v1192, %v1193
      %v1195 = vrot.slane %v1194, 1
      %v1196 = vadd.f32 %v1194, %v1195
      %v1197 = vrot.slane %v1146, 4
      %v1198 = vadd.f32 %v1146, %v1197
      %v1199 = vrot.slane %v1198, 2
      %v1200 = vadd.f32 %v1198, %v1199
      %v1201 = vrot.slane %v1200, 1
      %v1202 = vadd.f32 %v1200, %v1201
      %v1203 = vrot.slane %v1147, 4
      %v1204 = vadd.f32 %v1147, %v1203
      %v1205 = vrot.slane %v1204, 2
      %v1206 = vadd.f32 %v1204, %v1205
      %v1207 = vrot.slane %v1206, 1
      %v1208 = vadd.f32 %v1206, %v1207
      %v1209 = vrot.slane %v1148, 4
      %v1210 = vadd.f32 %v1148, %v1209
      %v1211 = vrot.slane %v1210, 2
      %v1212 = vadd.f32 %v1210, %v1211
      %v1213 = vrot.slane %v1212, 1
      %v1214 = vadd.f32 %v1212, %v1213
      %v1215 = vrot.slane %v1149, 4
      %v1216 = vadd.f32 %v1149, %v1215
      %v1217 = vrot.slane %v1216, 2
      %v1218 = vadd.f32 %v1216, %v1217
      %v1219 = vrot.slane %v1218, 1
      %v1220 = vadd.f32 %v1218, %v1219
      %v1221 = vrot.slane %v1150, 4
      %v1222 = vadd.f32 %v1150, %v1221
      %v1223 = vrot.slane %v1222, 2
      %v1224 = vadd.f32 %v1222, %v1223
      %v1225 = vrot.slane %v1224, 1
      %v1226 = vadd.f32 %v1224, %v1225
      %v1227 = vrot.slane %v1151, 4
      %v1228 = vadd.f32 %v1151, %v1227
      %v1229 = vrot.slane %v1228, 2
      %v1230 = vadd.f32 %v1228, %v1229
      %v1231 = vrot.slane %v1230, 1
      %v1232 = vadd.f32 %v1230, %v1231
      %v1233 = vrot.slane %v1152, 4
      %v1234 = vadd.f32 %v1152, %v1233
      %v1235 = vrot.slane %v1234, 2
      %v1236 = vadd.f32 %v1234, %v1235
      %v1237 = vrot.slane %v1236, 1
      %v1238 = vadd.f32 %v1236, %v1237
      %v1239 = vrot.slane %v1153, 4
      %v1240 = vadd.f32 %v1153, %v1239
      %v1241 = vrot.slane %v1240, 2
      %v1242 = vadd.f32 %v1240, %v1241
      %v1243 = vrot.slane %v1242, 1
      %v1244 = vadd.f32 %v1242, %v1243
      %v1245 = vrot.slane %v1154, 4
      %v1246 = vadd.f32 %v1154, %v1245
      %v1247 = vrot.slane %v1246, 2
      %v1248 = vadd.f32 %v1246, %v1247
      %v1249 = vrot.slane %v1248, 1
      %v1250 = vadd.f32 %v1248, %v1249
      %v1251 = vld [vmem:[%s7] sm:$0xff]
      %v1252 = vld [vmem:[%s7 + $0x8] sm:$0xff]
      %v1253 = vld [vmem:[%s7 + $0x10] sm:$0xff]
      %v1254 = vld [vmem:[%s7 + $0x18] sm:$0xff]
      %v1255 = vld [vmem:[%s7 + $0x20] sm:$0xff]
      %v1256 = vld [vmem:[%s7 + $0x28] sm:$0xff]
      %v1257 = vld [vmem:[%s7 + $0x30] sm:$0xff]
      %v1258 = vld [vmem:[%s7 + $0x38] sm:$0xff]
      %v1259 = vld [vmem:[%s7 + $0x40] sm:$0xff]
      %v1260 = vld [vmem:[%s7 + $0x48] sm:$0xff]
      %v1261 = vld [vmem:[%s7 + $0x50] sm:$0xff]
      %v1262 = vld [vmem:[%s7 + $0x58] sm:$0xff]
      %v1263 = vld [vmem:[%s7 + $0x60] sm:$0xff]
      %v1264 = vld [vmem:[%s7 + $0x68] sm:$0xff]
      %v1265 = vld [vmem:[%s7 + $0x70] sm:$0xff]
      %v1266 = vld [vmem:[%s7 + $0x78] sm:$0xff]
      %v1267 = vld [vmem:[%s7 + $0x80] sm:$0xff]
      %v1268 = vld [vmem:[%s7 + $0x88] sm:$0xff]
      %v1269 = vld [vmem:[%s7 + $0x90] sm:$0xff]
      %v1270 = vld [vmem:[%s7 + $0x98] sm:$0xff]
      %v1271 = vld [vmem:[%s7 + $0xa0] sm:$0xff]
      %v1272 = vld [vmem:[%s7 + $0xa8] sm:$0xff]
      %v1273 = vld [vmem:[%s7 + $0xb0] sm:$0xff]
      %v1274 = vld [vmem:[%s7 + $0xb8] sm:$0xff]
      %v1275 = vld [vmem:[%s7 + $0xc0] sm:$0xff]
      %v1276 = vld [vmem:[%s7 + $0xc8] sm:$0xff]
      %v1277 = vld [vmem:[%s7 + $0xd0] sm:$0xff]
      %v1278 = vld [vmem:[%s7 + $0xd8] sm:$0xff]
      %v1279 = vld [vmem:[%s7 + $0xe0] sm:$0xff]
      %v1280 = vld [vmem:[%s7 + $0xe8] sm:$0xff]
      %v1281 = vld [vmem:[%s7 + $0xf0] sm:$0xff]
      %v1282 = vld [vmem:[%s7 + $0xf8] sm:$0xff]
      %v1283 = vld [vmem:[%s8] sm:$0x1]
      %v1285 = vlaneseq
      %v1286 = vshrl.u32 %v1285, 7
      %v1287 = vsub.s32 0, %v1286
      %v1288 = vrot.slane %v1283, %v1287
      %vm1306 = vcmask 1041409
      %v1307 = vsel %vm1306, %v1172, %v1160
      %vm1308 = vcmask 1042434
      %v1309 = vsel %vm1308, %v1184, %v1307
      %vm1310 = vcmask 1043459
      %v1311 = vsel %vm1310, %v1196, %v1309
      %vm1312 = vcmask 1044484
      %v1313 = vsel %vm1312, %v1208, %v1311
      %vm1314 = vcmask 1045509
      %v1315 = vsel %vm1314, %v1220, %v1313
      %vm1316 = vcmask 1046534
      %v1317 = vsel %vm1316, %v1232, %v1315
      %vm1318 = vcmask 1047559
      %v1319 = vsel %vm1318, %v1244, %v1317
      %v1320 = vsel %vm1306, %v1178, %v1166
      %v1321 = vsel %vm1308, %v1190, %v1320
      %v1322 = vsel %vm1310, %v1202, %v1321
      %v1323 = vsel %vm1312, %v1214, %v1322
      %v1324 = vsel %vm1314, %v1226, %v1323
      %v1325 = vsel %vm1316, %v1238, %v1324
      %v1326 = vsel %vm1318, %v1250, %v1325
      %1329 = vmatprep.subr.mxu0 0.0
      %1330 = vmatpush1.msra.mxu0 %v1251
      %1331 = vmatprep.subr.mxu0 0.0
      %1332 = vmatpush1.msra.mxu0 %v1252
      %1333 = vmatprep.subr.mxu0 0.0
      %1334 = vmatpush1.msra.mxu0 %v1253
      %1335 = vmatprep.subr.mxu0 0.0
      %1336 = vmatpush1.msra.mxu0 %v1254
      %1337 = vmatprep.subr.mxu0 0.0
      %1338 = vmatpush1.msra.mxu0 %v1255
      %1339 = vmatprep.subr.mxu0 0.0
      %1340 = vmatpush1.msra.mxu0 %v1256
      %1341 = vmatprep.subr.mxu0 0.0
      %1342 = vmatpush1.msra.mxu0 %v1257
      %1343 = vmatprep.subr.mxu0 0.0
      %1344 = vmatpush1.msra.mxu0 %v1258
      %1345 = vmatprep.subr.mxu0 0.0
      %1346 = vmatpush1.msra.mxu0 %v1259
      %1347 = vmatprep.subr.mxu0 0.0
      %1348 = vmatpush1.msra.mxu0 %v1260
      %1349 = vmatprep.subr.mxu0 0.0
      %1350 = vmatpush1.msra.mxu0 %v1261
      %1351 = vmatprep.subr.mxu0 0.0
      %1352 = vmatpush1.msra.mxu0 %v1262
      %1353 = vmatprep.subr.mxu0 0.0
      %1354 = vmatpush1.msra.mxu0 %v1263
      %1355 = vmatprep.subr.mxu0 0.0
      %1356 = vmatpush1.msra.mxu0 %v1264
      %1357 = vmatprep.subr.mxu0 0.0
      %1358 = vmatpush1.msra.mxu0 %v1265
      %1359 = vmatprep.subr.mxu0 0.0
      %1360 = vmatpush1.msra.mxu0 %v1266
      %1361 = vmatprep.subr.mxu0 0.0
      %1362 = vmatpush1.msra.mxu0 %v1267
      %1363 = vmatprep.subr.mxu0 0.0
      %1364 = vmatpush1.msra.mxu0 %v1268
      %1365 = vmatprep.subr.mxu0 0.0
      %1366 = vmatpush1.msra.mxu0 %v1269
      %1367 = vmatprep.subr.mxu0 0.0
      %1368 = vmatpush1.msra.mxu0 %v1270
      %1369 = vmatprep.subr.mxu0 0.0
      %1370 = vmatpush1.msra.mxu0 %v1271
      %1371 = vmatprep.subr.mxu0 0.0
      %1372 = vmatpush1.msra.mxu0 %v1272
      %1373 = vmatprep.subr.mxu0 0.0
      %1374 = vmatpush1.msra.mxu0 %v1273
      %1375 = vmatprep.subr.mxu0 0.0
      %1376 = vmatpush1.msra.mxu0 %v1274
      %1377 = vmatprep.subr.mxu0 0.0
      %1378 = vmatpush1.msra.mxu0 %v1275
      %1379 = vmatprep.subr.mxu0 0.0
      %1380 = vmatpush1.msra.mxu0 %v1276
      %1381 = vmatprep.subr.mxu0 0.0
      %1382 = vmatpush1.msra.mxu0 %v1277
      %1383 = vmatprep.subr.mxu0 0.0
      %1384 = vmatpush1.msra.mxu0 %v1278
      %1385 = vmatprep.subr.mxu0 0.0
      %1386 = vmatpush1.msra.mxu0 %v1279
      %1387 = vmatprep.subr.mxu0 0.0
      %1388 = vmatpush1.msra.mxu0 %v1280
      %1389 = vmatprep.subr.mxu0 0.0
      %1390 = vmatpush1.msra.mxu0 %v1281
      %1391 = vmatprep.subr.mxu0 0.0
      %1392 = vmatpush1.msra.mxu0 %v1282
      %1393 = vmatprep.mubr.f32.mxu0 %v1326
      %1394 = vmatmul.mubr.f32.gmra.mrb[0].mxu0 %v1319
      %v1395 = vpop.f32.mrb[0].mxu0
      %v1396 = vadd.f32 %v1288, %v1395
      %v1397 = vpop.f32.mrb[0].mxu0
      %1398 = vdwg.mxu0
      %vm1399 = vcmp.gt.f32.partialorder %v1396, 0.0
      %v1400 = vmul.f32 %v1396, 0.2
      %v1401 = vsel %vm1399, %v1396, %v1400
      %1402 = vst [vmem:[%s354] sm:$0xff] %v1401
      %p1403 = scmp.lt.s32.totalorder %s20, 3
      %s1404 = scalar_select %p1403, %s20, 3
      %s1405 = smul.addr %s1404, 8
      %s1406 = scalar_lea.vmem %s9, %s1405
      // Predicated region
      $region57: #{dilated_res_block_pallas.6} parent=55 // pred_check
        %p1407 = pneg %p237
      $region58: #{dilated_res_block_pallas.6} parent=55 // pred_check_branch
        %1409 = sbr.rel (%p1407) target = $region60
      $region59: #{dilated_res_block_pallas.6} parent=55 // pred_region
        _
      $region60: #{dilated_res_block_pallas.6} parent=55 // pred_fallthru
        _
    $region56: #{dilated_res_block_pallas.6} parent=5 // pred_fallthru
      _
    %p1410 = scmp.le.s32.totalorder 2, %s15
    // Predicated region
    $region61: #{dilated_res_block_pallas.6} parent=5 // pred_check
      %p1411 = pneg %p1410
    $region62: #{dilated_res_block_pallas.6} parent=5 // pred_check_branch
      %1413 = sbr.rel (%p1411) target = $region64
    $region63: #{dilated_res_block_pallas.6} parent=5 // pred_region
      %s1414 = ssub.s32 %s15, 2
      // Predicated region
      $region65: #{dilated_res_block_pallas.6} parent=63 // pred_check
        %p1415 = pneg %p243
      $region66: #{dilated_res_block_pallas.6} parent=63 // pred_check_branch
        %1417 = sbr.rel (%p1415) target = $region68
      $region67: #{dilated_res_block_pallas.6} parent=63 // pred_region
        %p1418 = scmp.lt.s32.totalorder %s21, 3
        %s1419 = scalar_select %p1418, %s21, 3
        %s1420 = smul.addr %s1419, 8
        %s1421 = scalar_lea.vmem %s9, %s1420
      $region68: #{dilated_res_block_pallas.6} parent=63 // pred_fallthru
        _
    $region64: #{dilated_res_block_pallas.6} parent=5 // pred_fallthru
      _
  $region6: #{dilated_res_block_pallas.6} parent=0 // loop_footer
    %s19 = sadd.s32 1, %s15
  $region7: #{dilated_res_block_pallas.6} parent=0 // loop_footer_branch
    %14 = sbr.rel target = $region3
  $region8: #{dilated_res_block_pallas.6} parent=0 // loop_exit
    _

// kernel: dilated_res_block_pallas.7
$region0: #{dilated_res_block_pallas.7}
  #allocation0 [shape = 'u32[]', space=smem, size = 0x4, offset = 0x4, fixed_abs, tag = 'smem constant byte address 0x4 - core index']
  #allocation1 [shape = 'u32[144,128]{1,0:T(1,128)}', space=vmem, size = 0x12000, scoped, tag = 'internal scratch']
  %s0 = inlined_call_operand.vmem [shape: f32[32,128], index: 0, kind: input, shape index: {}]
  %s1 = inlined_call_operand.vmem [shape: f32[32,128], index: 1, kind: input, shape index: {}]
  %s2 = inlined_call_operand.vmem [shape: f32[128,128], index: 2, kind: input, shape index: {}]
  %s3 = inlined_call_operand.vmem [shape: f32[128,128], index: 3, kind: input, shape index: {}]
  %s4 = inlined_call_operand.vmem [shape: f32[1,128], index: 4, kind: input, shape index: {}]
  %s5 = inlined_call_operand.vmem [shape: f32[32,128], index: 5, kind: output, shape index: {}]
  %s6 = sld [smem:[#allocation0]]
  $region53: #{dilated_res_block_pallas.7} parent=0
    _
  %s8 = ssub.s32 1, %s6
  %s9 = scalar_select 0, %s8, %s6
  loop: start=0, step=1, limit=6
  $region2: #{dilated_res_block_pallas.7} parent=0 // loop_pre_header
    _
  $region3: #{dilated_res_block_pallas.7} parent=0 // loop_header
    %s11 = sphi 0, %s15
    %p12 = scmp.ge.s32.totalorder %s11, 6
    %s21 = sphi 0, %s23
    %s24 = sphi 0, %s21
    %s25 = sphi 0, %s24
    %s41 = sphi 0, %s25
    %s47 = sphi 0, %s49
    %s50 = sphi 0, %s47
    %s51 = sphi 0, %s50
    %s67 = sphi 0, %s51
    %s71 = sphi 0, %s71
    %s73 = sphi 0, %s71
    %s74 = sphi 0, %s73
    %s88 = sphi 0, %s74
    %s92 = sphi 0, %s92
    %s94 = sphi 0, %s92
    %s95 = sphi 0, %s94
    %s109 = sphi 0, %s95
    %s113 = sphi 0, %s113
    %s115 = sphi 0, %s113
    %s116 = sphi 0, %s115
    %s130 = sphi 0, %s116
    %s136 = sphi 0, %s138
    %s139 = sphi 0, %s136
    %s140 = sphi 0, %s139
    %s156 = sphi 0, %s140
  $region4: #{dilated_res_block_pallas.7} parent=0 // loop_header_branch
    %14 = sbr.rel (%p12) target = $region8
  $region5: #{dilated_res_block_pallas.7} parent=0 // loop_body
    %s16 = ssub.s32 %s11, 1
    %s17 = ssub.s32 %s11, 2
    %s18 = sadd.s32 %s11, 1
    %s19 = ssub.s32 %s11, %s18
    %p20 = scmp.eq.s32.totalorder %s19, 0
    %s22 = sadd.s32 %s21, 1
    %s23 = scalar_select %p20, %s21, %s22
    %p26 = pneg %p20
    %p27 = scmp.eq.s32.totalorder %s11, 3
    %p28 = por %p26, %p27
    %p29 = scmp.ne.s32.totalorder %s21, %s24
    %p30 = scmp.eq.s32.totalorder %s11, 0
    %p31 = por %p29, %p30
    %p32 = scmp.ne.s32.totalorder %s21, %s24
    %p33 = scmp.eq.s32.totalorder %s16, 3
    %p34 = por %p32, %p33
    %p35 = scmp.ne.s32.totalorder %s24, %s25
    %p36 = scmp.eq.s32.totalorder %s16, 0
    %p37 = por %p35, %p36
    %p38 = scmp.ne.s32.totalorder %s24, %s25
    %p39 = scmp.eq.s32.totalorder %s17, 3
    %p40 = por %p38, %p39
    %p42 = scmp.ne.s32.totalorder %s25, %s41
    %p43 = scmp.eq.s32.totalorder %s17, 0
    %p44 = por %p42, %p43
    %s45 = ssub.s32 %s11, %s18
    %p46 = scmp.eq.s32.totalorder %s45, 0
    %s48 = sadd.s32 %s47, 1
    %s49 = scalar_select %p46, %s47, %s48
    %p52 = pneg %p46
    %p53 = scmp.eq.s32.totalorder %s11, 3
    %p54 = por %p52, %p53
    %p55 = scmp.ne.s32.totalorder %s47, %s50
    %p56 = scmp.eq.s32.totalorder %s11, 0
    %p57 = por %p55, %p56
    %p58 = scmp.ne.s32.totalorder %s47, %s50
    %p59 = scmp.eq.s32.totalorder %s16, 3
    %p60 = por %p58, %p59
    %p61 = scmp.ne.s32.totalorder %s50, %s51
    %p62 = scmp.eq.s32.totalorder %s16, 0
    %p63 = por %p61, %p62
    %p64 = scmp.ne.s32.totalorder %s50, %s51
    %p65 = scmp.eq.s32.totalorder %s17, 3
    %p66 = por %p64, %p65
    %p68 = scmp.ne.s32.totalorder %s51, %s67
    %p69 = scmp.eq.s32.totalorder %s17, 0
    %p70 = por %p68, %p69
    %s72 = sadd.s32 %s71, 1
    %p75 = scmp.eq.s32.totalorder %s11, 3
    %p76 = scmp.ne.s32.totalorder %s71, %s73
    %p77 = scmp.eq.s32.totalorder %s11, 0
    %p78 = por %p76, %p77
    %p79 = scmp.ne.s32.totalorder %s71, %s73
    %p80 = scmp.eq.s32.totalorder %s16, 3
    %p81 = por %p79, %p80
    %p82 = scmp.ne.s32.totalorder %s73, %s74
    %p83 = scmp.eq.s32.totalorder %s16, 0
    %p84 = por %p82, %p83
    %p85 = scmp.ne.s32.totalorder %s73, %s74
    %p86 = scmp.eq.s32.totalorder %s17, 3
    %p87 = por %p85, %p86
    %p89 = scmp.ne.s32.totalorder %s74, %s88
    %p90 = scmp.eq.s32.totalorder %s17, 0
    %p91 = por %p89, %p90
    %s93 = sadd.s32 %s92, 1
    %p96 = scmp.eq.s32.totalorder %s11, 3
    %p97 = scmp.ne.s32.totalorder %s92, %s94
    %p98 = scmp.eq.s32.totalorder %s11, 0
    %p99 = por %p97, %p98
    %p100 = scmp.ne.s32.totalorder %s92, %s94
    %p101 = scmp.eq.s32.totalorder %s16, 3
    %p102 = por %p100, %p101
    %p103 = scmp.ne.s32.totalorder %s94, %s95
    %p104 = scmp.eq.s32.totalorder %s16, 0
    %p105 = por %p103, %p104
    %p106 = scmp.ne.s32.totalorder %s94, %s95
    %p107 = scmp.eq.s32.totalorder %s17, 3
    %p108 = por %p106, %p107
    %p110 = scmp.ne.s32.totalorder %s95, %s109
    %p111 = scmp.eq.s32.totalorder %s17, 0
    %p112 = por %p110, %p111
    %s114 = sadd.s32 %s113, 1
    %p117 = scmp.eq.s32.totalorder %s11, 3
    %p118 = scmp.ne.s32.totalorder %s113, %s115
    %p119 = scmp.eq.s32.totalorder %s11, 0
    %p120 = por %p118, %p119
    %p121 = scmp.ne.s32.totalorder %s113, %s115
    %p122 = scmp.eq.s32.totalorder %s16, 3
    %p123 = por %p121, %p122
    %p124 = scmp.ne.s32.totalorder %s115, %s116
    %p125 = scmp.eq.s32.totalorder %s16, 0
    %p126 = por %p124, %p125
    %p127 = scmp.ne.s32.totalorder %s115, %s116
    %p128 = scmp.eq.s32.totalorder %s17, 3
    %p129 = por %p127, %p128
    %p131 = scmp.ne.s32.totalorder %s116, %s130
    %p132 = scmp.eq.s32.totalorder %s17, 0
    %p133 = por %p131, %p132
    %s134 = ssub.s32 %s11, %s18
    %p135 = scmp.eq.s32.totalorder %s134, 0
    %s137 = sadd.s32 %s136, 1
    %s138 = scalar_select %p135, %s136, %s137
    %p141 = pneg %p135
    %p142 = scmp.eq.s32.totalorder %s11, 3
    %p143 = por %p141, %p142
    %p144 = scmp.ne.s32.totalorder %s136, %s139
    %p145 = scmp.eq.s32.totalorder %s11, 0
    %p146 = por %p144, %p145
    %p147 = scmp.ne.s32.totalorder %s136, %s139
    %p148 = scmp.eq.s32.totalorder %s16, 3
    %p149 = por %p147, %p148
    %p150 = scmp.ne.s32.totalorder %s139, %s140
    %p151 = scmp.eq.s32.totalorder %s16, 0
    %p152 = por %p150, %p151
    %p153 = scmp.ne.s32.totalorder %s139, %s140
    %p154 = scmp.eq.s32.totalorder %s17, 3
    %p155 = por %p153, %p154
    %p157 = scmp.ne.s32.totalorder %s140, %s156
    %p158 = scmp.eq.s32.totalorder %s17, 0
    %p159 = por %p157, %p158
    %p160 = scmp.le.s32.totalorder 1, %s11
    %p161 = scmp.lt.s32.totalorder %s11, 5
    %p162 = pnand %p160, %p161
    %p163 = pneg %p162
    // Predicated region
    $region9: #{dilated_res_block_pallas.7} parent=5 // pred_check
      _
    $region10: #{dilated_res_block_pallas.7} parent=5 // pred_check_branch
      %165 = sbr.rel (%p162) target = $region12
    $region11: #{dilated_res_block_pallas.7} parent=5 // pred_region
      %s166 = ssub.s32 %s11, 1
      // Predicated region
      $region13: #{dilated_res_block_pallas.7} parent=11 // pred_check
        %p167 = pneg %p84
      $region14: #{dilated_res_block_pallas.7} parent=11 // pred_check_branch
        %169 = sbr.rel (%p167) target = $region16
      $region15: #{dilated_res_block_pallas.7} parent=11 // pred_region
        _
      $region16: #{dilated_res_block_pallas.7} parent=11 // pred_fallthru
        _
      // Predicated region
      $region17: #{dilated_res_block_pallas.7} parent=11 // pred_check
        %p170 = pneg %p105
      $region18: #{dilated_res_block_pallas.7} parent=11 // pred_check_branch
        %172 = sbr.rel (%p170) target = $region20
      $region19: #{dilated_res_block_pallas.7} parent=11 // pred_region
        _
      $region20: #{dilated_res_block_pallas.7} parent=11 // pred_fallthru
        _
      // Predicated region
      $region21: #{dilated_res_block_pallas.7} parent=11 // pred_check
        %p173 = pneg %p126
      $region22: #{dilated_res_block_pallas.7} parent=11 // pred_check_branch
        %175 = sbr.rel (%p173) target = $region24
      $region23: #{dilated_res_block_pallas.7} parent=11 // pred_region
        _
      $region24: #{dilated_res_block_pallas.7} parent=11 // pred_fallthru
        _
    $region12: #{dilated_res_block_pallas.7} parent=5 // pred_fallthru
      _
    %p176 = scmp.lt.s32.totalorder %s11, 4
    // Predicated region
    $region25: #{dilated_res_block_pallas.7} parent=5 // pred_check
      %p177 = pneg %p176
    $region26: #{dilated_res_block_pallas.7} parent=5 // pred_check_branch
      %179 = sbr.rel (%p177) target = $region28
    $region27: #{dilated_res_block_pallas.7} parent=5 // pred_region
      // Predicated region
      $region29: #{dilated_res_block_pallas.7} parent=27 // pred_check
        %p180 = pneg %p31
      $region30: #{dilated_res_block_pallas.7} parent=27 // pred_check_branch
        %182 = sbr.rel (%p180) target = $region32
      $region31: #{dilated_res_block_pallas.7} parent=27 // pred_region
        %p183 = scmp.lt.s32.totalorder %s11, 3
        %s184 = scalar_select %p183, %s11, 3
        %s185 = smul.addr %s184, 8
        %s186 = scalar_lea.vmem %s0, %s185
      $region32: #{dilated_res_block_pallas.7} parent=27 // pred_fallthru
        _
      // Predicated region
      $region33: #{dilated_res_block_pallas.7} parent=27 // pred_check
        %p187 = pneg %p57
      $region34: #{dilated_res_block_pallas.7} parent=27 // pred_check_branch
        %189 = sbr.rel (%p187) target = $region36
      $region35: #{dilated_res_block_pallas.7} parent=27 // pred_region
        %p190 = scmp.lt.s32.totalorder %s11, 3
        %s191 = scalar_select %p190, %s11, 3
        %s192 = smul.addr %s191, 8
        %s193 = scalar_lea.vmem %s1, %s192
      $region36: #{dilated_res_block_pallas.7} parent=27 // pred_fallthru
        _
    $region28: #{dilated_res_block_pallas.7} parent=5 // pred_fallthru
      _
    %p194 = scmp.le.s32.totalorder 1, %s11
    %p195 = scmp.lt.s32.totalorder %s11, 5
    %p196 = pnand %p194, %p195
    %p197 = pneg %p196
    // Predicated region
    $region37: #{dilated_res_block_pallas.7} parent=5 // pred_check
      _
    $region38: #{dilated_res_block_pallas.7} parent=5 // pred_check_branch
      %199 = sbr.rel (%p196) target = $region40
    $region39: #{dilated_res_block_pallas.7} parent=5 // pred_region
      %s200 = ssub.s32 %s11, 1
      %p201 = scmp.lt.s32.totalorder %s16, 3
      %s202 = scalar_select %p201, %s16, 3
      %s203 = smul.addr %s202, 8
      %s204 = scalar_lea.vmem %s0, %s203
      %p205 = pneg %p37
      %p206 = pneg %p34
      %p207 = scmp.lt.s32.totalorder %s16, 3
      %s208 = scalar_select %p207, %s16, 3
      %s209 = smul.addr %s208, 8
      %s210 = scalar_lea.vmem %s1, %s209
      %p211 = pneg %p63
      %p212 = pneg %p60
      %p213 = pneg %p84
      %p214 = pneg %p81
      %p215 = pneg %p105
      %p216 = pneg %p102
      %p217 = pneg %p126
      %p218 = pneg %p123
      %p219 = pneg %p152
      %p220 = pneg %p149
      %p221 = scmp.lt.s32.totalorder %s16, 3
      %s222 = scalar_select %p221, %s16, 3
      %s223 = smul.addr %s222, 8
      %s224 = scalar_lea.vmem %s5, %s223
      %p225 = scmp.lt.s32.totalorder %s16, 3
      %s226 = scalar_select %p225, %s16, 3
      %s227 = smul.addr %s226, 8
      %s228 = scalar_lea.vmem %s0, %s227
      %p229 = scmp.lt.s32.totalorder %s16, 3
      %s230 = scalar_select %p229, %s16, 3
      %s231 = smul.addr %s230, 8
      %s232 = scalar_lea.vmem %s1, %s231
      %p233 = scmp.lt.s32.totalorder %s16, 3
      %s234 = scalar_select %p233, %s16, 3
      %s235 = smul.addr %s234, 8
      %s236 = scalar_lea.vmem %s5, %s235
      %v237 = vld [vmem:[%s228] sm:$0xff]
      %v238 = vld [vmem:[%s2] sm:$0xff]
      %v239 = vld [vmem:[%s2 + $0x8] sm:$0xff]
      %v240 = vld [vmem:[%s2 + $0x10] sm:$0xff]
      %v241 = vld [vmem:[%s2 + $0x18] sm:$0xff]
      %v242 = vld [vmem:[%s2 + $0x20] sm:$0xff]
      %v243 = vld [vmem:[%s2 + $0x28] sm:$0xff]
      %v244 = vld [vmem:[%s2 + $0x30] sm:$0xff]
      %v245 = vld [vmem:[%s2 + $0x38] sm:$0xff]
      %v246 = vld [vmem:[%s2 + $0x40] sm:$0xff]
      %v247 = vld [vmem:[%s2 + $0x48] sm:$0xff]
      %v248 = vld [vmem:[%s2 + $0x50] sm:$0xff]
      %v249 = vld [vmem:[%s2 + $0x58] sm:$0xff]
      %v250 = vld [vmem:[%s2 + $0x60] sm:$0xff]
      %v251 = vld [vmem:[%s2 + $0x68] sm:$0xff]
      %v252 = vld [vmem:[%s2 + $0x70] sm:$0xff]
      %v253 = vld [vmem:[%s2 + $0x78] sm:$0xff]
      %v254 = vld [vmem:[%s232] sm:$0xff]
      %v255 = vld [vmem:[%s3] sm:$0xff]
      %v256 = vld [vmem:[%s3 + $0x8] sm:$0xff]
      %v257 = vld [vmem:[%s3 + $0x10] sm:$0xff]
      %v258 = vld [vmem:[%s3 + $0x18] sm:$0xff]
      %v259 = vld [vmem:[%s3 + $0x20] sm:$0xff]
      %v260 = vld [vmem:[%s3 + $0x28] sm:$0xff]
      %v261 = vld [vmem:[%s3 + $0x30] sm:$0xff]
      %v262 = vld [vmem:[%s3 + $0x38] sm:$0xff]
      %v263 = vld [vmem:[%s3 + $0x40] sm:$0xff]
      %v264 = vld [vmem:[%s3 + $0x48] sm:$0xff]
      %v265 = vld [vmem:[%s3 + $0x50] sm:$0xff]
      %v266 = vld [vmem:[%s3 + $0x58] sm:$0xff]
      %v267 = vld [vmem:[%s3 + $0x60] sm:$0xff]
      %v268 = vld [vmem:[%s3 + $0x68] sm:$0xff]
      %v269 = vld [vmem:[%s3 + $0x70] sm:$0xff]
      %v270 = vld [vmem:[%s3 + $0x78] sm:$0xff]
      %271 = vmatprep.subr.mxu0 0.0
      %272 = vmatpush1.msra.mxu0 %v255
      %273 = vmatprep.subr.mxu0 0.0
      %274 = vmatpush1.msra.mxu0 %v256
      %275 = vmatprep.subr.mxu0 0.0
      %276 = vmatpush1.msra.mxu0 %v257
      %277 = vmatprep.subr.mxu0 0.0
      %278 = vmatpush1.msra.mxu0 %v258
      %279 = vmatprep.subr.mxu0 0.0
      %280 = vmatpush1.msra.mxu0 %v259
      %281 = vmatprep.subr.mxu0 0.0
      %282 = vmatpush1.msra.mxu0 %v260
      %283 = vmatprep.subr.mxu0 0.0
      %284 = vmatpush1.msra.mxu0 %v261
      %285 = vmatprep.subr.mxu0 0.0
      %286 = vmatpush1.msra.mxu0 %v262
      %287 = vmatprep.subr.mxu0 0.0
      %288 = vmatpush1.msra.mxu0 %v263
      %289 = vmatprep.subr.mxu0 0.0
      %290 = vmatpush1.msra.mxu0 %v264
      %291 = vmatprep.subr.mxu0 0.0
      %292 = vmatpush1.msra.mxu0 %v265
      %293 = vmatprep.subr.mxu0 0.0
      %294 = vmatpush1.msra.mxu0 %v266
      %295 = vmatprep.subr.mxu0 0.0
      %296 = vmatpush1.msra.mxu0 %v267
      %297 = vmatprep.subr.mxu0 0.0
      %298 = vmatpush1.msra.mxu0 %v268
      %299 = vmatprep.subr.mxu0 0.0
      %300 = vmatpush1.msra.mxu0 %v269
      %301 = vmatprep.subr.mxu0 0.0
      %302 = vmatpush1.msra.mxu0 %v270
      %303 = vmatprep.subr.mxu0 0.0
      %304 = vmatpush1.msra.mxu0 0.0
      %305 = vmatprep.subr.mxu0 0.0
      %306 = vmatpush1.msra.mxu0 0.0
      %307 = vmatprep.subr.mxu0 0.0
      %308 = vmatpush1.msra.mxu0 0.0
      %309 = vmatprep.subr.mxu0 0.0
      %310 = vmatpush1.msra.mxu0 0.0
      %311 = vmatprep.subr.mxu0 0.0
      %312 = vmatpush1.msra.mxu0 0.0
      %313 = vmatprep.subr.mxu0 0.0
      %314 = vmatpush1.msra.mxu0 0.0
      %315 = vmatprep.subr.mxu0 0.0
      %316 = vmatpush1.msra.mxu0 0.0
      %317 = vmatprep.subr.mxu0 0.0
      %318 = vmatpush1.msra.mxu0 0.0
      %319 = vmatprep.subr.mxu0 0.0
      %320 = vmatpush1.msra.mxu0 0.0
      %321 = vmatprep.subr.mxu0 0.0
      %322 = vmatpush1.msra.mxu0 0.0
      %323 = vmatprep.subr.mxu0 0.0
      %324 = vmatpush1.msra.mxu0 0.0
      %325 = vmatprep.subr.mxu0 0.0
      %326 = vmatpush1.msra.mxu0 0.0
      %327 = vmatprep.subr.mxu0 0.0
      %328 = vmatpush1.msra.mxu0 0.0
      %329 = vmatprep.subr.mxu0 0.0
      %330 = vmatpush1.msra.mxu0 0.0
      %331 = vmatprep.subr.mxu0 0.0
      %332 = vmatpush1.msra.mxu0 0.0
      %333 = vmatprep.subr.mxu0 0.0
      %334 = vmatpush1.msra.mxu0 0.0
      %335 = vmatprep.mubr.f32.mxu0 0.0
      %336 = vmatmul.mubr.f32.gmra.mrb[0].mxu0 %v254
      %v337 = vpop.f32.mrb[0].mxu0
      %v338 = vadd.f32 0.0, %v337
      %v339 = vpop.f32.mrb[0].mxu0
      %340 = vdwg.mxu0
      %341 = vmatprep.subr.mxu0 0.0
      %342 = vmatpush1.msra.mxu0 %v238
      %343 = vmatprep.subr.mxu0 0.0
      %344 = vmatpush1.msra.mxu0 %v239
      %345 = vmatprep.subr.mxu0 0.0
      %346 = vmatpush1.msra.mxu0 %v240
      %347 = vmatprep.subr.mxu0 0.0
      %348 = vmatpush1.msra.mxu0 %v241
      %349 = vmatprep.subr.mxu0 0.0
      %350 = vmatpush1.msra.mxu0 %v242
      %351 = vmatprep.subr.mxu0 0.0
      %352 = vmatpush1.msra.mxu0 %v243
      %353 = vmatprep.subr.mxu0 0.0
      %354 = vmatpush1.msra.mxu0 %v244
      %355 = vmatprep.subr.mxu0 0.0
      %356 = vmatpush1.msra.mxu0 %v245
      %357 = vmatprep.subr.mxu0 0.0
      %358 = vmatpush1.msra.mxu0 %v246
      %359 = vmatprep.subr.mxu0 0.0
      %360 = vmatpush1.msra.mxu0 %v247
      %361 = vmatprep.subr.mxu0 0.0
      %362 = vmatpush1.msra.mxu0 %v248
      %363 = vmatprep.subr.mxu0 0.0
      %364 = vmatpush1.msra.mxu0 %v249
      %365 = vmatprep.subr.mxu0 0.0
      %366 = vmatpush1.msra.mxu0 %v250
      %367 = vmatprep.subr.mxu0 0.0
      %368 = vmatpush1.msra.mxu0 %v251
      %369 = vmatprep.subr.mxu0 0.0
      %370 = vmatpush1.msra.mxu0 %v252
      %371 = vmatprep.subr.mxu0 0.0
      %372 = vmatpush1.msra.mxu0 %v253
      %373 = vmatprep.subr.mxu0 0.0
      %374 = vmatpush1.msra.mxu0 0.0
      %375 = vmatprep.subr.mxu0 0.0
      %376 = vmatpush1.msra.mxu0 0.0
      %377 = vmatprep.subr.mxu0 0.0
      %378 = vmatpush1.msra.mxu0 0.0
      %379 = vmatprep.subr.mxu0 0.0
      %380 = vmatpush1.msra.mxu0 0.0
      %381 = vmatprep.subr.mxu0 0.0
      %382 = vmatpush1.msra.mxu0 0.0
      %383 = vmatprep.subr.mxu0 0.0
      %384 = vmatpush1.msra.mxu0 0.0
      %385 = vmatprep.subr.mxu0 0.0
      %386 = vmatpush1.msra.mxu0 0.0
      %387 = vmatprep.subr.mxu0 0.0
      %388 = vmatpush1.msra.mxu0 0.0
      %389 = vmatprep.subr.mxu0 0.0
      %390 = vmatpush1.msra.mxu0 0.0
      %391 = vmatprep.subr.mxu0 0.0
      %392 = vmatpush1.msra.mxu0 0.0
      %393 = vmatprep.subr.mxu0 0.0
      %394 = vmatpush1.msra.mxu0 0.0
      %395 = vmatprep.subr.mxu0 0.0
      %396 = vmatpush1.msra.mxu0 0.0
      %397 = vmatprep.subr.mxu0 0.0
      %398 = vmatpush1.msra.mxu0 0.0
      %399 = vmatprep.subr.mxu0 0.0
      %400 = vmatpush1.msra.mxu0 0.0
      %401 = vmatprep.subr.mxu0 0.0
      %402 = vmatpush1.msra.mxu0 0.0
      %403 = vmatprep.subr.mxu0 0.0
      %404 = vmatpush1.msra.mxu0 0.0
      %405 = vmatprep.mubr.f32.mxu0 0.0
      %406 = vmatmul.mubr.f32.gmra.mrb[0].mxu0 %v237
      %v407 = vpop.f32.mrb[0].mxu0
      %v408 = vadd.f32 %v338, %v407
      %v409 = vpop.f32.mrb[0].mxu0
      %410 = vdwg.mxu0
      %v411 = vld [vmem:[%s4] sm:$0x1]
      %v413 = vlaneseq
      %v414 = vshrl.u32 %v413, 7
      %v415 = vsub.s32 0, %v414
      %v416 = vrot.slane %v411, %v415
      %v418 = vadd.f32 %v408, %v416
      %vm419 = vcmp.gt.f32.partialorder %v418, 0.0
      %v420 = vmul.f32 %v418, 0.2
      %v421 = vsel %vm419, %v418, %v420
      %422 = vst [vmem:[%s236] sm:$0xff] %v421
      %p423 = scmp.lt.s32.totalorder %s16, 3
      %s424 = scalar_select %p423, %s16, 3
      %s425 = smul.addr %s424, 8
      %s426 = scalar_lea.vmem %s5, %s425
      // Predicated region
      $region41: #{dilated_res_block_pallas.7} parent=39 // pred_check
        %p427 = pneg %p149
      $region42: #{dilated_res_block_pallas.7} parent=39 // pred_check_branch
        %429 = sbr.rel (%p427) target = $region44
      $region43: #{dilated_res_block_pallas.7} parent=39 // pred_region
        _
      $region44: #{dilated_res_block_pallas.7} parent=39 // pred_fallthru
        _
    $region40: #{dilated_res_block_pallas.7} parent=5 // pred_fallthru
      _
    %p430 = scmp.le.s32.totalorder 2, %s11
    // Predicated region
    $region45: #{dilated_res_block_pallas.7} parent=5 // pred_check
      %p431 = pneg %p430
    $region46: #{dilated_res_block_pallas.7} parent=5 // pred_check_branch
      %433 = sbr.rel (%p431) target = $region48
    $region47: #{dilated_res_block_pallas.7} parent=5 // pred_region
      %s434 = ssub.s32 %s11, 2
      // Predicated region
      $region49: #{dilated_res_block_pallas.7} parent=47 // pred_check
        %p435 = pneg %p155
      $region50: #{dilated_res_block_pallas.7} parent=47 // pred_check_branch
        %437 = sbr.rel (%p435) target = $region52
      $region51: #{dilated_res_block_pallas.7} parent=47 // pred_region
        %p438 = scmp.lt.s32.totalorder %s17, 3
        %s439 = scalar_select %p438, %s17, 3
        %s440 = smul.addr %s439, 8
        %s441 = scalar_lea.vmem %s5, %s440
      $region52: #{dilated_res_block_pallas.7} parent=47 // pred_fallthru
        _
    $region48: #{dilated_res_block_pallas.7} parent=5 // pred_fallthru
      _
  $region6: #{dilated_res_block_pallas.7} parent=0 // loop_footer
    %s15 = sadd.s32 1, %s11
  $region7: #{dilated_res_block_pallas.7} parent=0 // loop_footer_branch
    %10 = sbr.rel target = $region3
  $region8: #{dilated_res_block_pallas.7} parent=0 // loop_exit
    _

</llo_original>
